<compile_context>
chip_gen: v5e
topology: v5e:2x2
jax: 0.10.0
libtpu: 0.0.40
codegen_flags: <defaults>
</compile_context>

<pallas_src>
import functools
import numpy as np
import jax
import jax.numpy as jnp
from jax import lax
from jax.experimental import pallas as pl
from jax.experimental.pallas import tpu as pltpu

EPS = 1e-5     # BatchNorm2d default eps
LANE = 128     # TPU lane width


# --------------------------- in-kernel conv helper ---------------------------
def _conv3x3_im2col(p_f32, mask_ref, w_bf16, b_f32, wh):
    """3x3 'same' conv of one image held as flat rows [R = hh*wh, C] (f32).

    Shifted views via pltpu.roll (XLU) + precomputed boundary masks, fused into
    a single bf16 MXU matmul with f32 accumulation.
    """
    R = p_f32.shape[0]
    views = []
    k = 0
    for dy in (-1, 0, 1):
        for dx in (-1, 0, 1):
            s = dy * wh + dx
            v = p_f32 if s == 0 else pltpu.roll(p_f32, (-s) % R, axis=0)
            v = v * mask_ref[k]                        # [R, 1] zero-pad mask
            views.append(v.astype(jnp.bfloat16))
            k += 1
    cat = jnp.concatenate(views, axis=1)               # [R, 9*C] im2col (bf16)
    y = jnp.dot(cat, w_bf16, preferred_element_type=jnp.float32)
    return y + b_f32                                   # [R, OCp] f32


# --------------------------------- kernels -----------------------------------
def _pool_conv1_kernel(x_ref, mask_ref, w_ref, b_ref,
                       y_ref, sum_ref, sq_ref, *, wh):
    # x_ref: [1, 4, R, Cip] -- axis 1 enumerates the 2x2 pool-window offsets.
    p = jnp.maximum(jnp.maximum(x_ref[0, 0], x_ref[0, 1]),
                    jnp.maximum(x_ref[0, 2], x_ref[0, 3]))   # VPU max-pool
    y = _conv3x3_im2col(p, mask_ref, w_ref[...], b_ref[...], wh)
    y_ref[0] = y
    # BN1 partial sums (finalized globally in the wrapper -> two-pass BN).
    sum_ref[0] = jnp.sum(y, axis=0, keepdims=True)
    sq_ref[0] = jnp.sum(y * y, axis=0, keepdims=True)


def _bn_relu_conv2_kernel(y1_ref, sc_ref, sh_ref, mask_ref, w_ref, b_ref,
                          y_ref, sum_ref, sq_ref, *, wh):
    # BN1 (precomputed global scale/shift) + ReLU, all f32 on the VPU.
    h = jnp.maximum(y1_ref[0] * sc_ref[...] + sh_ref[...], 0.0)
    y = _conv3x3_im2col(h, mask_ref, w_ref[...], b_ref[...], wh)
    y_ref[0] = y
    sum_ref[0] = jnp.sum(y, axis=0, keepdims=True)
    sq_ref[0] = jnp.sum(y * y, axis=0, keepdims=True)


def _bn_relu_kernel(y2_ref, sc_ref, sh_ref, o_ref):
    o_ref[0] = jnp.maximum(y2_ref[0] * sc_ref[...] + sh_ref[...], 0.0)


# ------------------------------ wrapper helpers -------------------------------
def _pad_axis(a, axis, to):
    pad = [(0, 0)] * a.ndim
    pad[axis] = (0, to - a.shape[axis])
    return jnp.pad(a, pad)


def _pack_conv_w(w_oihw, cin_pad, cout_pad):
    """[OC, IC, 3, 3] -> bf16 [9*cin_pad, cout_pad], tap k = (dy+1)*3 + (dx+1)."""
    oc, ic, kh, kw = w_oihw.shape
    w = jnp.transpose(w_oihw, (2, 3, 1, 0)).reshape(kh * kw, ic, oc)
    w = jnp.pad(w, ((0, 0), (0, cin_pad - ic), (0, cout_pad - oc)))
    return w.reshape(kh * kw * cin_pad, cout_pad).astype(jnp.bfloat16)


def _tap_masks(hh, wh):
    """[9, R, 1] 0/1 masks: validity of tap (dy,dx) at each flat output row."""
    R = hh * wh
    m = np.zeros((9, R, 1), np.float32)
    k = 0
    for dy in (-1, 0, 1):
        for dx in (-1, 0, 1):
            for r in range(R):
                y, x = divmod(r, wh)
                if 0 <= y + dy < hh and 0 <= x + dx < wh:
                    m[k, r, 0] = 1.0
            k += 1
    return jnp.asarray(m)


def _bn_scale_shift(sum_nc, sq_nc, count, gamma_p, beta_p):
    """Finalize global (biased) batch stats -> per-channel scale/shift."""
    s = jnp.sum(sum_nc, axis=(0, 1))
    q = jnp.sum(sq_nc, axis=(0, 1))
    mean = s / count
    var = jnp.maximum(q / count - mean * mean, 0.0)
    scale = gamma_p * lax.rsqrt(var + EPS)
    shift = beta_p - mean * scale
    return scale.reshape(1, -1), shift.reshape(1, -1)


# -------------------------------- forward pass --------------------------------
def down_forward(x_nchw, params):
    N, Cin, H, W = x_nchw.shape
    assert H % 2 == 0 and W % 2 == 0, "MaxPool2d(2) requires even H, W"
    Hh, Wh = H // 2, W // 2
    R = Hh * Wh
    OC = params["w1_oihw"].shape[0]
    Cip = ((Cin + LANE - 1) // LANE) * LANE
    OCp = ((OC + LANE - 1) // LANE) * LANE

    # ---- layout plumbing (single relayout of the NCHW input) ----
    # [N,C,H,W] -> [N, 4 (pool offsets), Hh*Wh, C], channels padded to 128 lanes.
    x4 = x_nchw.reshape(N, Cin, Hh, 2, Wh, 2)
    x4 = jnp.transpose(x4, (0, 3, 5, 2, 4, 1)).reshape(N, 4, R, Cin)
    x4 = _pad_axis(x4, 3, Cip).astype(jnp.float32)

    masks = _tap_masks(Hh, Wh)
    w1 = _pack_conv_w(params["w1_oihw"], Cip, OCp)
    w2 = _pack_conv_w(params["w2_oihw"], OCp, OCp)
    b1 = _pad_axis(params["b1"], 0, OCp).reshape(1, OCp).astype(jnp.float32)
    b2 = _pad_axis(params["b2"], 0, OCp).reshape(1, OCp).astype(jnp.float32)
    g1 = _pad_axis(params["gamma1"], 0, OCp)
    bt1 = _pad_axis(params["beta1"], 0, OCp)
    g2 = _pad_axis(params["gamma2"], 0, OCp)
    bt2 = _pad_axis(params["beta2"], 0, OCp)

    cparams = pltpu.CompilerParams(
        dimension_semantics=("parallel",),       # shard batch grid across cores
        vmem_limit_bytes=32 * 1024 * 1024,
    )

    def full(shape):
        return pl.BlockSpec(shape, lambda n: (0,) * len(shape))

    per_n3 = pl.BlockSpec((1, R, OCp), lambda n: (n, 0, 0))
    stat3 = pl.BlockSpec((1, 1, OCp), lambda n: (n, 0, 0))

    # ---- pass 1: max-pool + conv1 (+ BN1 partial sums) ----
    y1, s1, q1 = pl.pallas_call(
        functools.partial(_pool_conv1_kernel, wh=Wh),
        out_shape=(jax.ShapeDtypeStruct((N, R, OCp), jnp.float32),
                   jax.ShapeDtypeStruct((N, 1, OCp), jnp.float32),
                   jax.ShapeDtypeStruct((N, 1, OCp), jnp.float32)),
        grid=(N,),
        in_specs=[pl.BlockSpec((1, 4, R, Cip), lambda n: (n, 0, 0, 0)),
                  full((9, R, 1)),
                  full((9 * Cip, OCp)),
                  full((1, OCp))],
        out_specs=(per_n3, stat3, stat3),
        compiler_params=cparams,
        cost_estimate=pl.CostEstimate(
            flops=2 * N * R * (9 * Cip) * OCp, transcendentals=0,
            bytes_accessed=int(x4.size * 4 + w1.size * 2 + N * R * OCp * 4)),
    )(x4, masks, w1, b1)

    sc1, sh1 = _bn_scale_shift(s1, q1, N * R, g1, bt1)

    # ---- pass 2: BN1 + ReLU + conv2 (+ BN2 partial sums) ----
    y2, s2, q2 = pl.pallas_call(
        functools.partial(_bn_relu_conv2_kernel, wh=Wh),
        out_shape=(jax.ShapeDtypeStruct((N, R, OCp), jnp.float32),
                   jax.ShapeDtypeStruct((N, 1, OCp), jnp.float32),
                   jax.ShapeDtypeStruct((N, 1, OCp), jnp.float32)),
        grid=(N,),
        in_specs=[per_n3,
                  full((1, OCp)),
                  full((1, OCp)),
                  full((9, R, 1)),
                  full((9 * OCp, OCp)),
                  full((1, OCp))],
        out_specs=(per_n3, stat3, stat3),
        compiler_params=cparams,
        cost_estimate=pl.CostEstimate(
            flops=2 * N * R * (9 * OCp) * OCp, transcendentals=0,
            bytes_accessed=int(2 * N * R * OCp * 4 + w2.size * 2)),
    )(y1, sc1, sh1, masks, w2, b2)

    sc2, sh2 = _bn_scale_shift(s2, q2, N * R, g2, bt2)

    # ---- pass 3: BN2 + ReLU ----
    out = pl.pallas_call(
        _bn_relu_kernel,
        out_shape=jax.ShapeDtypeStruct((N, R, OCp), jnp.float32),
        grid=(N,),
        in_specs=[per_n3, full((1, OCp)), full((1, OCp))],
        out_specs=per_n3,
        compiler_params=cparams,
    )(y2, sc2, sh2)

    out = out[:, :, :OC].reshape(N, Hh, Wh, OC)
    return jnp.transpose(out, (0, 3, 1, 2))           # back to NCHW


# --------------------------- params / pure-JAX reference ----------------------
def init_params(key, cin, cout):
    ks = jax.random.split(key, 8)
    return {
        "w1_oihw": jax.random.normal(ks[0], (cout, cin, 3, 3), jnp.float32) * 0.1,
        "b1": jax.random.normal(ks[1], (cout,), jnp.float32) * 0.1,
        "gamma1": 1.0 + 0.1 * jax.random.normal(ks[2], (cout,), jnp.float32),
        "beta1": 0.1 * jax.random.normal(ks[3], (cout,), jnp.float32),
        "w2_oihw": jax.random.normal(ks[4], (cout, cout, 3, 3), jnp.float32) * 0.1,
        "b2": jax.random.normal(ks[5], (cout,), jnp.float32) * 0.1,
        "gamma2": 1.0 + 0.1 * jax.random.normal(ks[6], (cout,), jnp.float32),
        "beta2": 0.1 * jax.random.normal(ks[7], (cout,), jnp.float32),
    }


def ref_forward(x, p):
    pooled = lax.reduce_window(x, -jnp.inf, lax.max,
                               (1, 1, 2, 2), (1, 1, 2, 2), "VALID")

    def conv_bn_relu(h, w, b, g, bt):
        y = lax.conv_general_dilated(
            h, w, (1, 1), "SAME",
            dimension_numbers=("NCHW", "OIHW", "NCHW"),
            precision=lax.Precision.HIGHEST) + b[None, :, None, None]
        mean = jnp.mean(y, axis=(0, 2, 3), keepdims=True)
        var = jnp.mean((y - mean) ** 2, axis=(0, 2, 3), keepdims=True)
        yh = (y - mean) * lax.rsqrt(var + EPS)
        return jnp.maximum(yh * g[None, :, None, None] + bt[None, :, None, None], 0.0)

    h1 = conv_bn_relu(pooled, p["w1_oihw"], p["b1"], p["gamma1"], p["beta1"])
    return conv_bn_relu(h1, p["w2_oihw"], p["b2"], p["gamma2"], p["beta2"])


if __name__ == "__main__":
    N, Cin, Cout, HW = 2, 4, 8, 16
    key = jax.random.PRNGKey(0)
    kx, kp = jax.random.split(key)
    x = jax.random.normal(kx, (N, Cin, HW, HW), jnp.float32)
    params = init_params(kp, Cin, Cout)

    out = jax.block_until_ready(jax.jit(down_forward)(x, params))
    assert out.shape == (N, Cout, HW // 2, HW // 2)

    ref = jax.block_until_ready(ref_forward(x, params))
    # bf16 MXU operands (f32 accumulation) -> relaxed tolerance vs f32 reference.
    np.testing.assert_allclose(np.asarray(out), np.asarray(ref),
                               rtol=5e-2, atol=5e-2)
    print("KERNEL_OK")
</pallas_src>

<mosaic_0001>
module attributes {stable_mosaic.version = 11 : i64} {
  func.func @_pool_conv1_kernel(%arg0: i32, %arg1: memref<1x4x64x128xf32, #tpu.memory_space<vmem>>, %arg2: memref<9x64x1xf32, #tpu.memory_space<vmem>>, %arg3: memref<1152x128xbf16, #tpu.memory_space<vmem>>, %arg4: memref<1x128xf32, #tpu.memory_space<vmem>>, %arg5: memref<1x64x128xf32, #tpu.memory_space<vmem>>, %arg6: memref<1x1x128xf32, #tpu.memory_space<vmem>>, %arg7: memref<1x1x128xf32, #tpu.memory_space<vmem>>) attributes {dimension_semantics = [#tpu.dimension_semantics<parallel>], iteration_bounds = array<i64: 2>, scalar_prefetch = 0 : i64, scratch_operands = 0 : i64, tpu.core_type = #tpu.core_type<tc>, window_params = [{transform_indices = @transform_0, window_bounds = array<i64: 1, 4, 64, 128>}, {pipeline_mode = #tpu.pipeline_mode<synchronous>, transform_indices = @transform_1, window_bounds = array<i64: 9, 64, 1>}, {pipeline_mode = #tpu.pipeline_mode<synchronous>, transform_indices = @transform_2, window_bounds = array<i64: 1152, 128>}, {pipeline_mode = #tpu.pipeline_mode<synchronous>, transform_indices = @transform_3, window_bounds = array<i64: 1, 128>}, {transform_indices = @transform_4, window_bounds = array<i64: 1, 64, 128>}, {transform_indices = @transform_5, window_bounds = array<i64: 1, 1, 128>}, {transform_indices = @transform_6, window_bounds = array<i64: 1, 1, 128>}]} {
    %c0 = arith.constant 0 : index
    %c0_0 = arith.constant 0 : index
    %c0_1 = arith.constant 0 : index
    %c0_2 = arith.constant 0 : index
    %0 = vector.load %arg1[%c0, %c0_0, %c0_1, %c0_2] : memref<1x4x64x128xf32, #tpu.memory_space<vmem>>, vector<1x1x64x128xf32>
    %1 = vector.shape_cast %0 : vector<1x1x64x128xf32> to vector<64x128xf32>
    %c0_3 = arith.constant 0 : index
    %c1 = arith.constant 1 : index
    %c0_4 = arith.constant 0 : index
    %c0_5 = arith.constant 0 : index
    %2 = vector.load %arg1[%c0_3, %c1, %c0_4, %c0_5] : memref<1x4x64x128xf32, #tpu.memory_space<vmem>>, vector<1x1x64x128xf32>
    %3 = vector.shape_cast %2 : vector<1x1x64x128xf32> to vector<64x128xf32>
    %4 = arith.maximumf %1, %3 : vector<64x128xf32>
    %c0_6 = arith.constant 0 : index
    %c2 = arith.constant 2 : index
    %c0_7 = arith.constant 0 : index
    %c0_8 = arith.constant 0 : index
    %5 = vector.load %arg1[%c0_6, %c2, %c0_7, %c0_8] : memref<1x4x64x128xf32, #tpu.memory_space<vmem>>, vector<1x1x64x128xf32>
    %6 = vector.shape_cast %5 : vector<1x1x64x128xf32> to vector<64x128xf32>
    %c0_9 = arith.constant 0 : index
    %c3 = arith.constant 3 : index
    %c0_10 = arith.constant 0 : index
    %c0_11 = arith.constant 0 : index
    %7 = vector.load %arg1[%c0_9, %c3, %c0_10, %c0_11] : memref<1x4x64x128xf32, #tpu.memory_space<vmem>>, vector<1x1x64x128xf32>
    %8 = vector.shape_cast %7 : vector<1x1x64x128xf32> to vector<64x128xf32>
    %9 = arith.maximumf %6, %8 : vector<64x128xf32>
    %10 = arith.maximumf %4, %9 : vector<64x128xf32>
    %c0_12 = arith.constant 0 : index
    %c0_13 = arith.constant 0 : index
    %11 = vector.load %arg3[%c0_12, %c0_13] : memref<1152x128xbf16, #tpu.memory_space<vmem>>, vector<1152x128xbf16>
    %c0_14 = arith.constant 0 : index
    %c0_15 = arith.constant 0 : index
    %12 = vector.load %arg4[%c0_14, %c0_15] : memref<1x128xf32, #tpu.memory_space<vmem>>, vector<1x128xf32>
    %c9_i32 = arith.constant 9 : i32
    %13 = tpu.dynamic_rotate %10 by %c9_i32 dim 0 : vector<64x128xf32>, i32 -> vector<64x128xf32>
    %c0_16 = arith.constant 0 : index
    %c0_17 = arith.constant 0 : index
    %c0_18 = arith.constant 0 : index
    %14 = vector.load %arg2[%c0_16, %c0_17, %c0_18] : memref<9x64x1xf32, #tpu.memory_space<vmem>>, vector<1x64x1xf32>
    %15 = vector.shape_cast %14 : vector<1x64x1xf32> to vector<64x1xf32>
    %16 = vector.broadcast %15 : vector<64x1xf32> to vector<64x128xf32>
    %17 = arith.mulf %13, %16 : vector<64x128xf32>
    %18 = arith.truncf %17 : vector<64x128xf32> to vector<64x128xbf16>
    %c8_i32 = arith.constant 8 : i32
    %19 = tpu.dynamic_rotate %10 by %c8_i32 dim 0 : vector<64x128xf32>, i32 -> vector<64x128xf32>
    %c1_19 = arith.constant 1 : index
    %c0_20 = arith.constant 0 : index
    %c0_21 = arith.constant 0 : index
    %20 = vector.load %arg2[%c1_19, %c0_20, %c0_21] : memref<9x64x1xf32, #tpu.memory_space<vmem>>, vector<1x64x1xf32>
    %21 = vector.shape_cast %20 : vector<1x64x1xf32> to vector<64x1xf32>
    %22 = vector.broadcast %21 : vector<64x1xf32> to vector<64x128xf32>
    %23 = arith.mulf %19, %22 : vector<64x128xf32>
    %24 = arith.truncf %23 : vector<64x128xf32> to vector<64x128xbf16>
    %c7_i32 = arith.constant 7 : i32
    %25 = tpu.dynamic_rotate %10 by %c7_i32 dim 0 : vector<64x128xf32>, i32 -> vector<64x128xf32>
    %c2_22 = arith.constant 2 : index
    %c0_23 = arith.constant 0 : index
    %c0_24 = arith.constant 0 : index
    %26 = vector.load %arg2[%c2_22, %c0_23, %c0_24] : memref<9x64x1xf32, #tpu.memory_space<vmem>>, vector<1x64x1xf32>
    %27 = vector.shape_cast %26 : vector<1x64x1xf32> to vector<64x1xf32>
    %28 = vector.broadcast %27 : vector<64x1xf32> to vector<64x128xf32>
    %29 = arith.mulf %25, %28 : vector<64x128xf32>
    %30 = arith.truncf %29 : vector<64x128xf32> to vector<64x128xbf16>
    %c1_i32 = arith.constant 1 : i32
    %31 = tpu.dynamic_rotate %10 by %c1_i32 dim 0 : vector<64x128xf32>, i32 -> vector<64x128xf32>
    %c3_25 = arith.constant 3 : index
    %c0_26 = arith.constant 0 : index
    %c0_27 = arith.constant 0 : index
    %32 = vector.load %arg2[%c3_25, %c0_26, %c0_27] : memref<9x64x1xf32, #tpu.memory_space<vmem>>, vector<1x64x1xf32>
    %33 = vector.shape_cast %32 : vector<1x64x1xf32> to vector<64x1xf32>
    %34 = vector.broadcast %33 : vector<64x1xf32> to vector<64x128xf32>
    %35 = arith.mulf %31, %34 : vector<64x128xf32>
    %36 = arith.truncf %35 : vector<64x128xf32> to vector<64x128xbf16>
    %c4 = arith.constant 4 : index
    %c0_28 = arith.constant 0 : index
    %c0_29 = arith.constant 0 : index
    %37 = vector.load %arg2[%c4, %c0_28, %c0_29] : memref<9x64x1xf32, #tpu.memory_space<vmem>>, vector<1x64x1xf32>
    %38 = vector.shape_cast %37 : vector<1x64x1xf32> to vector<64x1xf32>
    %39 = vector.broadcast %38 : vector<64x1xf32> to vector<64x128xf32>
    %40 = arith.mulf %10, %39 : vector<64x128xf32>
    %41 = arith.truncf %40 : vector<64x128xf32> to vector<64x128xbf16>
    %c63_i32 = arith.constant 63 : i32
    %42 = tpu.dynamic_rotate %10 by %c63_i32 dim 0 : vector<64x128xf32>, i32 -> vector<64x128xf32>
    %c5 = arith.constant 5 : index
    %c0_30 = arith.constant 0 : index
    %c0_31 = arith.constant 0 : index
    %43 = vector.load %arg2[%c5, %c0_30, %c0_31] : memref<9x64x1xf32, #tpu.memory_space<vmem>>, vector<1x64x1xf32>
    %44 = vector.shape_cast %43 : vector<1x64x1xf32> to vector<64x1xf32>
    %45 = vector.broadcast %44 : vector<64x1xf32> to vector<64x128xf32>
    %46 = arith.mulf %42, %45 : vector<64x128xf32>
    %47 = arith.truncf %46 : vector<64x128xf32> to vector<64x128xbf16>
    %c57_i32 = arith.constant 57 : i32
    %48 = tpu.dynamic_rotate %10 by %c57_i32 dim 0 : vector<64x128xf32>, i32 -> vector<64x128xf32>
    %c6 = arith.constant 6 : index
    %c0_32 = arith.constant 0 : index
    %c0_33 = arith.constant 0 : index
    %49 = vector.load %arg2[%c6, %c0_32, %c0_33] : memref<9x64x1xf32, #tpu.memory_space<vmem>>, vector<1x64x1xf32>
    %50 = vector.shape_cast %49 : vector<1x64x1xf32> to vector<64x1xf32>
    %51 = vector.broadcast %50 : vector<64x1xf32> to vector<64x128xf32>
    %52 = arith.mulf %48, %51 : vector<64x128xf32>
    %53 = arith.truncf %52 : vector<64x128xf32> to vector<64x128xbf16>
    %c56_i32 = arith.constant 56 : i32
    %54 = tpu.dynamic_rotate %10 by %c56_i32 dim 0 : vector<64x128xf32>, i32 -> vector<64x128xf32>
    %c7 = arith.constant 7 : index
    %c0_34 = arith.constant 0 : index
    %c0_35 = arith.constant 0 : index
    %55 = vector.load %arg2[%c7, %c0_34, %c0_35] : memref<9x64x1xf32, #tpu.memory_space<vmem>>, vector<1x64x1xf32>
    %56 = vector.shape_cast %55 : vector<1x64x1xf32> to vector<64x1xf32>
    %57 = vector.broadcast %56 : vector<64x1xf32> to vector<64x128xf32>
    %58 = arith.mulf %54, %57 : vector<64x128xf32>
    %59 = arith.truncf %58 : vector<64x128xf32> to vector<64x128xbf16>
    %c55_i32 = arith.constant 55 : i32
    %60 = tpu.dynamic_rotate %10 by %c55_i32 dim 0 : vector<64x128xf32>, i32 -> vector<64x128xf32>
    %c8 = arith.constant 8 : index
    %c0_36 = arith.constant 0 : index
    %c0_37 = arith.constant 0 : index
    %61 = vector.load %arg2[%c8, %c0_36, %c0_37] : memref<9x64x1xf32, #tpu.memory_space<vmem>>, vector<1x64x1xf32>
    %62 = vector.shape_cast %61 : vector<1x64x1xf32> to vector<64x1xf32>
    %63 = vector.broadcast %62 : vector<64x1xf32> to vector<64x128xf32>
    %64 = arith.mulf %60, %63 : vector<64x128xf32>
    %65 = arith.truncf %64 : vector<64x128xf32> to vector<64x128xbf16>
    %66 = tpu.concatenate %18, %24, %30, %36, %41, %47, %53, %59, %65 in 1 : vector<64x128xbf16>, vector<64x128xbf16>, vector<64x128xbf16>, vector<64x128xbf16>, vector<64x128xbf16>, vector<64x128xbf16>, vector<64x128xbf16>, vector<64x128xbf16>, vector<64x128xbf16> -> vector<64x1152xbf16>
    %cst = arith.constant dense<0.000000e+00> : vector<64x128xf32>
    %67 = tpu.matmul %66, %11, %cst {dimension_numbers = #tpu.dot_dimension_numbers<[1], [0], [0], [1], [0, 0, 1, 1], [], []>} : vector<64x1152xbf16>, vector<1152x128xbf16>, vector<64x128xf32> -> vector<64x128xf32>
    %68 = vector.broadcast %12 : vector<1x128xf32> to vector<64x128xf32>
    %69 = arith.addf %67, %68 : vector<64x128xf32>
    %c0_38 = arith.constant 0 : index
    %c0_39 = arith.constant 0 : index
    %c0_40 = arith.constant 0 : index
    %70 = vector.load %arg5[%c0_38, %c0_39, %c0_40] : memref<1x64x128xf32, #tpu.memory_space<vmem>>, vector<1x64x128xf32>
    %71 = vector.shape_cast %70 : vector<1x64x128xf32> to vector<64x128xf32>
    %72 = vector.shape_cast %69 : vector<64x128xf32> to vector<1x64x128xf32>
    tpu.vector_store %arg5[%c0_38, %c0_39, %c0_40], %72 {strides = array<i32>} : memref<1x64x128xf32, #tpu.memory_space<vmem>>, vector<1x64x128xf32>,
    %cst_41 = arith.constant dense<0.000000e+00> : vector<128xf32>
    %73 = vector.multi_reduction <add>, %69, %cst_41 [0] : vector<64x128xf32> to vector<128xf32>
    %74 = vector.shape_cast %73 : vector<128xf32> to vector<1x128xf32>
    %c0_42 = arith.constant 0 : index
    %c0_43 = arith.constant 0 : index
    %c0_44 = arith.constant 0 : index
    %75 = vector.load %arg6[%c0_42, %c0_43, %c0_44] : memref<1x1x128xf32, #tpu.memory_space<vmem>>, vector<1x1x128xf32>
    %76 = vector.shape_cast %75 : vector<1x1x128xf32> to vector<1x128xf32>
    %77 = vector.shape_cast %74 : vector<1x128xf32> to vector<1x1x128xf32>
    tpu.vector_store %arg6[%c0_42, %c0_43, %c0_44], %77 {strides = array<i32>} : memref<1x1x128xf32, #tpu.memory_space<vmem>>, vector<1x1x128xf32>,
    %78 = arith.mulf %69, %69 : vector<64x128xf32>
    %cst_45 = arith.constant dense<0.000000e+00> : vector<128xf32>
    %79 = vector.multi_reduction <add>, %78, %cst_45 [0] : vector<64x128xf32> to vector<128xf32>
    %80 = vector.shape_cast %79 : vector<128xf32> to vector<1x128xf32>
    %c0_46 = arith.constant 0 : index
    %c0_47 = arith.constant 0 : index
    %c0_48 = arith.constant 0 : index
    %81 = vector.load %arg7[%c0_46, %c0_47, %c0_48] : memref<1x1x128xf32, #tpu.memory_space<vmem>>, vector<1x1x128xf32>
    %82 = vector.shape_cast %81 : vector<1x1x128xf32> to vector<1x128xf32>
    %83 = vector.shape_cast %80 : vector<1x128xf32> to vector<1x1x128xf32>
    tpu.vector_store %arg7[%c0_46, %c0_47, %c0_48], %83 {strides = array<i32>} : memref<1x1x128xf32, #tpu.memory_space<vmem>>, vector<1x1x128xf32>,
    return
  }
  func.func @transform_0(%arg0: i32) -> (i32, i32, i32, i32) {
    %c0_i32 = arith.constant 0 : i32
    %c0_i32_0 = arith.constant 0 : i32
    %c0_i32_1 = arith.constant 0 : i32
    %c0_i32_2 = arith.constant 0 : i32
    return %arg0, %c0_i32, %c0_i32_0, %c0_i32_1 : i32, i32, i32, i32
  }
  func.func @transform_1(%arg0: i32) -> (i32, i32, i32) {
    %c0_i32 = arith.constant 0 : i32
    %c0_i32_0 = arith.constant 0 : i32
    %c0_i32_1 = arith.constant 0 : i32
    %c0_i32_2 = arith.constant 0 : i32
    return %c0_i32, %c0_i32_0, %c0_i32_1 : i32, i32, i32
  }
  func.func @transform_2(%arg0: i32) -> (i32, i32) {
    %c0_i32 = arith.constant 0 : i32
    %c0_i32_0 = arith.constant 0 : i32
    %c0_i32_1 = arith.constant 0 : i32
    return %c0_i32, %c0_i32_0 : i32, i32
  }
  func.func @transform_3(%arg0: i32) -> (i32, i32) {
    %c0_i32 = arith.constant 0 : i32
    %c0_i32_0 = arith.constant 0 : i32
    %c0_i32_1 = arith.constant 0 : i32
    return %c0_i32, %c0_i32_0 : i32, i32
  }
  func.func @transform_4(%arg0: i32) -> (i32, i32, i32) {
    %c0_i32 = arith.constant 0 : i32
    %c0_i32_0 = arith.constant 0 : i32
    %c0_i32_1 = arith.constant 0 : i32
    return %arg0, %c0_i32, %c0_i32_0 : i32, i32, i32
  }
  func.func @transform_5(%arg0: i32) -> (i32, i32, i32) {
    %c0_i32 = arith.constant 0 : i32
    %c0_i32_0 = arith.constant 0 : i32
    %c0_i32_1 = arith.constant 0 : i32
    return %arg0, %c0_i32, %c0_i32_0 : i32, i32, i32
  }
  func.func @transform_6(%arg0: i32) -> (i32, i32, i32) {
    %c0_i32 = arith.constant 0 : i32
    %c0_i32_0 = arith.constant 0 : i32
    %c0_i32_1 = arith.constant 0 : i32
    return %arg0, %c0_i32, %c0_i32_0 : i32, i32, i32
  }
}

module attributes {stable_mosaic.version = 11 : i64} {
  func.func @_bn_relu_conv2_kernel(%arg0: i32, %arg1: memref<1x64x128xf32, #tpu.memory_space<vmem>>, %arg2: memref<1x128xf32, #tpu.memory_space<vmem>>, %arg3: memref<1x128xf32, #tpu.memory_space<vmem>>, %arg4: memref<9x64x1xf32, #tpu.memory_space<vmem>>, %arg5: memref<1152x128xbf16, #tpu.memory_space<vmem>>, %arg6: memref<1x128xf32, #tpu.memory_space<vmem>>, %arg7: memref<1x64x128xf32, #tpu.memory_space<vmem>>, %arg8: memref<1x1x128xf32, #tpu.memory_space<vmem>>, %arg9: memref<1x1x128xf32, #tpu.memory_space<vmem>>) attributes {dimension_semantics = [#tpu.dimension_semantics<parallel>], iteration_bounds = array<i64: 2>, scalar_prefetch = 0 : i64, scratch_operands = 0 : i64, tpu.core_type = #tpu.core_type<tc>, window_params = [{transform_indices = @transform_0, window_bounds = array<i64: 1, 64, 128>}, {pipeline_mode = #tpu.pipeline_mode<synchronous>, transform_indices = @transform_1, window_bounds = array<i64: 1, 128>}, {pipeline_mode = #tpu.pipeline_mode<synchronous>, transform_indices = @transform_2, window_bounds = array<i64: 1, 128>}, {pipeline_mode = #tpu.pipeline_mode<synchronous>, transform_indices = @transform_3, window_bounds = array<i64: 9, 64, 1>}, {pipeline_mode = #tpu.pipeline_mode<synchronous>, transform_indices = @transform_4, window_bounds = array<i64: 1152, 128>}, {pipeline_mode = #tpu.pipeline_mode<synchronous>, transform_indices = @transform_5, window_bounds = array<i64: 1, 128>}, {transform_indices = @transform_6, window_bounds = array<i64: 1, 64, 128>}, {transform_indices = @transform_7, window_bounds = array<i64: 1, 1, 128>}, {transform_indices = @transform_8, window_bounds = array<i64: 1, 1, 128>}]} {
    %c0 = arith.constant 0 : index
    %c0_0 = arith.constant 0 : index
    %c0_1 = arith.constant 0 : index
    %0 = vector.load %arg1[%c0, %c0_0, %c0_1] : memref<1x64x128xf32, #tpu.memory_space<vmem>>, vector<1x64x128xf32>
    %1 = vector.shape_cast %0 : vector<1x64x128xf32> to vector<64x128xf32>
    %c0_2 = arith.constant 0 : index
    %c0_3 = arith.constant 0 : index
    %2 = vector.load %arg2[%c0_2, %c0_3] : memref<1x128xf32, #tpu.memory_space<vmem>>, vector<1x128xf32>
    %3 = vector.broadcast %2 : vector<1x128xf32> to vector<64x128xf32>
    %4 = arith.mulf %1, %3 : vector<64x128xf32>
    %c0_4 = arith.constant 0 : index
    %c0_5 = arith.constant 0 : index
    %5 = vector.load %arg3[%c0_4, %c0_5] : memref<1x128xf32, #tpu.memory_space<vmem>>, vector<1x128xf32>
    %6 = vector.broadcast %5 : vector<1x128xf32> to vector<64x128xf32>
    %7 = arith.addf %4, %6 : vector<64x128xf32>
    %cst = arith.constant 0.000000e+00 : f32
    %8 = vector.broadcast %cst : f32 to vector<64x128xf32>
    %9 = arith.maximumf %7, %8 : vector<64x128xf32>
    %c0_6 = arith.constant 0 : index
    %c0_7 = arith.constant 0 : index
    %10 = vector.load %arg5[%c0_6, %c0_7] : memref<1152x128xbf16, #tpu.memory_space<vmem>>, vector<1152x128xbf16>
    %c0_8 = arith.constant 0 : index
    %c0_9 = arith.constant 0 : index
    %11 = vector.load %arg6[%c0_8, %c0_9] : memref<1x128xf32, #tpu.memory_space<vmem>>, vector<1x128xf32>
    %c9_i32 = arith.constant 9 : i32
    %12 = tpu.dynamic_rotate %9 by %c9_i32 dim 0 : vector<64x128xf32>, i32 -> vector<64x128xf32>
    %c0_10 = arith.constant 0 : index
    %c0_11 = arith.constant 0 : index
    %c0_12 = arith.constant 0 : index
    %13 = vector.load %arg4[%c0_10, %c0_11, %c0_12] : memref<9x64x1xf32, #tpu.memory_space<vmem>>, vector<1x64x1xf32>
    %14 = vector.shape_cast %13 : vector<1x64x1xf32> to vector<64x1xf32>
    %15 = vector.broadcast %14 : vector<64x1xf32> to vector<64x128xf32>
    %16 = arith.mulf %12, %15 : vector<64x128xf32>
    %17 = arith.truncf %16 : vector<64x128xf32> to vector<64x128xbf16>
    %c8_i32 = arith.constant 8 : i32
    %18 = tpu.dynamic_rotate %9 by %c8_i32 dim 0 : vector<64x128xf32>, i32 -> vector<64x128xf32>
    %c1 = arith.constant 1 : index
    %c0_13 = arith.constant 0 : index
    %c0_14 = arith.constant 0 : index
    %19 = vector.load %arg4[%c1, %c0_13, %c0_14] : memref<9x64x1xf32, #tpu.memory_space<vmem>>, vector<1x64x1xf32>
    %20 = vector.shape_cast %19 : vector<1x64x1xf32> to vector<64x1xf32>
    %21 = vector.broadcast %20 : vector<64x1xf32> to vector<64x128xf32>
    %22 = arith.mulf %18, %21 : vector<64x128xf32>
    %23 = arith.truncf %22 : vector<64x128xf32> to vector<64x128xbf16>
    %c7_i32 = arith.constant 7 : i32
    %24 = tpu.dynamic_rotate %9 by %c7_i32 dim 0 : vector<64x128xf32>, i32 -> vector<64x128xf32>
    %c2 = arith.constant 2 : index
    %c0_15 = arith.constant 0 : index
    %c0_16 = arith.constant 0 : index
    %25 = vector.load %arg4[%c2, %c0_15, %c0_16] : memref<9x64x1xf32, #tpu.memory_space<vmem>>, vector<1x64x1xf32>
    %26 = vector.shape_cast %25 : vector<1x64x1xf32> to vector<64x1xf32>
    %27 = vector.broadcast %26 : vector<64x1xf32> to vector<64x128xf32>
    %28 = arith.mulf %24, %27 : vector<64x128xf32>
    %29 = arith.truncf %28 : vector<64x128xf32> to vector<64x128xbf16>
    %c1_i32 = arith.constant 1 : i32
    %30 = tpu.dynamic_rotate %9 by %c1_i32 dim 0 : vector<64x128xf32>, i32 -> vector<64x128xf32>
    %c3 = arith.constant 3 : index
    %c0_17 = arith.constant 0 : index
    %c0_18 = arith.constant 0 : index
    %31 = vector.load %arg4[%c3, %c0_17, %c0_18] : memref<9x64x1xf32, #tpu.memory_space<vmem>>, vector<1x64x1xf32>
    %32 = vector.shape_cast %31 : vector<1x64x1xf32> to vector<64x1xf32>
    %33 = vector.broadcast %32 : vector<64x1xf32> to vector<64x128xf32>
    %34 = arith.mulf %30, %33 : vector<64x128xf32>
    %35 = arith.truncf %34 : vector<64x128xf32> to vector<64x128xbf16>
    %c4 = arith.constant 4 : index
    %c0_19 = arith.constant 0 : index
    %c0_20 = arith.constant 0 : index
    %36 = vector.load %arg4[%c4, %c0_19, %c0_20] : memref<9x64x1xf32, #tpu.memory_space<vmem>>, vector<1x64x1xf32>
    %37 = vector.shape_cast %36 : vector<1x64x1xf32> to vector<64x1xf32>
    %38 = vector.broadcast %37 : vector<64x1xf32> to vector<64x128xf32>
    %39 = arith.mulf %9, %38 : vector<64x128xf32>
    %40 = arith.truncf %39 : vector<64x128xf32> to vector<64x128xbf16>
    %c63_i32 = arith.constant 63 : i32
    %41 = tpu.dynamic_rotate %9 by %c63_i32 dim 0 : vector<64x128xf32>, i32 -> vector<64x128xf32>
    %c5 = arith.constant 5 : index
    %c0_21 = arith.constant 0 : index
    %c0_22 = arith.constant 0 : index
    %42 = vector.load %arg4[%c5, %c0_21, %c0_22] : memref<9x64x1xf32, #tpu.memory_space<vmem>>, vector<1x64x1xf32>
    %43 = vector.shape_cast %42 : vector<1x64x1xf32> to vector<64x1xf32>
    %44 = vector.broadcast %43 : vector<64x1xf32> to vector<64x128xf32>
    %45 = arith.mulf %41, %44 : vector<64x128xf32>
    %46 = arith.truncf %45 : vector<64x128xf32> to vector<64x128xbf16>
    %c57_i32 = arith.constant 57 : i32
    %47 = tpu.dynamic_rotate %9 by %c57_i32 dim 0 : vector<64x128xf32>, i32 -> vector<64x128xf32>
    %c6 = arith.constant 6 : index
    %c0_23 = arith.constant 0 : index
    %c0_24 = arith.constant 0 : index
    %48 = vector.load %arg4[%c6, %c0_23, %c0_24] : memref<9x64x1xf32, #tpu.memory_space<vmem>>, vector<1x64x1xf32>
    %49 = vector.shape_cast %48 : vector<1x64x1xf32> to vector<64x1xf32>
    %50 = vector.broadcast %49 : vector<64x1xf32> to vector<64x128xf32>
    %51 = arith.mulf %47, %50 : vector<64x128xf32>
    %52 = arith.truncf %51 : vector<64x128xf32> to vector<64x128xbf16>
    %c56_i32 = arith.constant 56 : i32
    %53 = tpu.dynamic_rotate %9 by %c56_i32 dim 0 : vector<64x128xf32>, i32 -> vector<64x128xf32>
    %c7 = arith.constant 7 : index
    %c0_25 = arith.constant 0 : index
    %c0_26 = arith.constant 0 : index
    %54 = vector.load %arg4[%c7, %c0_25, %c0_26] : memref<9x64x1xf32, #tpu.memory_space<vmem>>, vector<1x64x1xf32>
    %55 = vector.shape_cast %54 : vector<1x64x1xf32> to vector<64x1xf32>
    %56 = vector.broadcast %55 : vector<64x1xf32> to vector<64x128xf32>
    %57 = arith.mulf %53, %56 : vector<64x128xf32>
    %58 = arith.truncf %57 : vector<64x128xf32> to vector<64x128xbf16>
    %c55_i32 = arith.constant 55 : i32
    %59 = tpu.dynamic_rotate %9 by %c55_i32 dim 0 : vector<64x128xf32>, i32 -> vector<64x128xf32>
    %c8 = arith.constant 8 : index
    %c0_27 = arith.constant 0 : index
    %c0_28 = arith.constant 0 : index
    %60 = vector.load %arg4[%c8, %c0_27, %c0_28] : memref<9x64x1xf32, #tpu.memory_space<vmem>>, vector<1x64x1xf32>
    %61 = vector.shape_cast %60 : vector<1x64x1xf32> to vector<64x1xf32>
    %62 = vector.broadcast %61 : vector<64x1xf32> to vector<64x128xf32>
    %63 = arith.mulf %59, %62 : vector<64x128xf32>
    %64 = arith.truncf %63 : vector<64x128xf32> to vector<64x128xbf16>
    %65 = tpu.concatenate %17, %23, %29, %35, %40, %46, %52, %58, %64 in 1 : vector<64x128xbf16>, vector<64x128xbf16>, vector<64x128xbf16>, vector<64x128xbf16>, vector<64x128xbf16>, vector<64x128xbf16>, vector<64x128xbf16>, vector<64x128xbf16>, vector<64x128xbf16> -> vector<64x1152xbf16>
    %cst_29 = arith.constant dense<0.000000e+00> : vector<64x128xf32>
    %66 = tpu.matmul %65, %10, %cst_29 {dimension_numbers = #tpu.dot_dimension_numbers<[1], [0], [0], [1], [0, 0, 1, 1], [], []>} : vector<64x1152xbf16>, vector<1152x128xbf16>, vector<64x128xf32> -> vector<64x128xf32>
    %67 = vector.broadcast %11 : vector<1x128xf32> to vector<64x128xf32>
    %68 = arith.addf %66, %67 : vector<64x128xf32>
    %c0_30 = arith.constant 0 : index
    %c0_31 = arith.constant 0 : index
    %c0_32 = arith.constant 0 : index
    %69 = vector.load %arg7[%c0_30, %c0_31, %c0_32] : memref<1x64x128xf32, #tpu.memory_space<vmem>>, vector<1x64x128xf32>
    %70 = vector.shape_cast %69 : vector<1x64x128xf32> to vector<64x128xf32>
    %71 = vector.shape_cast %68 : vector<64x128xf32> to vector<1x64x128xf32>
    tpu.vector_store %arg7[%c0_30, %c0_31, %c0_32], %71 {strides = array<i32>} : memref<1x64x128xf32, #tpu.memory_space<vmem>>, vector<1x64x128xf32>,
    %cst_33 = arith.constant dense<0.000000e+00> : vector<128xf32>
    %72 = vector.multi_reduction <add>, %68, %cst_33 [0] : vector<64x128xf32> to vector<128xf32>
    %73 = vector.shape_cast %72 : vector<128xf32> to vector<1x128xf32>
    %c0_34 = arith.constant 0 : index
    %c0_35 = arith.constant 0 : index
    %c0_36 = arith.constant 0 : index
    %74 = vector.load %arg8[%c0_34, %c0_35, %c0_36] : memref<1x1x128xf32, #tpu.memory_space<vmem>>, vector<1x1x128xf32>
    %75 = vector.shape_cast %74 : vector<1x1x128xf32> to vector<1x128xf32>
    %76 = vector.shape_cast %73 : vector<1x128xf32> to vector<1x1x128xf32>
    tpu.vector_store %arg8[%c0_34, %c0_35, %c0_36], %76 {strides = array<i32>} : memref<1x1x128xf32, #tpu.memory_space<vmem>>, vector<1x1x128xf32>,
    %77 = arith.mulf %68, %68 : vector<64x128xf32>
    %cst_37 = arith.constant dense<0.000000e+00> : vector<128xf32>
    %78 = vector.multi_reduction <add>, %77, %cst_37 [0] : vector<64x128xf32> to vector<128xf32>
    %79 = vector.shape_cast %78 : vector<128xf32> to vector<1x128xf32>
    %c0_38 = arith.constant 0 : index
    %c0_39 = arith.constant 0 : index
    %c0_40 = arith.constant 0 : index
    %80 = vector.load %arg9[%c0_38, %c0_39, %c0_40] : memref<1x1x128xf32, #tpu.memory_space<vmem>>, vector<1x1x128xf32>
    %81 = vector.shape_cast %80 : vector<1x1x128xf32> to vector<1x128xf32>
    %82 = vector.shape_cast %79 : vector<1x128xf32> to vector<1x1x128xf32>
    tpu.vector_store %arg9[%c0_38, %c0_39, %c0_40], %82 {strides = array<i32>} : memref<1x1x128xf32, #tpu.memory_space<vmem>>, vector<1x1x128xf32>,
    return
  }
  func.func @transform_0(%arg0: i32) -> (i32, i32, i32) {
    %c0_i32 = arith.constant 0 : i32
    %c0_i32_0 = arith.constant 0 : i32
    %c0_i32_1 = arith.constant 0 : i32
    return %arg0, %c0_i32, %c0_i32_0 : i32, i32, i32
  }
  func.func @transform_1(%arg0: i32) -> (i32, i32) {
    %c0_i32 = arith.constant 0 : i32
    %c0_i32_0 = arith.constant 0 : i32
    %c0_i32_1 = arith.constant 0 : i32
    return %c0_i32, %c0_i32_0 : i32, i32
  }
  func.func @transform_2(%arg0: i32) -> (i32, i32) {
    %c0_i32 = arith.constant 0 : i32
    %c0_i32_0 = arith.constant 0 : i32
    %c0_i32_1 = arith.constant 0 : i32
    return %c0_i32, %c0_i32_0 : i32, i32
  }
  func.func @transform_3(%arg0: i32) -> (i32, i32, i32) {
    %c0_i32 = arith.constant 0 : i32
    %c0_i32_0 = arith.constant 0 : i32
    %c0_i32_1 = arith.constant 0 : i32
    %c0_i32_2 = arith.constant 0 : i32
    return %c0_i32, %c0_i32_0, %c0_i32_1 : i32, i32, i32
  }
  func.func @transform_4(%arg0: i32) -> (i32, i32) {
    %c0_i32 = arith.constant 0 : i32
    %c0_i32_0 = arith.constant 0 : i32
    %c0_i32_1 = arith.constant 0 : i32
    return %c0_i32, %c0_i32_0 : i32, i32
  }
  func.func @transform_5(%arg0: i32) -> (i32, i32) {
    %c0_i32 = arith.constant 0 : i32
    %c0_i32_0 = arith.constant 0 : i32
    %c0_i32_1 = arith.constant 0 : i32
    return %c0_i32, %c0_i32_0 : i32, i32
  }
  func.func @transform_6(%arg0: i32) -> (i32, i32, i32) {
    %c0_i32 = arith.constant 0 : i32
    %c0_i32_0 = arith.constant 0 : i32
    %c0_i32_1 = arith.constant 0 : i32
    return %arg0, %c0_i32, %c0_i32_0 : i32, i32, i32
  }
  func.func @transform_7(%arg0: i32) -> (i32, i32, i32) {
    %c0_i32 = arith.constant 0 : i32
    %c0_i32_0 = arith.constant 0 : i32
    %c0_i32_1 = arith.constant 0 : i32
    return %arg0, %c0_i32, %c0_i32_0 : i32, i32, i32
  }
  func.func @transform_8(%arg0: i32) -> (i32, i32, i32) {
    %c0_i32 = arith.constant 0 : i32
    %c0_i32_0 = arith.constant 0 : i32
    %c0_i32_1 = arith.constant 0 : i32
    return %arg0, %c0_i32, %c0_i32_0 : i32, i32, i32
  }
}

module attributes {stable_mosaic.version = 11 : i64} {
  func.func @_bn_relu_kernel(%arg0: i32, %arg1: memref<1x64x128xf32, #tpu.memory_space<vmem>>, %arg2: memref<1x128xf32, #tpu.memory_space<vmem>>, %arg3: memref<1x128xf32, #tpu.memory_space<vmem>>, %arg4: memref<1x64x128xf32, #tpu.memory_space<vmem>>) attributes {dimension_semantics = [#tpu.dimension_semantics<parallel>], iteration_bounds = array<i64: 2>, scalar_prefetch = 0 : i64, scratch_operands = 0 : i64, tpu.core_type = #tpu.core_type<tc>, window_params = [{transform_indices = @transform_0, window_bounds = array<i64: 1, 64, 128>}, {pipeline_mode = #tpu.pipeline_mode<synchronous>, transform_indices = @transform_1, window_bounds = array<i64: 1, 128>}, {pipeline_mode = #tpu.pipeline_mode<synchronous>, transform_indices = @transform_2, window_bounds = array<i64: 1, 128>}, {transform_indices = @transform_3, window_bounds = array<i64: 1, 64, 128>}]} {
    %c0 = arith.constant 0 : index
    %c0_0 = arith.constant 0 : index
    %c0_1 = arith.constant 0 : index
    %0 = vector.load %arg1[%c0, %c0_0, %c0_1] : memref<1x64x128xf32, #tpu.memory_space<vmem>>, vector<1x64x128xf32>
    %1 = vector.shape_cast %0 : vector<1x64x128xf32> to vector<64x128xf32>
    %c0_2 = arith.constant 0 : index
    %c0_3 = arith.constant 0 : index
    %2 = vector.load %arg2[%c0_2, %c0_3] : memref<1x128xf32, #tpu.memory_space<vmem>>, vector<1x128xf32>
    %3 = vector.broadcast %2 : vector<1x128xf32> to vector<64x128xf32>
    %4 = arith.mulf %1, %3 : vector<64x128xf32>
    %c0_4 = arith.constant 0 : index
    %c0_5 = arith.constant 0 : index
    %5 = vector.load %arg3[%c0_4, %c0_5] : memref<1x128xf32, #tpu.memory_space<vmem>>, vector<1x128xf32>
    %6 = vector.broadcast %5 : vector<1x128xf32> to vector<64x128xf32>
    %7 = arith.addf %4, %6 : vector<64x128xf32>
    %cst = arith.constant 0.000000e+00 : f32
    %8 = vector.broadcast %cst : f32 to vector<64x128xf32>
    %9 = arith.maximumf %7, %8 : vector<64x128xf32>
    %c0_6 = arith.constant 0 : index
    %c0_7 = arith.constant 0 : index
    %c0_8 = arith.constant 0 : index
    %10 = vector.load %arg4[%c0_6, %c0_7, %c0_8] : memref<1x64x128xf32, #tpu.memory_space<vmem>>, vector<1x64x128xf32>
    %11 = vector.shape_cast %10 : vector<1x64x128xf32> to vector<64x128xf32>
    %12 = vector.shape_cast %9 : vector<64x128xf32> to vector<1x64x128xf32>
    tpu.vector_store %arg4[%c0_6, %c0_7, %c0_8], %12 {strides = array<i32>} : memref<1x64x128xf32, #tpu.memory_space<vmem>>, vector<1x64x128xf32>,
    return
  }
  func.func @transform_0(%arg0: i32) -> (i32, i32, i32) {
    %c0_i32 = arith.constant 0 : i32
    %c0_i32_0 = arith.constant 0 : i32
    %c0_i32_1 = arith.constant 0 : i32
    return %arg0, %c0_i32, %c0_i32_0 : i32, i32, i32
  }
  func.func @transform_1(%arg0: i32) -> (i32, i32) {
    %c0_i32 = arith.constant 0 : i32
    %c0_i32_0 = arith.constant 0 : i32
    %c0_i32_1 = arith.constant 0 : i32
    return %c0_i32, %c0_i32_0 : i32, i32
  }
  func.func @transform_2(%arg0: i32) -> (i32, i32) {
    %c0_i32 = arith.constant 0 : i32
    %c0_i32_0 = arith.constant 0 : i32
    %c0_i32_1 = arith.constant 0 : i32
    return %c0_i32, %c0_i32_0 : i32, i32
  }
  func.func @transform_3(%arg0: i32) -> (i32, i32, i32) {
    %c0_i32 = arith.constant 0 : i32
    %c0_i32_0 = arith.constant 0 : i32
    %c0_i32_1 = arith.constant 0 : i32
    return %arg0, %c0_i32, %c0_i32_0 : i32, i32, i32
  }
}

</mosaic_0001>

<llo_original>
// kernel: down_forward.5
$region0: #{down_forward.5}
  #allocation0 [shape = 'u32[]', space=smem, size = 0x4, offset = 0x4, fixed_abs, tag = 'smem constant byte address 0x4 - core index']
  #allocation1 [shape = 'u32[72,128]{1,0:T(1,128)}', space=vmem, size = 0x9000, scoped, tag = 'internal scratch']
  %s0 = inlined_call_operand.vmem [shape: f32[2,64,128], index: 0, kind: input, shape index: {}]
  %s1 = inlined_call_operand.vmem [shape: f32[1,128], index: 1, kind: input, shape index: {}]
  %s2 = inlined_call_operand.vmem [shape: f32[1,128], index: 2, kind: input, shape index: {}]
  %s3 = inlined_call_operand.vmem [shape: f32[2,64,128], index: 3, kind: output, shape index: {}]
  %s4 = sld [smem:[#allocation0]]
  $region45: #{down_forward.5} parent=0
    _
  %s6 = ssub.s32 1, %s4
  %s7 = scalar_select 0, %s6, %s4
  loop: start=0, step=1, limit=4
  $region2: #{down_forward.5} parent=0 // loop_pre_header
    _
  $region3: #{down_forward.5} parent=0 // loop_header
    %s9 = sphi 0, %s13
    %p10 = scmp.ge.s32.totalorder %s9, 4
    %s19 = sphi 0, %s21
    %s22 = sphi 0, %s19
    %s23 = sphi 0, %s22
    %s39 = sphi 0, %s23
    %s43 = sphi 0, %s43
    %s45 = sphi 0, %s43
    %s46 = sphi 0, %s45
    %s60 = sphi 0, %s46
    %s64 = sphi 0, %s64
    %s66 = sphi 0, %s64
    %s67 = sphi 0, %s66
    %s81 = sphi 0, %s67
    %s87 = sphi 0, %s89
    %s90 = sphi 0, %s87
    %s91 = sphi 0, %s90
    %s107 = sphi 0, %s91
  $region4: #{down_forward.5} parent=0 // loop_header_branch
    %12 = sbr.rel (%p10) target = $region8
  $region5: #{down_forward.5} parent=0 // loop_body
    %s14 = ssub.s32 %s9, 1
    %s15 = ssub.s32 %s9, 2
    %s16 = sadd.s32 %s9, 1
    %s17 = ssub.s32 %s9, %s16
    %p18 = scmp.eq.s32.totalorder %s17, 0
    %s20 = sadd.s32 %s19, 1
    %s21 = scalar_select %p18, %s19, %s20
    %p24 = pneg %p18
    %p25 = scmp.eq.s32.totalorder %s9, 1
    %p26 = por %p24, %p25
    %p27 = scmp.ne.s32.totalorder %s19, %s22
    %p28 = scmp.eq.s32.totalorder %s9, 0
    %p29 = por %p27, %p28
    %p30 = scmp.ne.s32.totalorder %s19, %s22
    %p31 = scmp.eq.s32.totalorder %s14, 1
    %p32 = por %p30, %p31
    %p33 = scmp.ne.s32.totalorder %s22, %s23
    %p34 = scmp.eq.s32.totalorder %s14, 0
    %p35 = por %p33, %p34
    %p36 = scmp.ne.s32.totalorder %s22, %s23
    %p37 = scmp.eq.s32.totalorder %s15, 1
    %p38 = por %p36, %p37
    %p40 = scmp.ne.s32.totalorder %s23, %s39
    %p41 = scmp.eq.s32.totalorder %s15, 0
    %p42 = por %p40, %p41
    %s44 = sadd.s32 %s43, 1
    %p47 = scmp.eq.s32.totalorder %s9, 1
    %p48 = scmp.ne.s32.totalorder %s43, %s45
    %p49 = scmp.eq.s32.totalorder %s9, 0
    %p50 = por %p48, %p49
    %p51 = scmp.ne.s32.totalorder %s43, %s45
    %p52 = scmp.eq.s32.totalorder %s14, 1
    %p53 = por %p51, %p52
    %p54 = scmp.ne.s32.totalorder %s45, %s46
    %p55 = scmp.eq.s32.totalorder %s14, 0
    %p56 = por %p54, %p55
    %p57 = scmp.ne.s32.totalorder %s45, %s46
    %p58 = scmp.eq.s32.totalorder %s15, 1
    %p59 = por %p57, %p58
    %p61 = scmp.ne.s32.totalorder %s46, %s60
    %p62 = scmp.eq.s32.totalorder %s15, 0
    %p63 = por %p61, %p62
    %s65 = sadd.s32 %s64, 1
    %p68 = scmp.eq.s32.totalorder %s9, 1
    %p69 = scmp.ne.s32.totalorder %s64, %s66
    %p70 = scmp.eq.s32.totalorder %s9, 0
    %p71 = por %p69, %p70
    %p72 = scmp.ne.s32.totalorder %s64, %s66
    %p73 = scmp.eq.s32.totalorder %s14, 1
    %p74 = por %p72, %p73
    %p75 = scmp.ne.s32.totalorder %s66, %s67
    %p76 = scmp.eq.s32.totalorder %s14, 0
    %p77 = por %p75, %p76
    %p78 = scmp.ne.s32.totalorder %s66, %s67
    %p79 = scmp.eq.s32.totalorder %s15, 1
    %p80 = por %p78, %p79
    %p82 = scmp.ne.s32.totalorder %s67, %s81
    %p83 = scmp.eq.s32.totalorder %s15, 0
    %p84 = por %p82, %p83
    %s85 = ssub.s32 %s9, %s16
    %p86 = scmp.eq.s32.totalorder %s85, 0
    %s88 = sadd.s32 %s87, 1
    %s89 = scalar_select %p86, %s87, %s88
    %p92 = pneg %p86
    %p93 = scmp.eq.s32.totalorder %s9, 1
    %p94 = por %p92, %p93
    %p95 = scmp.ne.s32.totalorder %s87, %s90
    %p96 = scmp.eq.s32.totalorder %s9, 0
    %p97 = por %p95, %p96
    %p98 = scmp.ne.s32.totalorder %s87, %s90
    %p99 = scmp.eq.s32.totalorder %s14, 1
    %p100 = por %p98, %p99
    %p101 = scmp.ne.s32.totalorder %s90, %s91
    %p102 = scmp.eq.s32.totalorder %s14, 0
    %p103 = por %p101, %p102
    %p104 = scmp.ne.s32.totalorder %s90, %s91
    %p105 = scmp.eq.s32.totalorder %s15, 1
    %p106 = por %p104, %p105
    %p108 = scmp.ne.s32.totalorder %s91, %s107
    %p109 = scmp.eq.s32.totalorder %s15, 0
    %p110 = por %p108, %p109
    %p111 = scmp.le.s32.totalorder 1, %s9
    %p112 = scmp.lt.s32.totalorder %s9, 3
    %p113 = pnand %p111, %p112
    %p114 = pneg %p113
    // Predicated region
    $region9: #{down_forward.5} parent=5 // pred_check
      _
    $region10: #{down_forward.5} parent=5 // pred_check_branch
      %116 = sbr.rel (%p113) target = $region12
    $region11: #{down_forward.5} parent=5 // pred_region
      %s117 = ssub.s32 %s9, 1
      // Predicated region
      $region13: #{down_forward.5} parent=11 // pred_check
        %p118 = pneg %p56
      $region14: #{down_forward.5} parent=11 // pred_check_branch
        %120 = sbr.rel (%p118) target = $region16
      $region15: #{down_forward.5} parent=11 // pred_region
        _
      $region16: #{down_forward.5} parent=11 // pred_fallthru
        _
      // Predicated region
      $region17: #{down_forward.5} parent=11 // pred_check
        %p121 = pneg %p77
      $region18: #{down_forward.5} parent=11 // pred_check_branch
        %123 = sbr.rel (%p121) target = $region20
      $region19: #{down_forward.5} parent=11 // pred_region
        _
      $region20: #{down_forward.5} parent=11 // pred_fallthru
        _
    $region12: #{down_forward.5} parent=5 // pred_fallthru
      _
    %p124 = scmp.lt.s32.totalorder %s9, 2
    // Predicated region
    $region21: #{down_forward.5} parent=5 // pred_check
      %p125 = pneg %p124
    $region22: #{down_forward.5} parent=5 // pred_check_branch
      %127 = sbr.rel (%p125) target = $region24
    $region23: #{down_forward.5} parent=5 // pred_region
      // Predicated region
      $region25: #{down_forward.5} parent=23 // pred_check
        %p128 = pneg %p29
      $region26: #{down_forward.5} parent=23 // pred_check_branch
        %130 = sbr.rel (%p128) target = $region28
      $region27: #{down_forward.5} parent=23 // pred_region
        %p131 = scmp.lt.s32.totalorder %s9, 1
        %s132 = scalar_select %p131, %s9, 1
        %s133 = smul.addr %s132, 8
        %s134 = smul.addr %s133, 8
        %s135 = scalar_lea.vmem %s0, %s134
      $region28: #{down_forward.5} parent=23 // pred_fallthru
        _
    $region24: #{down_forward.5} parent=5 // pred_fallthru
      _
    %p136 = scmp.le.s32.totalorder 1, %s9
    %p137 = scmp.lt.s32.totalorder %s9, 3
    %p138 = pnand %p136, %p137
    %p139 = pneg %p138
    // Predicated region
    $region29: #{down_forward.5} parent=5 // pred_check
      _
    $region30: #{down_forward.5} parent=5 // pred_check_branch
      %141 = sbr.rel (%p138) target = $region32
    $region31: #{down_forward.5} parent=5 // pred_region
      %s142 = ssub.s32 %s9, 1
      %p143 = scmp.lt.s32.totalorder %s14, 1
      %s144 = scalar_select %p143, %s14, 1
      %s145 = smul.addr %s144, 8
      %s146 = smul.addr %s145, 8
      %s147 = scalar_lea.vmem %s0, %s146
      %p148 = pneg %p35
      %p149 = pneg %p32
      %p150 = pneg %p56
      %p151 = pneg %p53
      %p152 = pneg %p77
      %p153 = pneg %p74
      %p154 = pneg %p103
      %p155 = pneg %p100
      %p156 = scmp.lt.s32.totalorder %s14, 1
      %s157 = scalar_select %p156, %s14, 1
      %s158 = smul.addr %s157, 8
      %s159 = smul.addr %s158, 8
      %s160 = scalar_lea.vmem %s3, %s159
      %p161 = scmp.lt.s32.totalorder %s14, 1
      %s162 = scalar_select %p161, %s14, 1
      %s163 = smul.addr %s162, 8
      %s164 = smul.addr %s163, 8
      %s165 = scalar_lea.vmem %s0, %s164
      %p166 = scmp.lt.s32.totalorder %s14, 1
      %s167 = scalar_select %p166, %s14, 1
      %s168 = smul.addr %s167, 8
      %s169 = smul.addr %s168, 8
      %s170 = scalar_lea.vmem %s3, %s169
      %v171 = vld [vmem:[%s165] sm:$0xff]
      %v172 = vld [vmem:[%s165 + $0x8] sm:$0xff]
      %v173 = vld [vmem:[%s165 + $0x10] sm:$0xff]
      %v174 = vld [vmem:[%s165 + $0x18] sm:$0xff]
      %v175 = vld [vmem:[%s165 + $0x20] sm:$0xff]
      %v176 = vld [vmem:[%s165 + $0x28] sm:$0xff]
      %v177 = vld [vmem:[%s165 + $0x30] sm:$0xff]
      %v178 = vld [vmem:[%s165 + $0x38] sm:$0xff]
      %v179 = vld [vmem:[%s1] sm:$0x1]
      %v181 = vperm.slane %v179, 0
      %v183 = vmul.f32 %v171, %v181
      %v184 = vmul.f32 %v172, %v181
      %v185 = vmul.f32 %v173, %v181
      %v186 = vmul.f32 %v174, %v181
      %v187 = vmul.f32 %v175, %v181
      %v188 = vmul.f32 %v176, %v181
      %v189 = vmul.f32 %v177, %v181
      %v190 = vmul.f32 %v178, %v181
      %v191 = vld [vmem:[%s2] sm:$0x1]
      %v193 = vperm.slane %v191, 0
      %v195 = vadd.f32 %v183, %v193
      %v196 = vadd.f32 %v184, %v193
      %v197 = vadd.f32 %v185, %v193
      %v198 = vadd.f32 %v186, %v193
      %v199 = vadd.f32 %v187, %v193
      %v200 = vadd.f32 %v188, %v193
      %v201 = vadd.f32 %v189, %v193
      %v202 = vadd.f32 %v190, %v193
      %v203 = vmax.f32 %v195, 0.0
      %v204 = vmax.f32 %v196, 0.0
      %v205 = vmax.f32 %v197, 0.0
      %v206 = vmax.f32 %v198, 0.0
      %v207 = vmax.f32 %v199, 0.0
      %v208 = vmax.f32 %v200, 0.0
      %v209 = vmax.f32 %v201, 0.0
      %v210 = vmax.f32 %v202, 0.0
      %211 = vst [vmem:[%s170] sm:$0xff] %v203
      %212 = vst [vmem:[%s170 + $0x8] sm:$0xff] %v204
      %213 = vst [vmem:[%s170 + $0x10] sm:$0xff] %v205
      %214 = vst [vmem:[%s170 + $0x18] sm:$0xff] %v206
      %215 = vst [vmem:[%s170 + $0x20] sm:$0xff] %v207
      %216 = vst [vmem:[%s170 + $0x28] sm:$0xff] %v208
      %217 = vst [vmem:[%s170 + $0x30] sm:$0xff] %v209
      %218 = vst [vmem:[%s170 + $0x38] sm:$0xff] %v210
      %p219 = scmp.lt.s32.totalorder %s14, 1
      %s220 = scalar_select %p219, %s14, 1
      %s221 = smul.addr %s220, 8
      %s222 = smul.addr %s221, 8
      %s223 = scalar_lea.vmem %s3, %s222
      // Predicated region
      $region33: #{down_forward.5} parent=31 // pred_check
        %p224 = pneg %p100
      $region34: #{down_forward.5} parent=31 // pred_check_branch
        %226 = sbr.rel (%p224) target = $region36
      $region35: #{down_forward.5} parent=31 // pred_region
        _
      $region36: #{down_forward.5} parent=31 // pred_fallthru
        _
    $region32: #{down_forward.5} parent=5 // pred_fallthru
      _
    %p227 = scmp.le.s32.totalorder 2, %s9
    // Predicated region
    $region37: #{down_forward.5} parent=5 // pred_check
      %p228 = pneg %p227
    $region38: #{down_forward.5} parent=5 // pred_check_branch
      %230 = sbr.rel (%p228) target = $region40
    $region39: #{down_forward.5} parent=5 // pred_region
      %s231 = ssub.s32 %s9, 2
      // Predicated region
      $region41: #{down_forward.5} parent=39 // pred_check
        %p232 = pneg %p106
      $region42: #{down_forward.5} parent=39 // pred_check_branch
        %234 = sbr.rel (%p232) target = $region44
      $region43: #{down_forward.5} parent=39 // pred_region
        %p235 = scmp.lt.s32.totalorder %s15, 1
        %s236 = scalar_select %p235, %s15, 1
        %s237 = smul.addr %s236, 8
        %s238 = smul.addr %s237, 8
        %s239 = scalar_lea.vmem %s3, %s238
      $region44: #{down_forward.5} parent=39 // pred_fallthru
        _
    $region40: #{down_forward.5} parent=5 // pred_fallthru
      _
  $region6: #{down_forward.5} parent=0 // loop_footer
    %s13 = sadd.s32 1, %s9
  $region7: #{down_forward.5} parent=0 // loop_footer_branch
    %8 = sbr.rel target = $region3
  $region8: #{down_forward.5} parent=0 // loop_exit
    _

// kernel: down_forward.3
$region0: #{down_forward.3}
  #allocation0 [shape = 'u32[]', space=smem, size = 0x4, offset = 0x4, fixed_abs, tag = 'smem constant byte address 0x4 - core index']
  #allocation1 [shape = 'u32[72,128]{1,0:T(1,128)}', space=vmem, size = 0x9000, scoped, tag = 'internal scratch']
  %s0 = inlined_call_operand.vmem [shape: f32[2,4,64,128], index: 0, kind: input, shape index: {}]
  %s1 = inlined_call_operand.vmem [shape: f32[9,64,1], index: 1, kind: input, shape index: {}]
  %s2 = inlined_call_operand.vmem [shape: bf16[1152,128], index: 2, kind: input, shape index: {}]
  %s3 = inlined_call_operand.vmem [shape: f32[1,128], index: 3, kind: input, shape index: {}]
  %s4 = inlined_call_operand.vmem [shape: f32[2,64,128], index: 4, kind: output, shape index: {0}]
  %s5 = inlined_call_operand.vmem [shape: f32[2,1,128], index: 5, kind: output, shape index: {1}]
  %s6 = inlined_call_operand.vmem [shape: f32[2,1,128], index: 6, kind: output, shape index: {2}]
  %7 = xla_tuple %s4, %s5, %s6
  %s8 = sld [smem:[#allocation0]]
  $region65: #{down_forward.3} parent=0
    _
  %s10 = ssub.s32 1, %s8
  %s11 = scalar_select 0, %s10, %s8
  loop: start=0, step=1, limit=4
  $region2: #{down_forward.3} parent=0 // loop_pre_header
    _
  $region3: #{down_forward.3} parent=0 // loop_header
    %s13 = sphi 0, %s17
    %p14 = scmp.ge.s32.totalorder %s13, 4
    %s23 = sphi 0, %s25
    %s26 = sphi 0, %s23
    %s27 = sphi 0, %s26
    %s43 = sphi 0, %s27
    %s47 = sphi 0, %s47
    %s49 = sphi 0, %s47
    %s50 = sphi 0, %s49
    %s64 = sphi 0, %s50
    %s68 = sphi 0, %s68
    %s70 = sphi 0, %s68
    %s71 = sphi 0, %s70
    %s85 = sphi 0, %s71
    %s89 = sphi 0, %s89
    %s91 = sphi 0, %s89
    %s92 = sphi 0, %s91
    %s106 = sphi 0, %s92
    %s112 = sphi 0, %s114
    %s115 = sphi 0, %s112
    %s116 = sphi 0, %s115
    %s132 = sphi 0, %s116
    %s138 = sphi 0, %s140
    %s141 = sphi 0, %s138
    %s142 = sphi 0, %s141
    %s158 = sphi 0, %s142
    %s164 = sphi 0, %s166
    %s167 = sphi 0, %s164
    %s168 = sphi 0, %s167
    %s184 = sphi 0, %s168
  $region4: #{down_forward.3} parent=0 // loop_header_branch
    %16 = sbr.rel (%p14) target = $region8
  $region5: #{down_forward.3} parent=0 // loop_body
    %s18 = ssub.s32 %s13, 1
    %s19 = ssub.s32 %s13, 2
    %s20 = sadd.s32 %s13, 1
    %s21 = ssub.s32 %s13, %s20
    %p22 = scmp.eq.s32.totalorder %s21, 0
    %s24 = sadd.s32 %s23, 1
    %s25 = scalar_select %p22, %s23, %s24
    %p28 = pneg %p22
    %p29 = scmp.eq.s32.totalorder %s13, 1
    %p30 = por %p28, %p29
    %p31 = scmp.ne.s32.totalorder %s23, %s26
    %p32 = scmp.eq.s32.totalorder %s13, 0
    %p33 = por %p31, %p32
    %p34 = scmp.ne.s32.totalorder %s23, %s26
    %p35 = scmp.eq.s32.totalorder %s18, 1
    %p36 = por %p34, %p35
    %p37 = scmp.ne.s32.totalorder %s26, %s27
    %p38 = scmp.eq.s32.totalorder %s18, 0
    %p39 = por %p37, %p38
    %p40 = scmp.ne.s32.totalorder %s26, %s27
    %p41 = scmp.eq.s32.totalorder %s19, 1
    %p42 = por %p40, %p41
    %p44 = scmp.ne.s32.totalorder %s27, %s43
    %p45 = scmp.eq.s32.totalorder %s19, 0
    %p46 = por %p44, %p45
    %s48 = sadd.s32 %s47, 1
    %p51 = scmp.eq.s32.totalorder %s13, 1
    %p52 = scmp.ne.s32.totalorder %s47, %s49
    %p53 = scmp.eq.s32.totalorder %s13, 0
    %p54 = por %p52, %p53
    %p55 = scmp.ne.s32.totalorder %s47, %s49
    %p56 = scmp.eq.s32.totalorder %s18, 1
    %p57 = por %p55, %p56
    %p58 = scmp.ne.s32.totalorder %s49, %s50
    %p59 = scmp.eq.s32.totalorder %s18, 0
    %p60 = por %p58, %p59
    %p61 = scmp.ne.s32.totalorder %s49, %s50
    %p62 = scmp.eq.s32.totalorder %s19, 1
    %p63 = por %p61, %p62
    %p65 = scmp.ne.s32.totalorder %s50, %s64
    %p66 = scmp.eq.s32.totalorder %s19, 0
    %p67 = por %p65, %p66
    %s69 = sadd.s32 %s68, 1
    %p72 = scmp.eq.s32.totalorder %s13, 1
    %p73 = scmp.ne.s32.totalorder %s68, %s70
    %p74 = scmp.eq.s32.totalorder %s13, 0
    %p75 = por %p73, %p74
    %p76 = scmp.ne.s32.totalorder %s68, %s70
    %p77 = scmp.eq.s32.totalorder %s18, 1
    %p78 = por %p76, %p77
    %p79 = scmp.ne.s32.totalorder %s70, %s71
    %p80 = scmp.eq.s32.totalorder %s18, 0
    %p81 = por %p79, %p80
    %p82 = scmp.ne.s32.totalorder %s70, %s71
    %p83 = scmp.eq.s32.totalorder %s19, 1
    %p84 = por %p82, %p83
    %p86 = scmp.ne.s32.totalorder %s71, %s85
    %p87 = scmp.eq.s32.totalorder %s19, 0
    %p88 = por %p86, %p87
    %s90 = sadd.s32 %s89, 1
    %p93 = scmp.eq.s32.totalorder %s13, 1
    %p94 = scmp.ne.s32.totalorder %s89, %s91
    %p95 = scmp.eq.s32.totalorder %s13, 0
    %p96 = por %p94, %p95
    %p97 = scmp.ne.s32.totalorder %s89, %s91
    %p98 = scmp.eq.s32.totalorder %s18, 1
    %p99 = por %p97, %p98
    %p100 = scmp.ne.s32.totalorder %s91, %s92
    %p101 = scmp.eq.s32.totalorder %s18, 0
    %p102 = por %p100, %p101
    %p103 = scmp.ne.s32.totalorder %s91, %s92
    %p104 = scmp.eq.s32.totalorder %s19, 1
    %p105 = por %p103, %p104
    %p107 = scmp.ne.s32.totalorder %s92, %s106
    %p108 = scmp.eq.s32.totalorder %s19, 0
    %p109 = por %p107, %p108
    %s110 = ssub.s32 %s13, %s20
    %p111 = scmp.eq.s32.totalorder %s110, 0
    %s113 = sadd.s32 %s112, 1
    %s114 = scalar_select %p111, %s112, %s113
    %p117 = pneg %p111
    %p118 = scmp.eq.s32.totalorder %s13, 1
    %p119 = por %p117, %p118
    %p120 = scmp.ne.s32.totalorder %s112, %s115
    %p121 = scmp.eq.s32.totalorder %s13, 0
    %p122 = por %p120, %p121
    %p123 = scmp.ne.s32.totalorder %s112, %s115
    %p124 = scmp.eq.s32.totalorder %s18, 1
    %p125 = por %p123, %p124
    %p126 = scmp.ne.s32.totalorder %s115, %s116
    %p127 = scmp.eq.s32.totalorder %s18, 0
    %p128 = por %p126, %p127
    %p129 = scmp.ne.s32.totalorder %s115, %s116
    %p130 = scmp.eq.s32.totalorder %s19, 1
    %p131 = por %p129, %p130
    %p133 = scmp.ne.s32.totalorder %s116, %s132
    %p134 = scmp.eq.s32.totalorder %s19, 0
    %p135 = por %p133, %p134
    %s136 = ssub.s32 %s13, %s20
    %p137 = scmp.eq.s32.totalorder %s136, 0
    %s139 = sadd.s32 %s138, 1
    %s140 = scalar_select %p137, %s138, %s139
    %p143 = pneg %p137
    %p144 = scmp.eq.s32.totalorder %s13, 1
    %p145 = por %p143, %p144
    %p146 = scmp.ne.s32.totalorder %s138, %s141
    %p147 = scmp.eq.s32.totalorder %s13, 0
    %p148 = por %p146, %p147
    %p149 = scmp.ne.s32.totalorder %s138, %s141
    %p150 = scmp.eq.s32.totalorder %s18, 1
    %p151 = por %p149, %p150
    %p152 = scmp.ne.s32.totalorder %s141, %s142
    %p153 = scmp.eq.s32.totalorder %s18, 0
    %p154 = por %p152, %p153
    %p155 = scmp.ne.s32.totalorder %s141, %s142
    %p156 = scmp.eq.s32.totalorder %s19, 1
    %p157 = por %p155, %p156
    %p159 = scmp.ne.s32.totalorder %s142, %s158
    %p160 = scmp.eq.s32.totalorder %s19, 0
    %p161 = por %p159, %p160
    %s162 = ssub.s32 %s13, %s20
    %p163 = scmp.eq.s32.totalorder %s162, 0
    %s165 = sadd.s32 %s164, 1
    %s166 = scalar_select %p163, %s164, %s165
    %p169 = pneg %p163
    %p170 = scmp.eq.s32.totalorder %s13, 1
    %p171 = por %p169, %p170
    %p172 = scmp.ne.s32.totalorder %s164, %s167
    %p173 = scmp.eq.s32.totalorder %s13, 0
    %p174 = por %p172, %p173
    %p175 = scmp.ne.s32.totalorder %s164, %s167
    %p176 = scmp.eq.s32.totalorder %s18, 1
    %p177 = por %p175, %p176
    %p178 = scmp.ne.s32.totalorder %s167, %s168
    %p179 = scmp.eq.s32.totalorder %s18, 0
    %p180 = por %p178, %p179
    %p181 = scmp.ne.s32.totalorder %s167, %s168
    %p182 = scmp.eq.s32.totalorder %s19, 1
    %p183 = por %p181, %p182
    %p185 = scmp.ne.s32.totalorder %s168, %s184
    %p186 = scmp.eq.s32.totalorder %s19, 0
    %p187 = por %p185, %p186
    %p188 = scmp.le.s32.totalorder 1, %s13
    %p189 = scmp.lt.s32.totalorder %s13, 3
    %p190 = pnand %p188, %p189
    %p191 = pneg %p190
    // Predicated region
    $region9: #{down_forward.3} parent=5 // pred_check
      _
    $region10: #{down_forward.3} parent=5 // pred_check_branch
      %193 = sbr.rel (%p190) target = $region12
    $region11: #{down_forward.3} parent=5 // pred_region
      %s194 = ssub.s32 %s13, 1
      // Predicated region
      $region13: #{down_forward.3} parent=11 // pred_check
        %p195 = pneg %p60
      $region14: #{down_forward.3} parent=11 // pred_check_branch
        %197 = sbr.rel (%p195) target = $region16
      $region15: #{down_forward.3} parent=11 // pred_region
        _
      $region16: #{down_forward.3} parent=11 // pred_fallthru
        _
      // Predicated region
      $region17: #{down_forward.3} parent=11 // pred_check
        %p198 = pneg %p81
      $region18: #{down_forward.3} parent=11 // pred_check_branch
        %200 = sbr.rel (%p198) target = $region20
      $region19: #{down_forward.3} parent=11 // pred_region
        _
      $region20: #{down_forward.3} parent=11 // pred_fallthru
        _
      // Predicated region
      $region21: #{down_forward.3} parent=11 // pred_check
        %p201 = pneg %p102
      $region22: #{down_forward.3} parent=11 // pred_check_branch
        %203 = sbr.rel (%p201) target = $region24
      $region23: #{down_forward.3} parent=11 // pred_region
        _
      $region24: #{down_forward.3} parent=11 // pred_fallthru
        _
    $region12: #{down_forward.3} parent=5 // pred_fallthru
      _
    %p204 = scmp.lt.s32.totalorder %s13, 2
    // Predicated region
    $region25: #{down_forward.3} parent=5 // pred_check
      %p205 = pneg %p204
    $region26: #{down_forward.3} parent=5 // pred_check_branch
      %207 = sbr.rel (%p205) target = $region28
    $region27: #{down_forward.3} parent=5 // pred_region
      // Predicated region
      $region29: #{down_forward.3} parent=27 // pred_check
        %p208 = pneg %p33
      $region30: #{down_forward.3} parent=27 // pred_check_branch
        %210 = sbr.rel (%p208) target = $region32
      $region31: #{down_forward.3} parent=27 // pred_region
        %p211 = scmp.lt.s32.totalorder %s13, 1
        %s212 = scalar_select %p211, %s13, 1
        %s213 = smul.addr %s212, 32
        %s214 = smul.addr %s213, 8
        %s215 = scalar_lea.vmem %s0, %s214
      $region32: #{down_forward.3} parent=27 // pred_fallthru
        _
    $region28: #{down_forward.3} parent=5 // pred_fallthru
      _
    %p216 = scmp.le.s32.totalorder 1, %s13
    %p217 = scmp.lt.s32.totalorder %s13, 3
    %p218 = pnand %p216, %p217
    %p219 = pneg %p218
    // Predicated region
    $region33: #{down_forward.3} parent=5 // pred_check
      _
    $region34: #{down_forward.3} parent=5 // pred_check_branch
      %221 = sbr.rel (%p218) target = $region36
    $region35: #{down_forward.3} parent=5 // pred_region
      %s222 = ssub.s32 %s13, 1
      %p223 = scmp.lt.s32.totalorder %s18, 1
      %s224 = scalar_select %p223, %s18, 1
      %s225 = smul.addr %s224, 32
      %s226 = smul.addr %s225, 8
      %s227 = scalar_lea.vmem %s0, %s226
      %p228 = pneg %p39
      %p229 = pneg %p36
      %p230 = pneg %p60
      %p231 = pneg %p57
      %p232 = pneg %p81
      %p233 = pneg %p78
      %p234 = pneg %p102
      %p235 = pneg %p99
      %p236 = pneg %p128
      %p237 = pneg %p125
      %p238 = scmp.lt.s32.totalorder %s18, 1
      %s239 = scalar_select %p238, %s18, 1
      %s240 = smul.addr %s239, 8
      %s241 = smul.addr %s240, 8
      %s242 = scalar_lea.vmem %s4, %s241
      %p243 = pneg %p154
      %p244 = pneg %p151
      %p245 = scmp.lt.s32.totalorder %s18, 1
      %s246 = scalar_select %p245, %s18, 1
      %s247 = scalar_lea.vmem %s5, %s246
      %p248 = pneg %p180
      %p249 = pneg %p177
      %p250 = scmp.lt.s32.totalorder %s18, 1
      %s251 = scalar_select %p250, %s18, 1
      %s252 = scalar_lea.vmem %s6, %s251
      %p253 = scmp.lt.s32.totalorder %s18, 1
      %s254 = scalar_select %p253, %s18, 1
      %s255 = smul.addr %s254, 32
      %s256 = smul.addr %s255, 8
      %s257 = scalar_lea.vmem %s0, %s256
      %p258 = scmp.lt.s32.totalorder %s18, 1
      %s259 = scalar_select %p258, %s18, 1
      %s260 = smul.addr %s259, 8
      %s261 = smul.addr %s260, 8
      %s262 = scalar_lea.vmem %s4, %s261
      %p263 = scmp.lt.s32.totalorder %s18, 1
      %s264 = scalar_select %p263, %s18, 1
      %s265 = scalar_lea.vmem %s5, %s264
      %p266 = scmp.lt.s32.totalorder %s18, 1
      %s267 = scalar_select %p266, %s18, 1
      %s268 = scalar_lea.vmem %s6, %s267
      %v269 = vld [vmem:[%s257] sm:$0xff]
      %v270 = vld [vmem:[%s257 + $0x8] sm:$0xff]
      %v271 = vld [vmem:[%s257 + $0x10] sm:$0xff]
      %v272 = vld [vmem:[%s257 + $0x18] sm:$0xff]
      %v273 = vld [vmem:[%s257 + $0x20] sm:$0xff]
      %v274 = vld [vmem:[%s257 + $0x28] sm:$0xff]
      %v275 = vld [vmem:[%s257 + $0x30] sm:$0xff]
      %v276 = vld [vmem:[%s257 + $0x38] sm:$0xff]
      %s277 = scalar_lea.vmem %s257, 64
      %v278 = vld [vmem:[%s277] sm:$0xff]
      %v279 = vld [vmem:[%s277 + $0x8] sm:$0xff]
      %v280 = vld [vmem:[%s277 + $0x10] sm:$0xff]
      %v281 = vld [vmem:[%s277 + $0x18] sm:$0xff]
      %v282 = vld [vmem:[%s277 + $0x20] sm:$0xff]
      %v283 = vld [vmem:[%s277 + $0x28] sm:$0xff]
      %v284 = vld [vmem:[%s277 + $0x30] sm:$0xff]
      %v285 = vld [vmem:[%s277 + $0x38] sm:$0xff]
      %v286 = vmax.f32 %v269, %v278
      %v287 = vmax.f32 %v270, %v279
      %v288 = vmax.f32 %v271, %v280
      %v289 = vmax.f32 %v272, %v281
      %v290 = vmax.f32 %v273, %v282
      %v291 = vmax.f32 %v274, %v283
      %v292 = vmax.f32 %v275, %v284
      %v293 = vmax.f32 %v276, %v285
      %s294 = scalar_lea.vmem %s257, 128
      %v295 = vld [vmem:[%s294] sm:$0xff]
      %v296 = vld [vmem:[%s294 + $0x8] sm:$0xff]
      %v297 = vld [vmem:[%s294 + $0x10] sm:$0xff]
      %v298 = vld [vmem:[%s294 + $0x18] sm:$0xff]
      %v299 = vld [vmem:[%s294 + $0x20] sm:$0xff]
      %v300 = vld [vmem:[%s294 + $0x28] sm:$0xff]
      %v301 = vld [vmem:[%s294 + $0x30] sm:$0xff]
      %v302 = vld [vmem:[%s294 + $0x38] sm:$0xff]
      %s303 = scalar_lea.vmem %s257, 192
      %v304 = vld [vmem:[%s303] sm:$0xff]
      %v305 = vld [vmem:[%s303 + $0x8] sm:$0xff]
      %v306 = vld [vmem:[%s303 + $0x10] sm:$0xff]
      %v307 = vld [vmem:[%s303 + $0x18] sm:$0xff]
      %v308 = vld [vmem:[%s303 + $0x20] sm:$0xff]
      %v309 = vld [vmem:[%s303 + $0x28] sm:$0xff]
      %v310 = vld [vmem:[%s303 + $0x30] sm:$0xff]
      %v311 = vld [vmem:[%s303 + $0x38] sm:$0xff]
      %v312 = vmax.f32 %v295, %v304
      %v313 = vmax.f32 %v296, %v305
      %v314 = vmax.f32 %v297, %v306
      %v315 = vmax.f32 %v298, %v307
      %v316 = vmax.f32 %v299, %v308
      %v317 = vmax.f32 %v300, %v309
      %v318 = vmax.f32 %v301, %v310
      %v319 = vmax.f32 %v302, %v311
      %v320 = vmax.f32 %v286, %v312
      %v321 = vmax.f32 %v287, %v313
      %v322 = vmax.f32 %v288, %v314
      %v323 = vmax.f32 %v289, %v315
      %v324 = vmax.f32 %v290, %v316
      %v325 = vmax.f32 %v291, %v317
      %v326 = vmax.f32 %v292, %v318
      %v327 = vmax.f32 %v293, %v319
      %v328 = vld [vmem:[%s2] sm:$0xf]
      %v329 = vld [vmem:[%s2 + $0x4] sm:$0xf]
      %v330 = vld [vmem:[%s2 + $0x8] sm:$0xf]
      %v331 = vld [vmem:[%s2 + $0xc] sm:$0xf]
      %v332 = vld [vmem:[%s2 + $0x10] sm:$0xf]
      %v333 = vld [vmem:[%s2 + $0x14] sm:$0xf]
      %v334 = vld [vmem:[%s2 + $0x18] sm:$0xf]
      %v335 = vld [vmem:[%s2 + $0x1c] sm:$0xf]
      %v336 = vld [vmem:[%s2 + $0x20] sm:$0xf]
      %v337 = vld [vmem:[%s2 + $0x24] sm:$0xf]
      %v338 = vld [vmem:[%s2 + $0x28] sm:$0xf]
      %v339 = vld [vmem:[%s2 + $0x2c] sm:$0xf]
      %v340 = vld [vmem:[%s2 + $0x30] sm:$0xf]
      %v341 = vld [vmem:[%s2 + $0x34] sm:$0xf]
      %v342 = vld [vmem:[%s2 + $0x38] sm:$0xf]
      %v343 = vld [vmem:[%s2 + $0x3c] sm:$0xf]
      %v344 = vld [vmem:[%s2 + $0x40] sm:$0xf]
      %v345 = vld [vmem:[%s2 + $0x44] sm:$0xf]
      %v346 = vld [vmem:[%s2 + $0x48] sm:$0xf]
      %v347 = vld [vmem:[%s2 + $0x4c] sm:$0xf]
      %v348 = vld [vmem:[%s2 + $0x50] sm:$0xf]
      %v349 = vld [vmem:[%s2 + $0x54] sm:$0xf]
      %v350 = vld [vmem:[%s2 + $0x58] sm:$0xf]
      %v351 = vld [vmem:[%s2 + $0x5c] sm:$0xf]
      %v352 = vld [vmem:[%s2 + $0x60] sm:$0xf]
      %v353 = vld [vmem:[%s2 + $0x64] sm:$0xf]
      %v354 = vld [vmem:[%s2 + $0x68] sm:$0xf]
      %v355 = vld [vmem:[%s2 + $0x6c] sm:$0xf]
      %v356 = vld [vmem:[%s2 + $0x70] sm:$0xf]
      %v357 = vld [vmem:[%s2 + $0x74] sm:$0xf]
      %v358 = vld [vmem:[%s2 + $0x78] sm:$0xf]
      %v359 = vld [vmem:[%s2 + $0x7c] sm:$0xf]
      %v360 = vld [vmem:[%s2 + $0x80] sm:$0xf]
      %v361 = vld [vmem:[%s2 + $0x84] sm:$0xf]
      %v362 = vld [vmem:[%s2 + $0x88] sm:$0xf]
      %v363 = vld [vmem:[%s2 + $0x8c] sm:$0xf]
      %v364 = vld [vmem:[%s2 + $0x90] sm:$0xf]
      %v365 = vld [vmem:[%s2 + $0x94] sm:$0xf]
      %v366 = vld [vmem:[%s2 + $0x98] sm:$0xf]
      %v367 = vld [vmem:[%s2 + $0x9c] sm:$0xf]
      %v368 = vld [vmem:[%s2 + $0xa0] sm:$0xf]
      %v369 = vld [vmem:[%s2 + $0xa4] sm:$0xf]
      %v370 = vld [vmem:[%s2 + $0xa8] sm:$0xf]
      %v371 = vld [vmem:[%s2 + $0xac] sm:$0xf]
      %v372 = vld [vmem:[%s2 + $0xb0] sm:$0xf]
      %v373 = vld [vmem:[%s2 + $0xb4] sm:$0xf]
      %v374 = vld [vmem:[%s2 + $0xb8] sm:$0xf]
      %v375 = vld [vmem:[%s2 + $0xbc] sm:$0xf]
      %v376 = vld [vmem:[%s2 + $0xc0] sm:$0xf]
      %v377 = vld [vmem:[%s2 + $0xc4] sm:$0xf]
      %v378 = vld [vmem:[%s2 + $0xc8] sm:$0xf]
      %v379 = vld [vmem:[%s2 + $0xcc] sm:$0xf]
      %v380 = vld [vmem:[%s2 + $0xd0] sm:$0xf]
      %v381 = vld [vmem:[%s2 + $0xd4] sm:$0xf]
      %v382 = vld [vmem:[%s2 + $0xd8] sm:$0xf]
      %v383 = vld [vmem:[%s2 + $0xdc] sm:$0xf]
      %v384 = vld [vmem:[%s2 + $0xe0] sm:$0xf]
      %v385 = vld [vmem:[%s2 + $0xe4] sm:$0xf]
      %v386 = vld [vmem:[%s2 + $0xe8] sm:$0xf]
      %v387 = vld [vmem:[%s2 + $0xec] sm:$0xf]
      %v388 = vld [vmem:[%s2 + $0xf0] sm:$0xf]
      %v389 = vld [vmem:[%s2 + $0xf4] sm:$0xf]
      %v390 = vld [vmem:[%s2 + $0xf8] sm:$0xf]
      %v391 = vld [vmem:[%s2 + $0xfc] sm:$0xf]
      %v392 = vld [vmem:[%s2 + $0x100] sm:$0xf]
      %v393 = vld [vmem:[%s2 + $0x104] sm:$0xf]
      %v394 = vld [vmem:[%s2 + $0x108] sm:$0xf]
      %v395 = vld [vmem:[%s2 + $0x10c] sm:$0xf]
      %v396 = vld [vmem:[%s2 + $0x110] sm:$0xf]
      %v397 = vld [vmem:[%s2 + $0x114] sm:$0xf]
      %v398 = vld [vmem:[%s2 + $0x118] sm:$0xf]
      %v399 = vld [vmem:[%s2 + $0x11c] sm:$0xf]
      %v400 = vld [vmem:[%s2 + $0x120] sm:$0xf]
      %v401 = vld [vmem:[%s2 + $0x124] sm:$0xf]
      %v402 = vld [vmem:[%s2 + $0x128] sm:$0xf]
      %v403 = vld [vmem:[%s2 + $0x12c] sm:$0xf]
      %v404 = vld [vmem:[%s2 + $0x130] sm:$0xf]
      %v405 = vld [vmem:[%s2 + $0x134] sm:$0xf]
      %v406 = vld [vmem:[%s2 + $0x138] sm:$0xf]
      %v407 = vld [vmem:[%s2 + $0x13c] sm:$0xf]
      %v408 = vld [vmem:[%s2 + $0x140] sm:$0xf]
      %v409 = vld [vmem:[%s2 + $0x144] sm:$0xf]
      %v410 = vld [vmem:[%s2 + $0x148] sm:$0xf]
      %v411 = vld [vmem:[%s2 + $0x14c] sm:$0xf]
      %v412 = vld [vmem:[%s2 + $0x150] sm:$0xf]
      %v413 = vld [vmem:[%s2 + $0x154] sm:$0xf]
      %v414 = vld [vmem:[%s2 + $0x158] sm:$0xf]
      %v415 = vld [vmem:[%s2 + $0x15c] sm:$0xf]
      %v416 = vld [vmem:[%s2 + $0x160] sm:$0xf]
      %v417 = vld [vmem:[%s2 + $0x164] sm:$0xf]
      %v418 = vld [vmem:[%s2 + $0x168] sm:$0xf]
      %v419 = vld [vmem:[%s2 + $0x16c] sm:$0xf]
      %v420 = vld [vmem:[%s2 + $0x170] sm:$0xf]
      %v421 = vld [vmem:[%s2 + $0x174] sm:$0xf]
      %v422 = vld [vmem:[%s2 + $0x178] sm:$0xf]
      %v423 = vld [vmem:[%s2 + $0x17c] sm:$0xf]
      %v424 = vld [vmem:[%s2 + $0x180] sm:$0xf]
      %v425 = vld [vmem:[%s2 + $0x184] sm:$0xf]
      %v426 = vld [vmem:[%s2 + $0x188] sm:$0xf]
      %v427 = vld [vmem:[%s2 + $0x18c] sm:$0xf]
      %v428 = vld [vmem:[%s2 + $0x190] sm:$0xf]
      %v429 = vld [vmem:[%s2 + $0x194] sm:$0xf]
      %v430 = vld [vmem:[%s2 + $0x198] sm:$0xf]
      %v431 = vld [vmem:[%s2 + $0x19c] sm:$0xf]
      %v432 = vld [vmem:[%s2 + $0x1a0] sm:$0xf]
      %v433 = vld [vmem:[%s2 + $0x1a4] sm:$0xf]
      %v434 = vld [vmem:[%s2 + $0x1a8] sm:$0xf]
      %v435 = vld [vmem:[%s2 + $0x1ac] sm:$0xf]
      %v436 = vld [vmem:[%s2 + $0x1b0] sm:$0xf]
      %v437 = vld [vmem:[%s2 + $0x1b4] sm:$0xf]
      %v438 = vld [vmem:[%s2 + $0x1b8] sm:$0xf]
      %v439 = vld [vmem:[%s2 + $0x1bc] sm:$0xf]
      %v440 = vld [vmem:[%s2 + $0x1c0] sm:$0xf]
      %v441 = vld [vmem:[%s2 + $0x1c4] sm:$0xf]
      %v442 = vld [vmem:[%s2 + $0x1c8] sm:$0xf]
      %v443 = vld [vmem:[%s2 + $0x1cc] sm:$0xf]
      %v444 = vld [vmem:[%s2 + $0x1d0] sm:$0xf]
      %v445 = vld [vmem:[%s2 + $0x1d4] sm:$0xf]
      %v446 = vld [vmem:[%s2 + $0x1d8] sm:$0xf]
      %v447 = vld [vmem:[%s2 + $0x1dc] sm:$0xf]
      %v448 = vld [vmem:[%s2 + $0x1e0] sm:$0xf]
      %v449 = vld [vmem:[%s2 + $0x1e4] sm:$0xf]
      %v450 = vld [vmem:[%s2 + $0x1e8] sm:$0xf]
      %v451 = vld [vmem:[%s2 + $0x1ec] sm:$0xf]
      %v452 = vld [vmem:[%s2 + $0x1f0] sm:$0xf]
      %v453 = vld [vmem:[%s2 + $0x1f4] sm:$0xf]
      %v454 = vld [vmem:[%s2 + $0x1f8] sm:$0xf]
      %v455 = vld [vmem:[%s2 + $0x1fc] sm:$0xf]
      %v456 = vld [vmem:[%s2 + $0x200] sm:$0xf]
      %v457 = vld [vmem:[%s2 + $0x204] sm:$0xf]
      %v458 = vld [vmem:[%s2 + $0x208] sm:$0xf]
      %v459 = vld [vmem:[%s2 + $0x20c] sm:$0xf]
      %v460 = vld [vmem:[%s2 + $0x210] sm:$0xf]
      %v461 = vld [vmem:[%s2 + $0x214] sm:$0xf]
      %v462 = vld [vmem:[%s2 + $0x218] sm:$0xf]
      %v463 = vld [vmem:[%s2 + $0x21c] sm:$0xf]
      %v464 = vld [vmem:[%s2 + $0x220] sm:$0xf]
      %v465 = vld [vmem:[%s2 + $0x224] sm:$0xf]
      %v466 = vld [vmem:[%s2 + $0x228] sm:$0xf]
      %v467 = vld [vmem:[%s2 + $0x22c] sm:$0xf]
      %v468 = vld [vmem:[%s2 + $0x230] sm:$0xf]
      %v469 = vld [vmem:[%s2 + $0x234] sm:$0xf]
      %v470 = vld [vmem:[%s2 + $0x238] sm:$0xf]
      %v471 = vld [vmem:[%s2 + $0x23c] sm:$0xf]
      %v472 = vld [vmem:[%s3] sm:$0x1]
      %v473 = vrot.slane %v320, 7
      %v474 = vrot.slane %v321, 7
      %v475 = vrot.slane %v322, 7
      %v476 = vrot.slane %v323, 7
      %v477 = vrot.slane %v324, 7
      %v478 = vrot.slane %v325, 7
      %v479 = vrot.slane %v326, 7
      %v480 = vrot.slane %v327, 7
      %v481 = vlaneseq
      %v482 = vshrl.u32 %v481, 7
      %vm483 = vcmp.lt.s32.totalorder %v482, 1
      %v484 = vsel %vm483, %v479, %v480
      %v485 = vsel %vm483, %v478, %v479
      %v486 = vsel %vm483, %v477, %v478
      %v487 = vsel %vm483, %v476, %v477
      %v488 = vsel %vm483, %v475, %v476
      %v489 = vsel %vm483, %v474, %v475
      %v490 = vsel %vm483, %v473, %v474
      %v491 = vsel %vm483, %v480, %v473
      %v492 = vld [vmem:[%s1] sm:$0xff]
      %v493 = vld [vmem:[%s1 + $0x8] sm:$0xff]
      %v494 = vld [vmem:[%s1 + $0x10] sm:$0xff]
      %v495 = vld [vmem:[%s1 + $0x18] sm:$0xff]
      %v496 = vld [vmem:[%s1 + $0x20] sm:$0xff]
      %v497 = vld [vmem:[%s1 + $0x28] sm:$0xff]
      %v498 = vld [vmem:[%s1 + $0x30] sm:$0xff]
      %v499 = vld [vmem:[%s1 + $0x38] sm:$0xff]
      %501 = vset.pattern.permute.xlu0 0
      %502 = vperm.xlu0 %501, %v492
      %v503 = vpop.permute.xlu0 %502
      %506 = vset.pattern.permute.xlu0 0
      %507 = vperm.xlu0 %506, %v493
      %v508 = vpop.permute.xlu0 %507
      %511 = vset.pattern.permute.xlu0 0
      %512 = vperm.xlu0 %511, %v494
      %v513 = vpop.permute.xlu0 %512
      %516 = vset.pattern.permute.xlu0 0
      %517 = vperm.xlu0 %516, %v495
      %v518 = vpop.permute.xlu0 %517
      %521 = vset.pattern.permute.xlu0 0
      %522 = vperm.xlu0 %521, %v496
      %v523 = vpop.permute.xlu0 %522
      %526 = vset.pattern.permute.xlu0 0
      %527 = vperm.xlu0 %526, %v497
      %v528 = vpop.permute.xlu0 %527
      %531 = vset.pattern.permute.xlu0 0
      %532 = vperm.xlu0 %531, %v498
      %v533 = vpop.permute.xlu0 %532
      %536 = vset.pattern.permute.xlu0 0
      %537 = vperm.xlu0 %536, %v499
      %v538 = vpop.permute.xlu0 %537
      %v540 = vmul.f32 %v484, %v503
      %v541 = vmul.f32 %v491, %v508
      %v542 = vmul.f32 %v490, %v513
      %v543 = vmul.f32 %v489, %v518
      %v544 = vmul.f32 %v488, %v523
      %v545 = vmul.f32 %v487, %v528
      %v546 = vmul.f32 %v486, %v533
      %v547 = vmul.f32 %v485, %v538
      %v548 = vpack.c.bf16 %v540, %v540
      %v549 = vpack.c.bf16 %v541, %v541
      %v550 = vpack.c.bf16 %v542, %v542
      %v551 = vpack.c.bf16 %v543, %v543
      %v552 = vpack.c.bf16 %v544, %v544
      %v553 = vpack.c.bf16 %v545, %v545
      %v554 = vpack.c.bf16 %v546, %v546
      %v555 = vpack.c.bf16 %v547, %v547
      %s556 = scalar_lea.vmem %s1, 64
      %v557 = vld [vmem:[%s556] sm:$0xff]
      %v558 = vld [vmem:[%s556 + $0x8] sm:$0xff]
      %v559 = vld [vmem:[%s556 + $0x10] sm:$0xff]
      %v560 = vld [vmem:[%s556 + $0x18] sm:$0xff]
      %v561 = vld [vmem:[%s556 + $0x20] sm:$0xff]
      %v562 = vld [vmem:[%s556 + $0x28] sm:$0xff]
      %v563 = vld [vmem:[%s556 + $0x30] sm:$0xff]
      %v564 = vld [vmem:[%s556 + $0x38] sm:$0xff]
      %566 = vset.pattern.permute.xlu0 0
      %567 = vperm.xlu0 %566, %v557
      %v568 = vpop.permute.xlu0 %567
      %571 = vset.pattern.permute.xlu0 0
      %572 = vperm.xlu0 %571, %v558
      %v573 = vpop.permute.xlu0 %572
      %576 = vset.pattern.permute.xlu0 0
      %577 = vperm.xlu0 %576, %v559
      %v578 = vpop.permute.xlu0 %577
      %581 = vset.pattern.permute.xlu0 0
      %582 = vperm.xlu0 %581, %v560
      %v583 = vpop.permute.xlu0 %582
      %586 = vset.pattern.permute.xlu0 0
      %587 = vperm.xlu0 %586, %v561
      %v588 = vpop.permute.xlu0 %587
      %591 = vset.pattern.permute.xlu0 0
      %592 = vperm.xlu0 %591, %v562
      %v593 = vpop.permute.xlu0 %592
      %596 = vset.pattern.permute.xlu0 0
      %597 = vperm.xlu0 %596, %v563
      %v598 = vpop.permute.xlu0 %597
      %601 = vset.pattern.permute.xlu0 0
      %602 = vperm.xlu0 %601, %v564
      %v603 = vpop.permute.xlu0 %602
      %v605 = vmul.f32 %v327, %v568
      %v606 = vmul.f32 %v320, %v573
      %v607 = vmul.f32 %v321, %v578
      %v608 = vmul.f32 %v322, %v583
      %v609 = vmul.f32 %v323, %v588
      %v610 = vmul.f32 %v324, %v593
      %v611 = vmul.f32 %v325, %v598
      %v612 = vmul.f32 %v326, %v603
      %v613 = vpack.c.bf16 %v605, %v605
      %v614 = vpack.c.bf16 %v606, %v606
      %v615 = vpack.c.bf16 %v607, %v607
      %v616 = vpack.c.bf16 %v608, %v608
      %v617 = vpack.c.bf16 %v609, %v609
      %v618 = vpack.c.bf16 %v610, %v610
      %v619 = vpack.c.bf16 %v611, %v611
      %v620 = vpack.c.bf16 %v612, %v612
      %v621 = vrot.slane %v320, 1
      %v622 = vrot.slane %v321, 1
      %v623 = vrot.slane %v322, 1
      %v624 = vrot.slane %v323, 1
      %v625 = vrot.slane %v324, 1
      %v626 = vrot.slane %v325, 1
      %v627 = vrot.slane %v326, 1
      %v628 = vrot.slane %v327, 1
      %vm629 = vcmp.lt.s32.totalorder %v482, 7
      %v630 = vsel %vm629, %v627, %v628
      %v631 = vsel %vm629, %v626, %v627
      %v632 = vsel %vm629, %v625, %v626
      %v633 = vsel %vm629, %v624, %v625
      %v634 = vsel %vm629, %v623, %v624
      %v635 = vsel %vm629, %v622, %v623
      %v636 = vsel %vm629, %v621, %v622
      %v637 = vsel %vm629, %v628, %v621
      %s638 = scalar_lea.vmem %s1, 128
      %v639 = vld [vmem:[%s638] sm:$0xff]
      %v640 = vld [vmem:[%s638 + $0x8] sm:$0xff]
      %v641 = vld [vmem:[%s638 + $0x10] sm:$0xff]
      %v642 = vld [vmem:[%s638 + $0x18] sm:$0xff]
      %v643 = vld [vmem:[%s638 + $0x20] sm:$0xff]
      %v644 = vld [vmem:[%s638 + $0x28] sm:$0xff]
      %v645 = vld [vmem:[%s638 + $0x30] sm:$0xff]
      %v646 = vld [vmem:[%s638 + $0x38] sm:$0xff]
      %648 = vset.pattern.permute.xlu0 0
      %649 = vperm.xlu0 %648, %v639
      %v650 = vpop.permute.xlu0 %649
      %653 = vset.pattern.permute.xlu0 0
      %654 = vperm.xlu0 %653, %v640
      %v655 = vpop.permute.xlu0 %654
      %658 = vset.pattern.permute.xlu0 0
      %659 = vperm.xlu0 %658, %v641
      %v660 = vpop.permute.xlu0 %659
      %663 = vset.pattern.permute.xlu0 0
      %664 = vperm.xlu0 %663, %v642
      %v665 = vpop.permute.xlu0 %664
      %668 = vset.pattern.permute.xlu0 0
      %669 = vperm.xlu0 %668, %v643
      %v670 = vpop.permute.xlu0 %669
      %673 = vset.pattern.permute.xlu0 0
      %674 = vperm.xlu0 %673, %v644
      %v675 = vpop.permute.xlu0 %674
      %678 = vset.pattern.permute.xlu0 0
      %679 = vperm.xlu0 %678, %v645
      %v680 = vpop.permute.xlu0 %679
      %683 = vset.pattern.permute.xlu0 0
      %684 = vperm.xlu0 %683, %v646
      %v685 = vpop.permute.xlu0 %684
      %v687 = vmul.f32 %v637, %v650
      %v688 = vmul.f32 %v636, %v655
      %v689 = vmul.f32 %v635, %v660
      %v690 = vmul.f32 %v634, %v665
      %v691 = vmul.f32 %v633, %v670
      %v692 = vmul.f32 %v632, %v675
      %v693 = vmul.f32 %v631, %v680
      %v694 = vmul.f32 %v630, %v685
      %v695 = vpack.c.bf16 %v687, %v687
      %v696 = vpack.c.bf16 %v688, %v688
      %v697 = vpack.c.bf16 %v689, %v689
      %v698 = vpack.c.bf16 %v690, %v690
      %v699 = vpack.c.bf16 %v691, %v691
      %v700 = vpack.c.bf16 %v692, %v692
      %v701 = vpack.c.bf16 %v693, %v693
      %v702 = vpack.c.bf16 %v694, %v694
      %s703 = scalar_lea.vmem %s1, 192
      %v704 = vld [vmem:[%s703] sm:$0xff]
      %v705 = vld [vmem:[%s703 + $0x8] sm:$0xff]
      %v706 = vld [vmem:[%s703 + $0x10] sm:$0xff]
      %v707 = vld [vmem:[%s703 + $0x18] sm:$0xff]
      %v708 = vld [vmem:[%s703 + $0x20] sm:$0xff]
      %v709 = vld [vmem:[%s703 + $0x28] sm:$0xff]
      %v710 = vld [vmem:[%s703 + $0x30] sm:$0xff]
      %v711 = vld [vmem:[%s703 + $0x38] sm:$0xff]
      %713 = vset.pattern.permute.xlu0 0
      %714 = vperm.xlu0 %713, %v704
      %v715 = vpop.permute.xlu0 %714
      %718 = vset.pattern.permute.xlu0 0
      %719 = vperm.xlu0 %718, %v705
      %v720 = vpop.permute.xlu0 %719
      %723 = vset.pattern.permute.xlu0 0
      %724 = vperm.xlu0 %723, %v706
      %v725 = vpop.permute.xlu0 %724
      %728 = vset.pattern.permute.xlu0 0
      %729 = vperm.xlu0 %728, %v707
      %v730 = vpop.permute.xlu0 %729
      %733 = vset.pattern.permute.xlu0 0
      %734 = vperm.xlu0 %733, %v708
      %v735 = vpop.permute.xlu0 %734
      %738 = vset.pattern.permute.xlu0 0
      %739 = vperm.xlu0 %738, %v709
      %v740 = vpop.permute.xlu0 %739
      %743 = vset.pattern.permute.xlu0 0
      %744 = vperm.xlu0 %743, %v710
      %v745 = vpop.permute.xlu0 %744
      %748 = vset.pattern.permute.xlu0 0
      %749 = vperm.xlu0 %748, %v711
      %v750 = vpop.permute.xlu0 %749
      %v752 = vmul.f32 %v491, %v715
      %v753 = vmul.f32 %v490, %v720
      %v754 = vmul.f32 %v489, %v725
      %v755 = vmul.f32 %v488, %v730
      %v756 = vmul.f32 %v487, %v735
      %v757 = vmul.f32 %v486, %v740
      %v758 = vmul.f32 %v485, %v745
      %v759 = vmul.f32 %v484, %v750
      %v760 = vpack.c.bf16 %v752, %v752
      %v761 = vpack.c.bf16 %v753, %v753
      %v762 = vpack.c.bf16 %v754, %v754
      %v763 = vpack.c.bf16 %v755, %v755
      %v764 = vpack.c.bf16 %v756, %v756
      %v765 = vpack.c.bf16 %v757, %v757
      %v766 = vpack.c.bf16 %v758, %v758
      %v767 = vpack.c.bf16 %v759, %v759
      %s768 = scalar_lea.vmem %s1, 256
      %v769 = vld [vmem:[%s768] sm:$0xff]
      %v770 = vld [vmem:[%s768 + $0x8] sm:$0xff]
      %v771 = vld [vmem:[%s768 + $0x10] sm:$0xff]
      %v772 = vld [vmem:[%s768 + $0x18] sm:$0xff]
      %v773 = vld [vmem:[%s768 + $0x20] sm:$0xff]
      %v774 = vld [vmem:[%s768 + $0x28] sm:$0xff]
      %v775 = vld [vmem:[%s768 + $0x30] sm:$0xff]
      %v776 = vld [vmem:[%s768 + $0x38] sm:$0xff]
      %778 = vset.pattern.permute.xlu0 0
      %779 = vperm.xlu0 %778, %v769
      %v780 = vpop.permute.xlu0 %779
      %783 = vset.pattern.permute.xlu0 0
      %784 = vperm.xlu0 %783, %v770
      %v785 = vpop.permute.xlu0 %784
      %788 = vset.pattern.permute.xlu0 0
      %789 = vperm.xlu0 %788, %v771
      %v790 = vpop.permute.xlu0 %789
      %793 = vset.pattern.permute.xlu0 0
      %794 = vperm.xlu0 %793, %v772
      %v795 = vpop.permute.xlu0 %794
      %798 = vset.pattern.permute.xlu0 0
      %799 = vperm.xlu0 %798, %v773
      %v800 = vpop.permute.xlu0 %799
      %803 = vset.pattern.permute.xlu0 0
      %804 = vperm.xlu0 %803, %v774
      %v805 = vpop.permute.xlu0 %804
      %808 = vset.pattern.permute.xlu0 0
      %809 = vperm.xlu0 %808, %v775
      %v810 = vpop.permute.xlu0 %809
      %813 = vset.pattern.permute.xlu0 0
      %814 = vperm.xlu0 %813, %v776
      %v815 = vpop.permute.xlu0 %814
      %v817 = vmul.f32 %v320, %v780
      %v818 = vmul.f32 %v321, %v785
      %v819 = vmul.f32 %v322, %v790
      %v820 = vmul.f32 %v323, %v795
      %v821 = vmul.f32 %v324, %v800
      %v822 = vmul.f32 %v325, %v805
      %v823 = vmul.f32 %v326, %v810
      %v824 = vmul.f32 %v327, %v815
      %v825 = vpack.c.bf16 %v817, %v817
      %v826 = vpack.c.bf16 %v818, %v818
      %v827 = vpack.c.bf16 %v819, %v819
      %v828 = vpack.c.bf16 %v820, %v820
      %v829 = vpack.c.bf16 %v821, %v821
      %v830 = vpack.c.bf16 %v822, %v822
      %v831 = vpack.c.bf16 %v823, %v823
      %v832 = vpack.c.bf16 %v824, %v824
      %s833 = scalar_lea.vmem %s1, 320
      %v834 = vld [vmem:[%s833] sm:$0xff]
      %v835 = vld [vmem:[%s833 + $0x8] sm:$0xff]
      %v836 = vld [vmem:[%s833 + $0x10] sm:$0xff]
      %v837 = vld [vmem:[%s833 + $0x18] sm:$0xff]
      %v838 = vld [vmem:[%s833 + $0x20] sm:$0xff]
      %v839 = vld [vmem:[%s833 + $0x28] sm:$0xff]
      %v840 = vld [vmem:[%s833 + $0x30] sm:$0xff]
      %v841 = vld [vmem:[%s833 + $0x38] sm:$0xff]
      %843 = vset.pattern.permute.xlu0 0
      %844 = vperm.xlu0 %843, %v834
      %v845 = vpop.permute.xlu0 %844
      %848 = vset.pattern.permute.xlu0 0
      %849 = vperm.xlu0 %848, %v835
      %v850 = vpop.permute.xlu0 %849
      %853 = vset.pattern.permute.xlu0 0
      %854 = vperm.xlu0 %853, %v836
      %v855 = vpop.permute.xlu0 %854
      %858 = vset.pattern.permute.xlu0 0
      %859 = vperm.xlu0 %858, %v837
      %v860 = vpop.permute.xlu0 %859
      %863 = vset.pattern.permute.xlu0 0
      %864 = vperm.xlu0 %863, %v838
      %v865 = vpop.permute.xlu0 %864
      %868 = vset.pattern.permute.xlu0 0
      %869 = vperm.xlu0 %868, %v839
      %v870 = vpop.permute.xlu0 %869
      %873 = vset.pattern.permute.xlu0 0
      %874 = vperm.xlu0 %873, %v840
      %v875 = vpop.permute.xlu0 %874
      %878 = vset.pattern.permute.xlu0 0
      %879 = vperm.xlu0 %878, %v841
      %v880 = vpop.permute.xlu0 %879
      %v882 = vmul.f32 %v636, %v845
      %v883 = vmul.f32 %v635, %v850
      %v884 = vmul.f32 %v634, %v855
      %v885 = vmul.f32 %v633, %v860
      %v886 = vmul.f32 %v632, %v865
      %v887 = vmul.f32 %v631, %v870
      %v888 = vmul.f32 %v630, %v875
      %v889 = vmul.f32 %v637, %v880
      %v890 = vpack.c.bf16 %v882, %v882
      %v891 = vpack.c.bf16 %v883, %v883
      %v892 = vpack.c.bf16 %v884, %v884
      %v893 = vpack.c.bf16 %v885, %v885
      %v894 = vpack.c.bf16 %v886, %v886
      %v895 = vpack.c.bf16 %v887, %v887
      %v896 = vpack.c.bf16 %v888, %v888
      %v897 = vpack.c.bf16 %v889, %v889
      %s898 = scalar_lea.vmem %s1, 384
      %v899 = vld [vmem:[%s898] sm:$0xff]
      %v900 = vld [vmem:[%s898 + $0x8] sm:$0xff]
      %v901 = vld [vmem:[%s898 + $0x10] sm:$0xff]
      %v902 = vld [vmem:[%s898 + $0x18] sm:$0xff]
      %v903 = vld [vmem:[%s898 + $0x20] sm:$0xff]
      %v904 = vld [vmem:[%s898 + $0x28] sm:$0xff]
      %v905 = vld [vmem:[%s898 + $0x30] sm:$0xff]
      %v906 = vld [vmem:[%s898 + $0x38] sm:$0xff]
      %908 = vset.pattern.permute.xlu0 0
      %909 = vperm.xlu0 %908, %v899
      %v910 = vpop.permute.xlu0 %909
      %913 = vset.pattern.permute.xlu0 0
      %914 = vperm.xlu0 %913, %v900
      %v915 = vpop.permute.xlu0 %914
      %918 = vset.pattern.permute.xlu0 0
      %919 = vperm.xlu0 %918, %v901
      %v920 = vpop.permute.xlu0 %919
      %923 = vset.pattern.permute.xlu0 0
      %924 = vperm.xlu0 %923, %v902
      %v925 = vpop.permute.xlu0 %924
      %928 = vset.pattern.permute.xlu0 0
      %929 = vperm.xlu0 %928, %v903
      %v930 = vpop.permute.xlu0 %929
      %933 = vset.pattern.permute.xlu0 0
      %934 = vperm.xlu0 %933, %v904
      %v935 = vpop.permute.xlu0 %934
      %938 = vset.pattern.permute.xlu0 0
      %939 = vperm.xlu0 %938, %v905
      %v940 = vpop.permute.xlu0 %939
      %943 = vset.pattern.permute.xlu0 0
      %944 = vperm.xlu0 %943, %v906
      %v945 = vpop.permute.xlu0 %944
      %v947 = vmul.f32 %v490, %v910
      %v948 = vmul.f32 %v489, %v915
      %v949 = vmul.f32 %v488, %v920
      %v950 = vmul.f32 %v487, %v925
      %v951 = vmul.f32 %v486, %v930
      %v952 = vmul.f32 %v485, %v935
      %v953 = vmul.f32 %v484, %v940
      %v954 = vmul.f32 %v491, %v945
      %v955 = vpack.c.bf16 %v947, %v947
      %v956 = vpack.c.bf16 %v948, %v948
      %v957 = vpack.c.bf16 %v949, %v949
      %v958 = vpack.c.bf16 %v950, %v950
      %v959 = vpack.c.bf16 %v951, %v951
      %v960 = vpack.c.bf16 %v952, %v952
      %v961 = vpack.c.bf16 %v953, %v953
      %v962 = vpack.c.bf16 %v954, %v954
      %s963 = scalar_lea.vmem %s1, 448
      %v964 = vld [vmem:[%s963] sm:$0xff]
      %v965 = vld [vmem:[%s963 + $0x8] sm:$0xff]
      %v966 = vld [vmem:[%s963 + $0x10] sm:$0xff]
      %v967 = vld [vmem:[%s963 + $0x18] sm:$0xff]
      %v968 = vld [vmem:[%s963 + $0x20] sm:$0xff]
      %v969 = vld [vmem:[%s963 + $0x28] sm:$0xff]
      %v970 = vld [vmem:[%s963 + $0x30] sm:$0xff]
      %v971 = vld [vmem:[%s963 + $0x38] sm:$0xff]
      %973 = vset.pattern.permute.xlu0 0
      %974 = vperm.xlu0 %973, %v964
      %v975 = vpop.permute.xlu0 %974
      %978 = vset.pattern.permute.xlu0 0
      %979 = vperm.xlu0 %978, %v965
      %v980 = vpop.permute.xlu0 %979
      %983 = vset.pattern.permute.xlu0 0
      %984 = vperm.xlu0 %983, %v966
      %v985 = vpop.permute.xlu0 %984
      %988 = vset.pattern.permute.xlu0 0
      %989 = vperm.xlu0 %988, %v967
      %v990 = vpop.permute.xlu0 %989
      %993 = vset.pattern.permute.xlu0 0
      %994 = vperm.xlu0 %993, %v968
      %v995 = vpop.permute.xlu0 %994
      %998 = vset.pattern.permute.xlu0 0
      %999 = vperm.xlu0 %998, %v969
      %v1000 = vpop.permute.xlu0 %999
      %1003 = vset.pattern.permute.xlu0 0
      %1004 = vperm.xlu0 %1003, %v970
      %v1005 = vpop.permute.xlu0 %1004
      %1008 = vset.pattern.permute.xlu0 0
      %1009 = vperm.xlu0 %1008, %v971
      %v1010 = vpop.permute.xlu0 %1009
      %v1012 = vmul.f32 %v321, %v975
      %v1013 = vmul.f32 %v322, %v980
      %v1014 = vmul.f32 %v323, %v985
      %v1015 = vmul.f32 %v324, %v990
      %v1016 = vmul.f32 %v325, %v995
      %v1017 = vmul.f32 %v326, %v1000
      %v1018 = vmul.f32 %v327, %v1005
      %v1019 = vmul.f32 %v320, %v1010
      %v1020 = vpack.c.bf16 %v1012, %v1012
      %v1021 = vpack.c.bf16 %v1013, %v1013
      %v1022 = vpack.c.bf16 %v1014, %v1014
      %v1023 = vpack.c.bf16 %v1015, %v1015
      %v1024 = vpack.c.bf16 %v1016, %v1016
      %v1025 = vpack.c.bf16 %v1017, %v1017
      %v1026 = vpack.c.bf16 %v1018, %v1018
      %v1027 = vpack.c.bf16 %v1019, %v1019
      %s1028 = scalar_lea.vmem %s1, 512
      %v1029 = vld [vmem:[%s1028] sm:$0xff]
      %v1030 = vld [vmem:[%s1028 + $0x8] sm:$0xff]
      %v1031 = vld [vmem:[%s1028 + $0x10] sm:$0xff]
      %v1032 = vld [vmem:[%s1028 + $0x18] sm:$0xff]
      %v1033 = vld [vmem:[%s1028 + $0x20] sm:$0xff]
      %v1034 = vld [vmem:[%s1028 + $0x28] sm:$0xff]
      %v1035 = vld [vmem:[%s1028 + $0x30] sm:$0xff]
      %v1036 = vld [vmem:[%s1028 + $0x38] sm:$0xff]
      %1038 = vset.pattern.permute.xlu0 0
      %1039 = vperm.xlu0 %1038, %v1029
      %v1040 = vpop.permute.xlu0 %1039
      %1043 = vset.pattern.permute.xlu0 0
      %1044 = vperm.xlu0 %1043, %v1030
      %v1045 = vpop.permute.xlu0 %1044
      %1048 = vset.pattern.permute.xlu0 0
      %1049 = vperm.xlu0 %1048, %v1031
      %v1050 = vpop.permute.xlu0 %1049
      %1053 = vset.pattern.permute.xlu0 0
      %1054 = vperm.xlu0 %1053, %v1032
      %v1055 = vpop.permute.xlu0 %1054
      %1058 = vset.pattern.permute.xlu0 0
      %1059 = vperm.xlu0 %1058, %v1033
      %v1060 = vpop.permute.xlu0 %1059
      %1063 = vset.pattern.permute.xlu0 0
      %1064 = vperm.xlu0 %1063, %v1034
      %v1065 = vpop.permute.xlu0 %1064
      %1068 = vset.pattern.permute.xlu0 0
      %1069 = vperm.xlu0 %1068, %v1035
      %v1070 = vpop.permute.xlu0 %1069
      %1073 = vset.pattern.permute.xlu0 0
      %1074 = vperm.xlu0 %1073, %v1036
      %v1075 = vpop.permute.xlu0 %1074
      %v1077 = vmul.f32 %v635, %v1040
      %v1078 = vmul.f32 %v634, %v1045
      %v1079 = vmul.f32 %v633, %v1050
      %v1080 = vmul.f32 %v632, %v1055
      %v1081 = vmul.f32 %v631, %v1060
      %v1082 = vmul.f32 %v630, %v1065
      %v1083 = vmul.f32 %v637, %v1070
      %v1084 = vmul.f32 %v636, %v1075
      %v1085 = vpack.c.bf16 %v1077, %v1077
      %v1086 = vpack.c.bf16 %v1078, %v1078
      %v1087 = vpack.c.bf16 %v1079, %v1079
      %v1088 = vpack.c.bf16 %v1080, %v1080
      %v1089 = vpack.c.bf16 %v1081, %v1081
      %v1090 = vpack.c.bf16 %v1082, %v1082
      %v1091 = vpack.c.bf16 %v1083, %v1083
      %v1092 = vpack.c.bf16 %v1084, %v1084
      %v1101 = vunpack.c.l.b16 %v548
      %v1102 = vunpack.c.l.b16 %v549
      %v1103 = vunpack.c.l.b16 %v550
      %v1104 = vunpack.c.l.b16 %v551
      %v1105 = vunpack.c.l.b16 %v552
      %v1106 = vunpack.c.l.b16 %v553
      %v1107 = vunpack.c.l.b16 %v554
      %v1108 = vunpack.c.l.b16 %v555
      %v1109 = vpack.c.b16 %v1102, %v1101
      %v1110 = vpack.c.b16 %v1104, %v1103
      %v1111 = vpack.c.b16 %v1106, %v1105
      %v1112 = vpack.c.b16 %v1108, %v1107
      %v1125 = vunpack.c.l.b16 %v613
      %v1126 = vunpack.c.l.b16 %v614
      %v1127 = vunpack.c.l.b16 %v615
      %v1128 = vunpack.c.l.b16 %v616
      %v1129 = vunpack.c.l.b16 %v617
      %v1130 = vunpack.c.l.b16 %v618
      %v1131 = vunpack.c.l.b16 %v619
      %v1132 = vunpack.c.l.b16 %v620
      %v1133 = vpack.c.b16 %v1126, %v1125
      %v1134 = vpack.c.b16 %v1128, %v1127
      %v1135 = vpack.c.b16 %v1130, %v1129
      %v1136 = vpack.c.b16 %v1132, %v1131
      %v1149 = vunpack.c.l.b16 %v695
      %v1150 = vunpack.c.l.b16 %v696
      %v1151 = vunpack.c.l.b16 %v697
      %v1152 = vunpack.c.l.b16 %v698
      %v1153 = vunpack.c.l.b16 %v699
      %v1154 = vunpack.c.l.b16 %v700
      %v1155 = vunpack.c.l.b16 %v701
      %v1156 = vunpack.c.l.b16 %v702
      %v1157 = vpack.c.b16 %v1150, %v1149
      %v1158 = vpack.c.b16 %v1152, %v1151
      %v1159 = vpack.c.b16 %v1154, %v1153
      %v1160 = vpack.c.b16 %v1156, %v1155
      %v1173 = vunpack.c.l.b16 %v760
      %v1174 = vunpack.c.l.b16 %v761
      %v1175 = vunpack.c.l.b16 %v762
      %v1176 = vunpack.c.l.b16 %v763
      %v1177 = vunpack.c.l.b16 %v764
      %v1178 = vunpack.c.l.b16 %v765
      %v1179 = vunpack.c.l.b16 %v766
      %v1180 = vunpack.c.l.b16 %v767
      %v1181 = vpack.c.b16 %v1174, %v1173
      %v1182 = vpack.c.b16 %v1176, %v1175
      %v1183 = vpack.c.b16 %v1178, %v1177
      %v1184 = vpack.c.b16 %v1180, %v1179
      %v1197 = vunpack.c.l.b16 %v825
      %v1198 = vunpack.c.l.b16 %v826
      %v1199 = vunpack.c.l.b16 %v827
      %v1200 = vunpack.c.l.b16 %v828
      %v1201 = vunpack.c.l.b16 %v829
      %v1202 = vunpack.c.l.b16 %v830
      %v1203 = vunpack.c.l.b16 %v831
      %v1204 = vunpack.c.l.b16 %v832
      %v1205 = vpack.c.b16 %v1198, %v1197
      %v1206 = vpack.c.b16 %v1200, %v1199
      %v1207 = vpack.c.b16 %v1202, %v1201
      %v1208 = vpack.c.b16 %v1204, %v1203
      %v1221 = vunpack.c.l.b16 %v890
      %v1222 = vunpack.c.l.b16 %v891
      %v1223 = vunpack.c.l.b16 %v892
      %v1224 = vunpack.c.l.b16 %v893
      %v1225 = vunpack.c.l.b16 %v894
      %v1226 = vunpack.c.l.b16 %v895
      %v1227 = vunpack.c.l.b16 %v896
      %v1228 = vunpack.c.l.b16 %v897
      %v1229 = vpack.c.b16 %v1222, %v1221
      %v1230 = vpack.c.b16 %v1224, %v1223
      %v1231 = vpack.c.b16 %v1226, %v1225
      %v1232 = vpack.c.b16 %v1228, %v1227
      %v1245 = vunpack.c.l.b16 %v955
      %v1246 = vunpack.c.l.b16 %v956
      %v1247 = vunpack.c.l.b16 %v957
      %v1248 = vunpack.c.l.b16 %v958
      %v1249 = vunpack.c.l.b16 %v959
      %v1250 = vunpack.c.l.b16 %v960
      %v1251 = vunpack.c.l.b16 %v961
      %v1252 = vunpack.c.l.b16 %v962
      %v1253 = vpack.c.b16 %v1246, %v1245
      %v1254 = vpack.c.b16 %v1248, %v1247
      %v1255 = vpack.c.b16 %v1250, %v1249
      %v1256 = vpack.c.b16 %v1252, %v1251
      %v1269 = vunpack.c.l.b16 %v1020
      %v1270 = vunpack.c.l.b16 %v1021
      %v1271 = vunpack.c.l.b16 %v1022
      %v1272 = vunpack.c.l.b16 %v1023
      %v1273 = vunpack.c.l.b16 %v1024
      %v1274 = vunpack.c.l.b16 %v1025
      %v1275 = vunpack.c.l.b16 %v1026
      %v1276 = vunpack.c.l.b16 %v1027
      %v1277 = vpack.c.b16 %v1270, %v1269
      %v1278 = vpack.c.b16 %v1272, %v1271
      %v1279 = vpack.c.b16 %v1274, %v1273
      %v1280 = vpack.c.b16 %v1276, %v1275
      %v1293 = vunpack.c.l.b16 %v1085
      %v1294 = vunpack.c.l.b16 %v1086
      %v1295 = vunpack.c.l.b16 %v1087
      %v1296 = vunpack.c.l.b16 %v1088
      %v1297 = vunpack.c.l.b16 %v1089
      %v1298 = vunpack.c.l.b16 %v1090
      %v1299 = vunpack.c.l.b16 %v1091
      %v1300 = vunpack.c.l.b16 %v1092
      %v1301 = vpack.c.b16 %v1294, %v1293
      %v1302 = vpack.c.b16 %v1296, %v1295
      %v1303 = vpack.c.b16 %v1298, %v1297
      %v1304 = vpack.c.b16 %v1300, %v1299
      %v1310 = vperm.slane %v472, 0
      %v1456 = vunpack.c.l.b16 %v328
      %v1457 = vunpack.c.l.b16 %v329
      %v1458 = vunpack.c.l.b16 %v330
      %v1459 = vunpack.c.l.b16 %v331
      %v1460 = vunpack.c.l.b16 %v332
      %v1461 = vunpack.c.l.b16 %v333
      %v1462 = vunpack.c.l.b16 %v334
      %v1463 = vunpack.c.l.b16 %v335
      %v1464 = vunpack.c.l.b16 %v336
      %v1465 = vunpack.c.l.b16 %v337
      %v1466 = vunpack.c.l.b16 %v338
      %v1467 = vunpack.c.l.b16 %v339
      %v1468 = vunpack.c.l.b16 %v340
      %v1469 = vunpack.c.l.b16 %v341
      %v1470 = vunpack.c.l.b16 %v342
      %v1471 = vunpack.c.l.b16 %v343
      %v1472 = vunpack.c.l.b16 %v344
      %v1473 = vunpack.c.l.b16 %v345
      %v1474 = vunpack.c.l.b16 %v346
      %v1475 = vunpack.c.l.b16 %v347
      %v1476 = vunpack.c.l.b16 %v348
      %v1477 = vunpack.c.l.b16 %v349
      %v1478 = vunpack.c.l.b16 %v350
      %v1479 = vunpack.c.l.b16 %v351
      %v1480 = vunpack.c.l.b16 %v352
      %v1481 = vunpack.c.l.b16 %v353
      %v1482 = vunpack.c.l.b16 %v354
      %v1483 = vunpack.c.l.b16 %v355
      %v1484 = vunpack.c.l.b16 %v356
      %v1485 = vunpack.c.l.b16 %v357
      %v1486 = vunpack.c.l.b16 %v358
      %v1487 = vunpack.c.l.b16 %v359
      %v1488 = vunpack.c.l.b16 %v360
      %v1489 = vunpack.c.l.b16 %v361
      %v1490 = vunpack.c.l.b16 %v362
      %v1491 = vunpack.c.l.b16 %v363
      %v1492 = vunpack.c.l.b16 %v364
      %v1493 = vunpack.c.l.b16 %v365
      %v1494 = vunpack.c.l.b16 %v366
      %v1495 = vunpack.c.l.b16 %v367
      %v1496 = vunpack.c.l.b16 %v368
      %v1497 = vunpack.c.l.b16 %v369
      %v1498 = vunpack.c.l.b16 %v370
      %v1499 = vunpack.c.l.b16 %v371
      %v1500 = vunpack.c.l.b16 %v372
      %v1501 = vunpack.c.l.b16 %v373
      %v1502 = vunpack.c.l.b16 %v374
      %v1503 = vunpack.c.l.b16 %v375
      %v1504 = vunpack.c.l.b16 %v376
      %v1505 = vunpack.c.l.b16 %v377
      %v1506 = vunpack.c.l.b16 %v378
      %v1507 = vunpack.c.l.b16 %v379
      %v1508 = vunpack.c.l.b16 %v380
      %v1509 = vunpack.c.l.b16 %v381
      %v1510 = vunpack.c.l.b16 %v382
      %v1511 = vunpack.c.l.b16 %v383
      %v1512 = vunpack.c.l.b16 %v384
      %v1513 = vunpack.c.l.b16 %v385
      %v1514 = vunpack.c.l.b16 %v386
      %v1515 = vunpack.c.l.b16 %v387
      %v1516 = vunpack.c.l.b16 %v388
      %v1517 = vunpack.c.l.b16 %v389
      %v1518 = vunpack.c.l.b16 %v390
      %v1519 = vunpack.c.l.b16 %v391
      %v1520 = vunpack.c.l.b16 %v392
      %v1521 = vunpack.c.l.b16 %v393
      %v1522 = vunpack.c.l.b16 %v394
      %v1523 = vunpack.c.l.b16 %v395
      %v1524 = vunpack.c.l.b16 %v396
      %v1525 = vunpack.c.l.b16 %v397
      %v1526 = vunpack.c.l.b16 %v398
      %v1527 = vunpack.c.l.b16 %v399
      %v1528 = vunpack.c.l.b16 %v400
      %v1529 = vunpack.c.l.b16 %v401
      %v1530 = vunpack.c.l.b16 %v402
      %v1531 = vunpack.c.l.b16 %v403
      %v1532 = vunpack.c.l.b16 %v404
      %v1533 = vunpack.c.l.b16 %v405
      %v1534 = vunpack.c.l.b16 %v406
      %v1535 = vunpack.c.l.b16 %v407
      %v1536 = vunpack.c.l.b16 %v408
      %v1537 = vunpack.c.l.b16 %v409
      %v1538 = vunpack.c.l.b16 %v410
      %v1539 = vunpack.c.l.b16 %v411
      %v1540 = vunpack.c.l.b16 %v412
      %v1541 = vunpack.c.l.b16 %v413
      %v1542 = vunpack.c.l.b16 %v414
      %v1543 = vunpack.c.l.b16 %v415
      %v1544 = vunpack.c.l.b16 %v416
      %v1545 = vunpack.c.l.b16 %v417
      %v1546 = vunpack.c.l.b16 %v418
      %v1547 = vunpack.c.l.b16 %v419
      %v1548 = vunpack.c.l.b16 %v420
      %v1549 = vunpack.c.l.b16 %v421
      %v1550 = vunpack.c.l.b16 %v422
      %v1551 = vunpack.c.l.b16 %v423
      %v1552 = vunpack.c.l.b16 %v424
      %v1553 = vunpack.c.l.b16 %v425
      %v1554 = vunpack.c.l.b16 %v426
      %v1555 = vunpack.c.l.b16 %v427
      %v1556 = vunpack.c.l.b16 %v428
      %v1557 = vunpack.c.l.b16 %v429
      %v1558 = vunpack.c.l.b16 %v430
      %v1559 = vunpack.c.l.b16 %v431
      %v1560 = vunpack.c.l.b16 %v432
      %v1561 = vunpack.c.l.b16 %v433
      %v1562 = vunpack.c.l.b16 %v434
      %v1563 = vunpack.c.l.b16 %v435
      %v1564 = vunpack.c.l.b16 %v436
      %v1565 = vunpack.c.l.b16 %v437
      %v1566 = vunpack.c.l.b16 %v438
      %v1567 = vunpack.c.l.b16 %v439
      %v1568 = vunpack.c.l.b16 %v440
      %v1569 = vunpack.c.l.b16 %v441
      %v1570 = vunpack.c.l.b16 %v442
      %v1571 = vunpack.c.l.b16 %v443
      %v1572 = vunpack.c.l.b16 %v444
      %v1573 = vunpack.c.l.b16 %v445
      %v1574 = vunpack.c.l.b16 %v446
      %v1575 = vunpack.c.l.b16 %v447
      %v1576 = vunpack.c.l.b16 %v448
      %v1577 = vunpack.c.l.b16 %v449
      %v1578 = vunpack.c.l.b16 %v450
      %v1579 = vunpack.c.l.b16 %v451
      %v1580 = vunpack.c.l.b16 %v452
      %v1581 = vunpack.c.l.b16 %v453
      %v1582 = vunpack.c.l.b16 %v454
      %v1583 = vunpack.c.l.b16 %v455
      %v1584 = vunpack.c.l.b16 %v456
      %v1585 = vunpack.c.l.b16 %v457
      %v1586 = vunpack.c.l.b16 %v458
      %v1587 = vunpack.c.l.b16 %v459
      %v1588 = vunpack.c.l.b16 %v460
      %v1589 = vunpack.c.l.b16 %v461
      %v1590 = vunpack.c.l.b16 %v462
      %v1591 = vunpack.c.l.b16 %v463
      %v1592 = vunpack.c.l.b16 %v464
      %v1593 = vunpack.c.l.b16 %v465
      %v1594 = vunpack.c.l.b16 %v466
      %v1595 = vunpack.c.l.b16 %v467
      %v1596 = vunpack.c.l.b16 %v468
      %v1597 = vunpack.c.l.b16 %v469
      %v1598 = vunpack.c.l.b16 %v470
      %v1599 = vunpack.c.l.b16 %v471
      %v1600 = vpack.c.b16 %v1457, %v1456
      %v1601 = vpack.c.b16 %v1459, %v1458
      %v1602 = vpack.c.b16 %v1461, %v1460
      %v1603 = vpack.c.b16 %v1463, %v1462
      %v1604 = vpack.c.b16 %v1465, %v1464
      %v1605 = vpack.c.b16 %v1467, %v1466
      %v1606 = vpack.c.b16 %v1469, %v1468
      %v1607 = vpack.c.b16 %v1471, %v1470
      %v1608 = vpack.c.b16 %v1473, %v1472
      %v1609 = vpack.c.b16 %v1475, %v1474
      %v1610 = vpack.c.b16 %v1477, %v1476
      %v1611 = vpack.c.b16 %v1479, %v1478
      %v1612 = vpack.c.b16 %v1481, %v1480
      %v1613 = vpack.c.b16 %v1483, %v1482
      %v1614 = vpack.c.b16 %v1485, %v1484
      %v1615 = vpack.c.b16 %v1487, %v1486
      %v1616 = vpack.c.b16 %v1489, %v1488
      %v1617 = vpack.c.b16 %v1491, %v1490
      %v1618 = vpack.c.b16 %v1493, %v1492
      %v1619 = vpack.c.b16 %v1495, %v1494
      %v1620 = vpack.c.b16 %v1497, %v1496
      %v1621 = vpack.c.b16 %v1499, %v1498
      %v1622 = vpack.c.b16 %v1501, %v1500
      %v1623 = vpack.c.b16 %v1503, %v1502
      %v1624 = vpack.c.b16 %v1505, %v1504
      %v1625 = vpack.c.b16 %v1507, %v1506
      %v1626 = vpack.c.b16 %v1509, %v1508
      %v1627 = vpack.c.b16 %v1511, %v1510
      %v1628 = vpack.c.b16 %v1513, %v1512
      %v1629 = vpack.c.b16 %v1515, %v1514
      %v1630 = vpack.c.b16 %v1517, %v1516
      %v1631 = vpack.c.b16 %v1519, %v1518
      %v1632 = vpack.c.b16 %v1521, %v1520
      %v1633 = vpack.c.b16 %v1523, %v1522
      %v1634 = vpack.c.b16 %v1525, %v1524
      %v1635 = vpack.c.b16 %v1527, %v1526
      %v1636 = vpack.c.b16 %v1529, %v1528
      %v1637 = vpack.c.b16 %v1531, %v1530
      %v1638 = vpack.c.b16 %v1533, %v1532
      %v1639 = vpack.c.b16 %v1535, %v1534
      %v1640 = vpack.c.b16 %v1537, %v1536
      %v1641 = vpack.c.b16 %v1539, %v1538
      %v1642 = vpack.c.b16 %v1541, %v1540
      %v1643 = vpack.c.b16 %v1543, %v1542
      %v1644 = vpack.c.b16 %v1545, %v1544
      %v1645 = vpack.c.b16 %v1547, %v1546
      %v1646 = vpack.c.b16 %v1549, %v1548
      %v1647 = vpack.c.b16 %v1551, %v1550
      %v1648 = vpack.c.b16 %v1553, %v1552
      %v1649 = vpack.c.b16 %v1555, %v1554
      %v1650 = vpack.c.b16 %v1557, %v1556
      %v1651 = vpack.c.b16 %v1559, %v1558
      %v1652 = vpack.c.b16 %v1561, %v1560
      %v1653 = vpack.c.b16 %v1563, %v1562
      %v1654 = vpack.c.b16 %v1565, %v1564
      %v1655 = vpack.c.b16 %v1567, %v1566
      %v1656 = vpack.c.b16 %v1569, %v1568
      %v1657 = vpack.c.b16 %v1571, %v1570
      %v1658 = vpack.c.b16 %v1573, %v1572
      %v1659 = vpack.c.b16 %v1575, %v1574
      %v1660 = vpack.c.b16 %v1577, %v1576
      %v1661 = vpack.c.b16 %v1579, %v1578
      %v1662 = vpack.c.b16 %v1581, %v1580
      %v1663 = vpack.c.b16 %v1583, %v1582
      %v1664 = vpack.c.b16 %v1585, %v1584
      %v1665 = vpack.c.b16 %v1587, %v1586
      %v1666 = vpack.c.b16 %v1589, %v1588
      %v1667 = vpack.c.b16 %v1591, %v1590
      %v1668 = vpack.c.b16 %v1593, %v1592
      %v1669 = vpack.c.b16 %v1595, %v1594
      %v1670 = vpack.c.b16 %v1597, %v1596
      %v1671 = vpack.c.b16 %v1599, %v1598
      %1744 = vmatpush.bf16.msra.mxu0 %v1607
      %1745 = vmatpush.bf16.msra.mxu0 %v1606
      %1746 = vmatpush.bf16.msra.mxu0 %v1605
      %1747 = vmatpush.bf16.msra.mxu0 %v1604
      %1748 = vmatpush.bf16.msra.mxu0 %v1603
      %1749 = vmatpush.bf16.msra.mxu0 %v1602
      %1750 = vmatpush.bf16.msra.mxu0 %v1601
      %1751 = vmatpush.bf16.msra.mxu0 %v1600
      %1752 = vmatmul.bf16.gmra.mxu0 %v1109
      %v1753 = vpop.f32.mrf.mxu0
      %v1754 = vadd.f32 %v1310, %v1753
      %v1755 = vpop.f32.mrf.mxu0
      %v1756 = vadd.f32 %v1310, %v1755
      %1757 = vmatmul.bf16.gmra.mxu0 %v1110
      %v1758 = vpop.f32.mrf.mxu0
      %v1759 = vadd.f32 %v1310, %v1758
      %v1760 = vpop.f32.mrf.mxu0
      %v1761 = vadd.f32 %v1310, %v1760
      %1762 = vmatmul.bf16.gmra.mxu0 %v1111
      %v1763 = vpop.f32.mrf.mxu0
      %v1764 = vadd.f32 %v1310, %v1763
      %v1765 = vpop.f32.mrf.mxu0
      %v1766 = vadd.f32 %v1310, %v1765
      %1767 = vmatmul.bf16.gmra.mxu0 %v1112
      %v1768 = vpop.f32.mrf.mxu0
      %v1769 = vadd.f32 %v1310, %v1768
      %v1770 = vpop.f32.mrf.mxu0
      %v1771 = vadd.f32 %v1310, %v1770
      %1772 = vdwg.mxu0
      %1773 = vmatpush.bf16.msra.mxu0 %v1615
      %1774 = vmatpush.bf16.msra.mxu0 %v1614
      %1775 = vmatpush.bf16.msra.mxu0 %v1613
      %1776 = vmatpush.bf16.msra.mxu0 %v1612
      %1777 = vmatpush.bf16.msra.mxu0 %v1611
      %1778 = vmatpush.bf16.msra.mxu0 %v1610
      %1779 = vmatpush.bf16.msra.mxu0 %v1609
      %1780 = vmatpush.bf16.msra.mxu0 %v1608
      %1781 = vmatmul.bf16.gmra.mxu0 %v1133
      %v1782 = vpop.f32.mrf.mxu0
      %v1783 = vadd.f32 %v1754, %v1782
      %v1784 = vpop.f32.mrf.mxu0
      %v1785 = vadd.f32 %v1756, %v1784
      %1786 = vmatmul.bf16.gmra.mxu0 %v1134
      %v1787 = vpop.f32.mrf.mxu0
      %v1788 = vadd.f32 %v1759, %v1787
      %v1789 = vpop.f32.mrf.mxu0
      %v1790 = vadd.f32 %v1761, %v1789
      %1791 = vmatmul.bf16.gmra.mxu0 %v1135
      %v1792 = vpop.f32.mrf.mxu0
      %v1793 = vadd.f32 %v1764, %v1792
      %v1794 = vpop.f32.mrf.mxu0
      %v1795 = vadd.f32 %v1766, %v1794
      %1796 = vmatmul.bf16.gmra.mxu0 %v1136
      %v1797 = vpop.f32.mrf.mxu0
      %v1798 = vadd.f32 %v1769, %v1797
      %v1799 = vpop.f32.mrf.mxu0
      %v1800 = vadd.f32 %v1771, %v1799
      %1801 = vdwg.mxu0
      %1802 = vmatpush.bf16.msra.mxu0 %v1623
      %1803 = vmatpush.bf16.msra.mxu0 %v1622
      %1804 = vmatpush.bf16.msra.mxu0 %v1621
      %1805 = vmatpush.bf16.msra.mxu0 %v1620
      %1806 = vmatpush.bf16.msra.mxu0 %v1619
      %1807 = vmatpush.bf16.msra.mxu0 %v1618
      %1808 = vmatpush.bf16.msra.mxu0 %v1617
      %1809 = vmatpush.bf16.msra.mxu0 %v1616
      %1810 = vmatmul.bf16.gmra.mxu0 %v1157
      %v1811 = vpop.f32.mrf.mxu0
      %v1812 = vadd.f32 %v1783, %v1811
      %v1813 = vpop.f32.mrf.mxu0
      %v1814 = vadd.f32 %v1785, %v1813
      %1815 = vmatmul.bf16.gmra.mxu0 %v1158
      %v1816 = vpop.f32.mrf.mxu0
      %v1817 = vadd.f32 %v1788, %v1816
      %v1818 = vpop.f32.mrf.mxu0
      %v1819 = vadd.f32 %v1790, %v1818
      %1820 = vmatmul.bf16.gmra.mxu0 %v1159
      %v1821 = vpop.f32.mrf.mxu0
      %v1822 = vadd.f32 %v1793, %v1821
      %v1823 = vpop.f32.mrf.mxu0
      %v1824 = vadd.f32 %v1795, %v1823
      %1825 = vmatmul.bf16.gmra.mxu0 %v1160
      %v1826 = vpop.f32.mrf.mxu0
      %v1827 = vadd.f32 %v1798, %v1826
      %v1828 = vpop.f32.mrf.mxu0
      %v1829 = vadd.f32 %v1800, %v1828
      %1830 = vdwg.mxu0
      %1831 = vmatpush.bf16.msra.mxu0 %v1631
      %1832 = vmatpush.bf16.msra.mxu0 %v1630
      %1833 = vmatpush.bf16.msra.mxu0 %v1629
      %1834 = vmatpush.bf16.msra.mxu0 %v1628
      %1835 = vmatpush.bf16.msra.mxu0 %v1627
      %1836 = vmatpush.bf16.msra.mxu0 %v1626
      %1837 = vmatpush.bf16.msra.mxu0 %v1625
      %1838 = vmatpush.bf16.msra.mxu0 %v1624
      %1839 = vmatmul.bf16.gmra.mxu0 %v1181
      %v1840 = vpop.f32.mrf.mxu0
      %v1841 = vadd.f32 %v1812, %v1840
      %v1842 = vpop.f32.mrf.mxu0
      %v1843 = vadd.f32 %v1814, %v1842
      %1844 = vmatmul.bf16.gmra.mxu0 %v1182
      %v1845 = vpop.f32.mrf.mxu0
      %v1846 = vadd.f32 %v1817, %v1845
      %v1847 = vpop.f32.mrf.mxu0
      %v1848 = vadd.f32 %v1819, %v1847
      %1849 = vmatmul.bf16.gmra.mxu0 %v1183
      %v1850 = vpop.f32.mrf.mxu0
      %v1851 = vadd.f32 %v1822, %v1850
      %v1852 = vpop.f32.mrf.mxu0
      %v1853 = vadd.f32 %v1824, %v1852
      %1854 = vmatmul.bf16.gmra.mxu0 %v1184
      %v1855 = vpop.f32.mrf.mxu0
      %v1856 = vadd.f32 %v1827, %v1855
      %v1857 = vpop.f32.mrf.mxu0
      %v1858 = vadd.f32 %v1829, %v1857
      %1859 = vdwg.mxu0
      %1860 = vmatpush.bf16.msra.mxu0 %v1639
      %1861 = vmatpush.bf16.msra.mxu0 %v1638
      %1862 = vmatpush.bf16.msra.mxu0 %v1637
      %1863 = vmatpush.bf16.msra.mxu0 %v1636
      %1864 = vmatpush.bf16.msra.mxu0 %v1635
      %1865 = vmatpush.bf16.msra.mxu0 %v1634
      %1866 = vmatpush.bf16.msra.mxu0 %v1633
      %1867 = vmatpush.bf16.msra.mxu0 %v1632
      %1868 = vmatmul.bf16.gmra.mxu0 %v1205
      %v1869 = vpop.f32.mrf.mxu0
      %v1870 = vadd.f32 %v1841, %v1869
      %v1871 = vpop.f32.mrf.mxu0
      %v1872 = vadd.f32 %v1843, %v1871
      %1873 = vmatmul.bf16.gmra.mxu0 %v1206
      %v1874 = vpop.f32.mrf.mxu0
      %v1875 = vadd.f32 %v1846, %v1874
      %v1876 = vpop.f32.mrf.mxu0
      %v1877 = vadd.f32 %v1848, %v1876
      %1878 = vmatmul.bf16.gmra.mxu0 %v1207
      %v1879 = vpop.f32.mrf.mxu0
      %v1880 = vadd.f32 %v1851, %v1879
      %v1881 = vpop.f32.mrf.mxu0
      %v1882 = vadd.f32 %v1853, %v1881
      %1883 = vmatmul.bf16.gmra.mxu0 %v1208
      %v1884 = vpop.f32.mrf.mxu0
      %v1885 = vadd.f32 %v1856, %v1884
      %v1886 = vpop.f32.mrf.mxu0
      %v1887 = vadd.f32 %v1858, %v1886
      %1888 = vdwg.mxu0
      %1889 = vmatpush.bf16.msra.mxu0 %v1647
      %1890 = vmatpush.bf16.msra.mxu0 %v1646
      %1891 = vmatpush.bf16.msra.mxu0 %v1645
      %1892 = vmatpush.bf16.msra.mxu0 %v1644
      %1893 = vmatpush.bf16.msra.mxu0 %v1643
      %1894 = vmatpush.bf16.msra.mxu0 %v1642
      %1895 = vmatpush.bf16.msra.mxu0 %v1641
      %1896 = vmatpush.bf16.msra.mxu0 %v1640
      %1897 = vmatmul.bf16.gmra.mxu0 %v1229
      %v1898 = vpop.f32.mrf.mxu0
      %v1899 = vadd.f32 %v1870, %v1898
      %v1900 = vpop.f32.mrf.mxu0
      %v1901 = vadd.f32 %v1872, %v1900
      %1902 = vmatmul.bf16.gmra.mxu0 %v1230
      %v1903 = vpop.f32.mrf.mxu0
      %v1904 = vadd.f32 %v1875, %v1903
      %v1905 = vpop.f32.mrf.mxu0
      %v1906 = vadd.f32 %v1877, %v1905
      %1907 = vmatmul.bf16.gmra.mxu0 %v1231
      %v1908 = vpop.f32.mrf.mxu0
      %v1909 = vadd.f32 %v1880, %v1908
      %v1910 = vpop.f32.mrf.mxu0
      %v1911 = vadd.f32 %v1882, %v1910
      %1912 = vmatmul.bf16.gmra.mxu0 %v1232
      %v1913 = vpop.f32.mrf.mxu0
      %v1914 = vadd.f32 %v1885, %v1913
      %v1915 = vpop.f32.mrf.mxu0
      %v1916 = vadd.f32 %v1887, %v1915
      %1917 = vdwg.mxu0
      %1918 = vmatpush.bf16.msra.mxu0 %v1655
      %1919 = vmatpush.bf16.msra.mxu0 %v1654
      %1920 = vmatpush.bf16.msra.mxu0 %v1653
      %1921 = vmatpush.bf16.msra.mxu0 %v1652
      %1922 = vmatpush.bf16.msra.mxu0 %v1651
      %1923 = vmatpush.bf16.msra.mxu0 %v1650
      %1924 = vmatpush.bf16.msra.mxu0 %v1649
      %1925 = vmatpush.bf16.msra.mxu0 %v1648
      %1926 = vmatmul.bf16.gmra.mxu0 %v1253
      %v1927 = vpop.f32.mrf.mxu0
      %v1928 = vadd.f32 %v1899, %v1927
      %v1929 = vpop.f32.mrf.mxu0
      %v1930 = vadd.f32 %v1901, %v1929
      %1931 = vmatmul.bf16.gmra.mxu0 %v1254
      %v1932 = vpop.f32.mrf.mxu0
      %v1933 = vadd.f32 %v1904, %v1932
      %v1934 = vpop.f32.mrf.mxu0
      %v1935 = vadd.f32 %v1906, %v1934
      %1936 = vmatmul.bf16.gmra.mxu0 %v1255
      %v1937 = vpop.f32.mrf.mxu0
      %v1938 = vadd.f32 %v1909, %v1937
      %v1939 = vpop.f32.mrf.mxu0
      %v1940 = vadd.f32 %v1911, %v1939
      %1941 = vmatmul.bf16.gmra.mxu0 %v1256
      %v1942 = vpop.f32.mrf.mxu0
      %v1943 = vadd.f32 %v1914, %v1942
      %v1944 = vpop.f32.mrf.mxu0
      %v1945 = vadd.f32 %v1916, %v1944
      %1946 = vdwg.mxu0
      %1947 = vmatpush.bf16.msra.mxu0 %v1663
      %1948 = vmatpush.bf16.msra.mxu0 %v1662
      %1949 = vmatpush.bf16.msra.mxu0 %v1661
      %1950 = vmatpush.bf16.msra.mxu0 %v1660
      %1951 = vmatpush.bf16.msra.mxu0 %v1659
      %1952 = vmatpush.bf16.msra.mxu0 %v1658
      %1953 = vmatpush.bf16.msra.mxu0 %v1657
      %1954 = vmatpush.bf16.msra.mxu0 %v1656
      %1955 = vmatmul.bf16.gmra.mxu0 %v1277
      %v1956 = vpop.f32.mrf.mxu0
      %v1957 = vadd.f32 %v1928, %v1956
      %v1958 = vpop.f32.mrf.mxu0
      %v1959 = vadd.f32 %v1930, %v1958
      %1960 = vmatmul.bf16.gmra.mxu0 %v1278
      %v1961 = vpop.f32.mrf.mxu0
      %v1962 = vadd.f32 %v1933, %v1961
      %v1963 = vpop.f32.mrf.mxu0
      %v1964 = vadd.f32 %v1935, %v1963
      %1965 = vmatmul.bf16.gmra.mxu0 %v1279
      %v1966 = vpop.f32.mrf.mxu0
      %v1967 = vadd.f32 %v1938, %v1966
      %v1968 = vpop.f32.mrf.mxu0
      %v1969 = vadd.f32 %v1940, %v1968
      %1970 = vmatmul.bf16.gmra.mxu0 %v1280
      %v1971 = vpop.f32.mrf.mxu0
      %v1972 = vadd.f32 %v1943, %v1971
      %v1973 = vpop.f32.mrf.mxu0
      %v1974 = vadd.f32 %v1945, %v1973
      %1975 = vdwg.mxu0
      %1976 = vmatpush.bf16.msra.mxu0 %v1671
      %1977 = vmatpush.bf16.msra.mxu0 %v1670
      %1978 = vmatpush.bf16.msra.mxu0 %v1669
      %1979 = vmatpush.bf16.msra.mxu0 %v1668
      %1980 = vmatpush.bf16.msra.mxu0 %v1667
      %1981 = vmatpush.bf16.msra.mxu0 %v1666
      %1982 = vmatpush.bf16.msra.mxu0 %v1665
      %1983 = vmatpush.bf16.msra.mxu0 %v1664
      %1984 = vmatmul.bf16.gmra.mxu0 %v1301
      %v1985 = vpop.f32.mrf.mxu0
      %v1986 = vadd.f32 %v1957, %v1985
      %v1987 = vpop.f32.mrf.mxu0
      %v1988 = vadd.f32 %v1959, %v1987
      %1989 = vmatmul.bf16.gmra.mxu0 %v1302
      %v1990 = vpop.f32.mrf.mxu0
      %v1991 = vadd.f32 %v1962, %v1990
      %v1992 = vpop.f32.mrf.mxu0
      %v1993 = vadd.f32 %v1964, %v1992
      %1994 = vmatmul.bf16.gmra.mxu0 %v1303
      %v1995 = vpop.f32.mrf.mxu0
      %v1996 = vadd.f32 %v1967, %v1995
      %v1997 = vpop.f32.mrf.mxu0
      %v1998 = vadd.f32 %v1969, %v1997
      %1999 = vmatmul.bf16.gmra.mxu0 %v1304
      %v2000 = vpop.f32.mrf.mxu0
      %v2001 = vadd.f32 %v1972, %v2000
      %v2002 = vpop.f32.mrf.mxu0
      %v2003 = vadd.f32 %v1974, %v2002
      %2004 = vdwg.mxu0
      %2005 = vst [vmem:[%s262] sm:$0xff] %v1986
      %2006 = vst [vmem:[%s262 + $0x8] sm:$0xff] %v1988
      %2007 = vst [vmem:[%s262 + $0x10] sm:$0xff] %v1991
      %2008 = vst [vmem:[%s262 + $0x18] sm:$0xff] %v1993
      %2009 = vst [vmem:[%s262 + $0x20] sm:$0xff] %v1996
      %2010 = vst [vmem:[%s262 + $0x28] sm:$0xff] %v1998
      %2011 = vst [vmem:[%s262 + $0x30] sm:$0xff] %v2001
      %2012 = vst [vmem:[%s262 + $0x38] sm:$0xff] %v2003
      %v2013 = vadd.f32 %v1986, %v1988
      %v2014 = vadd.f32 %v2013, %v1991
      %v2015 = vadd.f32 %v2014, %v1993
      %v2016 = vadd.f32 %v2015, %v1996
      %v2017 = vadd.f32 %v2016, %v1998
      %v2018 = vadd.f32 %v2017, %v2001
      %v2019 = vadd.f32 %v2018, %v2003
      %v2020 = vrot.slane %v2019, 4
      %v2021 = vadd.f32 %v2019, %v2020
      %v2022 = vrot.slane %v2021, 2
      %v2023 = vadd.f32 %v2021, %v2022
      %v2024 = vrot.slane %v2023, 1
      %v2025 = vadd.f32 %v2023, %v2024
      %2026 = vst [vmem:[%s265] sm:$0x1] %v2025
      %v2027 = vmul.f32 %v1986, %v1986
      %v2028 = vmul.f32 %v1988, %v1988
      %v2029 = vmul.f32 %v1991, %v1991
      %v2030 = vmul.f32 %v1993, %v1993
      %v2031 = vmul.f32 %v1996, %v1996
      %v2032 = vmul.f32 %v1998, %v1998
      %v2033 = vmul.f32 %v2001, %v2001
      %v2034 = vmul.f32 %v2003, %v2003
      %v2035 = vadd.f32 %v2027, %v2028
      %v2036 = vadd.f32 %v2035, %v2029
      %v2037 = vadd.f32 %v2036, %v2030
      %v2038 = vadd.f32 %v2037, %v2031
      %v2039 = vadd.f32 %v2038, %v2032
      %v2040 = vadd.f32 %v2039, %v2033
      %v2041 = vadd.f32 %v2040, %v2034
      %v2042 = vrot.slane %v2041, 4
      %v2043 = vadd.f32 %v2041, %v2042
      %v2044 = vrot.slane %v2043, 2
      %v2045 = vadd.f32 %v2043, %v2044
      %v2046 = vrot.slane %v2045, 1
      %v2047 = vadd.f32 %v2045, %v2046
      %2048 = vst [vmem:[%s268] sm:$0x1] %v2047
      %p2049 = scmp.lt.s32.totalorder %s18, 1
      %s2050 = scalar_select %p2049, %s18, 1
      %s2051 = smul.addr %s2050, 8
      %s2052 = smul.addr %s2051, 8
      %s2053 = scalar_lea.vmem %s4, %s2052
      %p2054 = scmp.lt.s32.totalorder %s18, 1
      %s2055 = scalar_select %p2054, %s18, 1
      %s2056 = scalar_lea.vmem %s5, %s2055
      %p2057 = scmp.lt.s32.totalorder %s18, 1
      %s2058 = scalar_select %p2057, %s18, 1
      %s2059 = scalar_lea.vmem %s6, %s2058
      // Predicated region
      $region37: #{down_forward.3} parent=35 // pred_check
        %p2060 = pneg %p125
      $region38: #{down_forward.3} parent=35 // pred_check_branch
        %2062 = sbr.rel (%p2060) target = $region40
      $region39: #{down_forward.3} parent=35 // pred_region
        _
      $region40: #{down_forward.3} parent=35 // pred_fallthru
        _
      // Predicated region
      $region41: #{down_forward.3} parent=35 // pred_check
        %p2063 = pneg %p151
      $region42: #{down_forward.3} parent=35 // pred_check_branch
        %2065 = sbr.rel (%p2063) target = $region44
      $region43: #{down_forward.3} parent=35 // pred_region
        _
      $region44: #{down_forward.3} parent=35 // pred_fallthru
        _
      // Predicated region
      $region45: #{down_forward.3} parent=35 // pred_check
        %p2066 = pneg %p177
      $region46: #{down_forward.3} parent=35 // pred_check_branch
        %2068 = sbr.rel (%p2066) target = $region48
      $region47: #{down_forward.3} parent=35 // pred_region
        _
      $region48: #{down_forward.3} parent=35 // pred_fallthru
        _
    $region36: #{down_forward.3} parent=5 // pred_fallthru
      _
    %p2069 = scmp.le.s32.totalorder 2, %s13
    // Predicated region
    $region49: #{down_forward.3} parent=5 // pred_check
      %p2070 = pneg %p2069
    $region50: #{down_forward.3} parent=5 // pred_check_branch
      %2072 = sbr.rel (%p2070) target = $region52
    $region51: #{down_forward.3} parent=5 // pred_region
      %s2073 = ssub.s32 %s13, 2
      // Predicated region
      $region53: #{down_forward.3} parent=51 // pred_check
        %p2074 = pneg %p131
      $region54: #{down_forward.3} parent=51 // pred_check_branch
        %2076 = sbr.rel (%p2074) target = $region56
      $region55: #{down_forward.3} parent=51 // pred_region
        %p2077 = scmp.lt.s32.totalorder %s19, 1
        %s2078 = scalar_select %p2077, %s19, 1
        %s2079 = smul.addr %s2078, 8
        %s2080 = smul.addr %s2079, 8
        %s2081 = scalar_lea.vmem %s4, %s2080
      $region56: #{down_forward.3} parent=51 // pred_fallthru
        _
      // Predicated region
      $region57: #{down_forward.3} parent=51 // pred_check
        %p2082 = pneg %p157
      $region58: #{down_forward.3} parent=51 // pred_check_branch
        %2084 = sbr.rel (%p2082) target = $region60
      $region59: #{down_forward.3} parent=51 // pred_region
        %p2085 = scmp.lt.s32.totalorder %s19, 1
        %s2086 = scalar_select %p2085, %s19, 1
        %s2087 = scalar_lea.vmem %s5, %s2086
      $region60: #{down_forward.3} parent=51 // pred_fallthru
        _
      // Predicated region
      $region61: #{down_forward.3} parent=51 // pred_check
        %p2088 = pneg %p183
      $region62: #{down_forward.3} parent=51 // pred_check_branch
        %2090 = sbr.rel (%p2088) target = $region64
      $region63: #{down_forward.3} parent=51 // pred_region
        %p2091 = scmp.lt.s32.totalorder %s19, 1
        %s2092 = scalar_select %p2091, %s19, 1
        %s2093 = scalar_lea.vmem %s6, %s2092
      $region64: #{down_forward.3} parent=51 // pred_fallthru
        _
    $region52: #{down_forward.3} parent=5 // pred_fallthru
      _
  $region6: #{down_forward.3} parent=0 // loop_footer
    %s17 = sadd.s32 1, %s13
  $region7: #{down_forward.3} parent=0 // loop_footer_branch
    %12 = sbr.rel target = $region3
  $region8: #{down_forward.3} parent=0 // loop_exit
    _

// kernel: down_forward.4
$region0: #{down_forward.4}
  #allocation0 [shape = 'u32[]', space=smem, size = 0x4, offset = 0x4, fixed_abs, tag = 'smem constant byte address 0x4 - core index']
  #allocation1 [shape = 'u32[72,128]{1,0:T(1,128)}', space=vmem, size = 0x9000, scoped, tag = 'internal scratch']
  %s0 = inlined_call_operand.vmem [shape: f32[2,64,128], index: 0, kind: input, shape index: {}]
  %s1 = inlined_call_operand.vmem [shape: f32[1,128], index: 1, kind: input, shape index: {}]
  %s2 = inlined_call_operand.vmem [shape: f32[1,128], index: 2, kind: input, shape index: {}]
  %s3 = inlined_call_operand.vmem [shape: f32[9,64,1], index: 3, kind: input, shape index: {}]
  %s4 = inlined_call_operand.vmem [shape: bf16[1152,128], index: 4, kind: input, shape index: {}]
  %s5 = inlined_call_operand.vmem [shape: f32[1,128], index: 5, kind: input, shape index: {}]
  %s6 = inlined_call_operand.vmem [shape: f32[2,64,128], index: 6, kind: output, shape index: {0}]
  %s7 = inlined_call_operand.vmem [shape: f32[2,1,128], index: 7, kind: output, shape index: {1}]
  %s8 = inlined_call_operand.vmem [shape: f32[2,1,128], index: 8, kind: output, shape index: {2}]
  %9 = xla_tuple %s6, %s7, %s8
  %s10 = sld [smem:[#allocation0]]
  $region73: #{down_forward.4} parent=0
    _
  %s12 = ssub.s32 1, %s10
  %s13 = scalar_select 0, %s12, %s10
  loop: start=0, step=1, limit=4
  $region2: #{down_forward.4} parent=0 // loop_pre_header
    _
  $region3: #{down_forward.4} parent=0 // loop_header
    %s15 = sphi 0, %s19
    %p16 = scmp.ge.s32.totalorder %s15, 4
    %s25 = sphi 0, %s27
    %s28 = sphi 0, %s25
    %s29 = sphi 0, %s28
    %s45 = sphi 0, %s29
    %s49 = sphi 0, %s49
    %s51 = sphi 0, %s49
    %s52 = sphi 0, %s51
    %s66 = sphi 0, %s52
    %s70 = sphi 0, %s70
    %s72 = sphi 0, %s70
    %s73 = sphi 0, %s72
    %s87 = sphi 0, %s73
    %s91 = sphi 0, %s91
    %s93 = sphi 0, %s91
    %s94 = sphi 0, %s93
    %s108 = sphi 0, %s94
    %s112 = sphi 0, %s112
    %s114 = sphi 0, %s112
    %s115 = sphi 0, %s114
    %s129 = sphi 0, %s115
    %s133 = sphi 0, %s133
    %s135 = sphi 0, %s133
    %s136 = sphi 0, %s135
    %s150 = sphi 0, %s136
    %s156 = sphi 0, %s158
    %s159 = sphi 0, %s156
    %s160 = sphi 0, %s159
    %s176 = sphi 0, %s160
    %s182 = sphi 0, %s184
    %s185 = sphi 0, %s182
    %s186 = sphi 0, %s185
    %s202 = sphi 0, %s186
    %s208 = sphi 0, %s210
    %s211 = sphi 0, %s208
    %s212 = sphi 0, %s211
    %s228 = sphi 0, %s212
  $region4: #{down_forward.4} parent=0 // loop_header_branch
    %18 = sbr.rel (%p16) target = $region8
  $region5: #{down_forward.4} parent=0 // loop_body
    %s20 = ssub.s32 %s15, 1
    %s21 = ssub.s32 %s15, 2
    %s22 = sadd.s32 %s15, 1
    %s23 = ssub.s32 %s15, %s22
    %p24 = scmp.eq.s32.totalorder %s23, 0
    %s26 = sadd.s32 %s25, 1
    %s27 = scalar_select %p24, %s25, %s26
    %p30 = pneg %p24
    %p31 = scmp.eq.s32.totalorder %s15, 1
    %p32 = por %p30, %p31
    %p33 = scmp.ne.s32.totalorder %s25, %s28
    %p34 = scmp.eq.s32.totalorder %s15, 0
    %p35 = por %p33, %p34
    %p36 = scmp.ne.s32.totalorder %s25, %s28
    %p37 = scmp.eq.s32.totalorder %s20, 1
    %p38 = por %p36, %p37
    %p39 = scmp.ne.s32.totalorder %s28, %s29
    %p40 = scmp.eq.s32.totalorder %s20, 0
    %p41 = por %p39, %p40
    %p42 = scmp.ne.s32.totalorder %s28, %s29
    %p43 = scmp.eq.s32.totalorder %s21, 1
    %p44 = por %p42, %p43
    %p46 = scmp.ne.s32.totalorder %s29, %s45
    %p47 = scmp.eq.s32.totalorder %s21, 0
    %p48 = por %p46, %p47
    %s50 = sadd.s32 %s49, 1
    %p53 = scmp.eq.s32.totalorder %s15, 1
    %p54 = scmp.ne.s32.totalorder %s49, %s51
    %p55 = scmp.eq.s32.totalorder %s15, 0
    %p56 = por %p54, %p55
    %p57 = scmp.ne.s32.totalorder %s49, %s51
    %p58 = scmp.eq.s32.totalorder %s20, 1
    %p59 = por %p57, %p58
    %p60 = scmp.ne.s32.totalorder %s51, %s52
    %p61 = scmp.eq.s32.totalorder %s20, 0
    %p62 = por %p60, %p61
    %p63 = scmp.ne.s32.totalorder %s51, %s52
    %p64 = scmp.eq.s32.totalorder %s21, 1
    %p65 = por %p63, %p64
    %p67 = scmp.ne.s32.totalorder %s52, %s66
    %p68 = scmp.eq.s32.totalorder %s21, 0
    %p69 = por %p67, %p68
    %s71 = sadd.s32 %s70, 1
    %p74 = scmp.eq.s32.totalorder %s15, 1
    %p75 = scmp.ne.s32.totalorder %s70, %s72
    %p76 = scmp.eq.s32.totalorder %s15, 0
    %p77 = por %p75, %p76
    %p78 = scmp.ne.s32.totalorder %s70, %s72
    %p79 = scmp.eq.s32.totalorder %s20, 1
    %p80 = por %p78, %p79
    %p81 = scmp.ne.s32.totalorder %s72, %s73
    %p82 = scmp.eq.s32.totalorder %s20, 0
    %p83 = por %p81, %p82
    %p84 = scmp.ne.s32.totalorder %s72, %s73
    %p85 = scmp.eq.s32.totalorder %s21, 1
    %p86 = por %p84, %p85
    %p88 = scmp.ne.s32.totalorder %s73, %s87
    %p89 = scmp.eq.s32.totalorder %s21, 0
    %p90 = por %p88, %p89
    %s92 = sadd.s32 %s91, 1
    %p95 = scmp.eq.s32.totalorder %s15, 1
    %p96 = scmp.ne.s32.totalorder %s91, %s93
    %p97 = scmp.eq.s32.totalorder %s15, 0
    %p98 = por %p96, %p97
    %p99 = scmp.ne.s32.totalorder %s91, %s93
    %p100 = scmp.eq.s32.totalorder %s20, 1
    %p101 = por %p99, %p100
    %p102 = scmp.ne.s32.totalorder %s93, %s94
    %p103 = scmp.eq.s32.totalorder %s20, 0
    %p104 = por %p102, %p103
    %p105 = scmp.ne.s32.totalorder %s93, %s94
    %p106 = scmp.eq.s32.totalorder %s21, 1
    %p107 = por %p105, %p106
    %p109 = scmp.ne.s32.totalorder %s94, %s108
    %p110 = scmp.eq.s32.totalorder %s21, 0
    %p111 = por %p109, %p110
    %s113 = sadd.s32 %s112, 1
    %p116 = scmp.eq.s32.totalorder %s15, 1
    %p117 = scmp.ne.s32.totalorder %s112, %s114
    %p118 = scmp.eq.s32.totalorder %s15, 0
    %p119 = por %p117, %p118
    %p120 = scmp.ne.s32.totalorder %s112, %s114
    %p121 = scmp.eq.s32.totalorder %s20, 1
    %p122 = por %p120, %p121
    %p123 = scmp.ne.s32.totalorder %s114, %s115
    %p124 = scmp.eq.s32.totalorder %s20, 0
    %p125 = por %p123, %p124
    %p126 = scmp.ne.s32.totalorder %s114, %s115
    %p127 = scmp.eq.s32.totalorder %s21, 1
    %p128 = por %p126, %p127
    %p130 = scmp.ne.s32.totalorder %s115, %s129
    %p131 = scmp.eq.s32.totalorder %s21, 0
    %p132 = por %p130, %p131
    %s134 = sadd.s32 %s133, 1
    %p137 = scmp.eq.s32.totalorder %s15, 1
    %p138 = scmp.ne.s32.totalorder %s133, %s135
    %p139 = scmp.eq.s32.totalorder %s15, 0
    %p140 = por %p138, %p139
    %p141 = scmp.ne.s32.totalorder %s133, %s135
    %p142 = scmp.eq.s32.totalorder %s20, 1
    %p143 = por %p141, %p142
    %p144 = scmp.ne.s32.totalorder %s135, %s136
    %p145 = scmp.eq.s32.totalorder %s20, 0
    %p146 = por %p144, %p145
    %p147 = scmp.ne.s32.totalorder %s135, %s136
    %p148 = scmp.eq.s32.totalorder %s21, 1
    %p149 = por %p147, %p148
    %p151 = scmp.ne.s32.totalorder %s136, %s150
    %p152 = scmp.eq.s32.totalorder %s21, 0
    %p153 = por %p151, %p152
    %s154 = ssub.s32 %s15, %s22
    %p155 = scmp.eq.s32.totalorder %s154, 0
    %s157 = sadd.s32 %s156, 1
    %s158 = scalar_select %p155, %s156, %s157
    %p161 = pneg %p155
    %p162 = scmp.eq.s32.totalorder %s15, 1
    %p163 = por %p161, %p162
    %p164 = scmp.ne.s32.totalorder %s156, %s159
    %p165 = scmp.eq.s32.totalorder %s15, 0
    %p166 = por %p164, %p165
    %p167 = scmp.ne.s32.totalorder %s156, %s159
    %p168 = scmp.eq.s32.totalorder %s20, 1
    %p169 = por %p167, %p168
    %p170 = scmp.ne.s32.totalorder %s159, %s160
    %p171 = scmp.eq.s32.totalorder %s20, 0
    %p172 = por %p170, %p171
    %p173 = scmp.ne.s32.totalorder %s159, %s160
    %p174 = scmp.eq.s32.totalorder %s21, 1
    %p175 = por %p173, %p174
    %p177 = scmp.ne.s32.totalorder %s160, %s176
    %p178 = scmp.eq.s32.totalorder %s21, 0
    %p179 = por %p177, %p178
    %s180 = ssub.s32 %s15, %s22
    %p181 = scmp.eq.s32.totalorder %s180, 0
    %s183 = sadd.s32 %s182, 1
    %s184 = scalar_select %p181, %s182, %s183
    %p187 = pneg %p181
    %p188 = scmp.eq.s32.totalorder %s15, 1
    %p189 = por %p187, %p188
    %p190 = scmp.ne.s32.totalorder %s182, %s185
    %p191 = scmp.eq.s32.totalorder %s15, 0
    %p192 = por %p190, %p191
    %p193 = scmp.ne.s32.totalorder %s182, %s185
    %p194 = scmp.eq.s32.totalorder %s20, 1
    %p195 = por %p193, %p194
    %p196 = scmp.ne.s32.totalorder %s185, %s186
    %p197 = scmp.eq.s32.totalorder %s20, 0
    %p198 = por %p196, %p197
    %p199 = scmp.ne.s32.totalorder %s185, %s186
    %p200 = scmp.eq.s32.totalorder %s21, 1
    %p201 = por %p199, %p200
    %p203 = scmp.ne.s32.totalorder %s186, %s202
    %p204 = scmp.eq.s32.totalorder %s21, 0
    %p205 = por %p203, %p204
    %s206 = ssub.s32 %s15, %s22
    %p207 = scmp.eq.s32.totalorder %s206, 0
    %s209 = sadd.s32 %s208, 1
    %s210 = scalar_select %p207, %s208, %s209
    %p213 = pneg %p207
    %p214 = scmp.eq.s32.totalorder %s15, 1
    %p215 = por %p213, %p214
    %p216 = scmp.ne.s32.totalorder %s208, %s211
    %p217 = scmp.eq.s32.totalorder %s15, 0
    %p218 = por %p216, %p217
    %p219 = scmp.ne.s32.totalorder %s208, %s211
    %p220 = scmp.eq.s32.totalorder %s20, 1
    %p221 = por %p219, %p220
    %p222 = scmp.ne.s32.totalorder %s211, %s212
    %p223 = scmp.eq.s32.totalorder %s20, 0
    %p224 = por %p222, %p223
    %p225 = scmp.ne.s32.totalorder %s211, %s212
    %p226 = scmp.eq.s32.totalorder %s21, 1
    %p227 = por %p225, %p226
    %p229 = scmp.ne.s32.totalorder %s212, %s228
    %p230 = scmp.eq.s32.totalorder %s21, 0
    %p231 = por %p229, %p230
    %p232 = scmp.le.s32.totalorder 1, %s15
    %p233 = scmp.lt.s32.totalorder %s15, 3
    %p234 = pnand %p232, %p233
    %p235 = pneg %p234
    // Predicated region
    $region9: #{down_forward.4} parent=5 // pred_check
      _
    $region10: #{down_forward.4} parent=5 // pred_check_branch
      %237 = sbr.rel (%p234) target = $region12
    $region11: #{down_forward.4} parent=5 // pred_region
      %s238 = ssub.s32 %s15, 1
      // Predicated region
      $region13: #{down_forward.4} parent=11 // pred_check
        %p239 = pneg %p62
      $region14: #{down_forward.4} parent=11 // pred_check_branch
        %241 = sbr.rel (%p239) target = $region16
      $region15: #{down_forward.4} parent=11 // pred_region
        _
      $region16: #{down_forward.4} parent=11 // pred_fallthru
        _
      // Predicated region
      $region17: #{down_forward.4} parent=11 // pred_check
        %p242 = pneg %p83
      $region18: #{down_forward.4} parent=11 // pred_check_branch
        %244 = sbr.rel (%p242) target = $region20
      $region19: #{down_forward.4} parent=11 // pred_region
        _
      $region20: #{down_forward.4} parent=11 // pred_fallthru
        _
      // Predicated region
      $region21: #{down_forward.4} parent=11 // pred_check
        %p245 = pneg %p104
      $region22: #{down_forward.4} parent=11 // pred_check_branch
        %247 = sbr.rel (%p245) target = $region24
      $region23: #{down_forward.4} parent=11 // pred_region
        _
      $region24: #{down_forward.4} parent=11 // pred_fallthru
        _
      // Predicated region
      $region25: #{down_forward.4} parent=11 // pred_check
        %p248 = pneg %p125
      $region26: #{down_forward.4} parent=11 // pred_check_branch
        %250 = sbr.rel (%p248) target = $region28
      $region27: #{down_forward.4} parent=11 // pred_region
        _
      $region28: #{down_forward.4} parent=11 // pred_fallthru
        _
      // Predicated region
      $region29: #{down_forward.4} parent=11 // pred_check
        %p251 = pneg %p146
      $region30: #{down_forward.4} parent=11 // pred_check_branch
        %253 = sbr.rel (%p251) target = $region32
      $region31: #{down_forward.4} parent=11 // pred_region
        _
      $region32: #{down_forward.4} parent=11 // pred_fallthru
        _
    $region12: #{down_forward.4} parent=5 // pred_fallthru
      _
    %p254 = scmp.lt.s32.totalorder %s15, 2
    // Predicated region
    $region33: #{down_forward.4} parent=5 // pred_check
      %p255 = pneg %p254
    $region34: #{down_forward.4} parent=5 // pred_check_branch
      %257 = sbr.rel (%p255) target = $region36
    $region35: #{down_forward.4} parent=5 // pred_region
      // Predicated region
      $region37: #{down_forward.4} parent=35 // pred_check
        %p258 = pneg %p35
      $region38: #{down_forward.4} parent=35 // pred_check_branch
        %260 = sbr.rel (%p258) target = $region40
      $region39: #{down_forward.4} parent=35 // pred_region
        %p261 = scmp.lt.s32.totalorder %s15, 1
        %s262 = scalar_select %p261, %s15, 1
        %s263 = smul.addr %s262, 8
        %s264 = smul.addr %s263, 8
        %s265 = scalar_lea.vmem %s0, %s264
      $region40: #{down_forward.4} parent=35 // pred_fallthru
        _
    $region36: #{down_forward.4} parent=5 // pred_fallthru
      _
    %p266 = scmp.le.s32.totalorder 1, %s15
    %p267 = scmp.lt.s32.totalorder %s15, 3
    %p268 = pnand %p266, %p267
    %p269 = pneg %p268
    // Predicated region
    $region41: #{down_forward.4} parent=5 // pred_check
      _
    $region42: #{down_forward.4} parent=5 // pred_check_branch
      %271 = sbr.rel (%p268) target = $region44
    $region43: #{down_forward.4} parent=5 // pred_region
      %s272 = ssub.s32 %s15, 1
      %p273 = scmp.lt.s32.totalorder %s20, 1
      %s274 = scalar_select %p273, %s20, 1
      %s275 = smul.addr %s274, 8
      %s276 = smul.addr %s275, 8
      %s277 = scalar_lea.vmem %s0, %s276
      %p278 = pneg %p41
      %p279 = pneg %p38
      %p280 = pneg %p62
      %p281 = pneg %p59
      %p282 = pneg %p83
      %p283 = pneg %p80
      %p284 = pneg %p104
      %p285 = pneg %p101
      %p286 = pneg %p125
      %p287 = pneg %p122
      %p288 = pneg %p146
      %p289 = pneg %p143
      %p290 = pneg %p172
      %p291 = pneg %p169
      %p292 = scmp.lt.s32.totalorder %s20, 1
      %s293 = scalar_select %p292, %s20, 1
      %s294 = smul.addr %s293, 8
      %s295 = smul.addr %s294, 8
      %s296 = scalar_lea.vmem %s6, %s295
      %p297 = pneg %p198
      %p298 = pneg %p195
      %p299 = scmp.lt.s32.totalorder %s20, 1
      %s300 = scalar_select %p299, %s20, 1
      %s301 = scalar_lea.vmem %s7, %s300
      %p302 = pneg %p224
      %p303 = pneg %p221
      %p304 = scmp.lt.s32.totalorder %s20, 1
      %s305 = scalar_select %p304, %s20, 1
      %s306 = scalar_lea.vmem %s8, %s305
      %p307 = scmp.lt.s32.totalorder %s20, 1
      %s308 = scalar_select %p307, %s20, 1
      %s309 = smul.addr %s308, 8
      %s310 = smul.addr %s309, 8
      %s311 = scalar_lea.vmem %s0, %s310
      %p312 = scmp.lt.s32.totalorder %s20, 1
      %s313 = scalar_select %p312, %s20, 1
      %s314 = smul.addr %s313, 8
      %s315 = smul.addr %s314, 8
      %s316 = scalar_lea.vmem %s6, %s315
      %p317 = scmp.lt.s32.totalorder %s20, 1
      %s318 = scalar_select %p317, %s20, 1
      %s319 = scalar_lea.vmem %s7, %s318
      %p320 = scmp.lt.s32.totalorder %s20, 1
      %s321 = scalar_select %p320, %s20, 1
      %s322 = scalar_lea.vmem %s8, %s321
      %v323 = vld [vmem:[%s311] sm:$0xff]
      %v324 = vld [vmem:[%s311 + $0x8] sm:$0xff]
      %v325 = vld [vmem:[%s311 + $0x10] sm:$0xff]
      %v326 = vld [vmem:[%s311 + $0x18] sm:$0xff]
      %v327 = vld [vmem:[%s311 + $0x20] sm:$0xff]
      %v328 = vld [vmem:[%s311 + $0x28] sm:$0xff]
      %v329 = vld [vmem:[%s311 + $0x30] sm:$0xff]
      %v330 = vld [vmem:[%s311 + $0x38] sm:$0xff]
      %v331 = vld [vmem:[%s1] sm:$0x1]
      %v333 = vperm.slane %v331, 0
      %v335 = vmul.f32 %v323, %v333
      %v336 = vmul.f32 %v324, %v333
      %v337 = vmul.f32 %v325, %v333
      %v338 = vmul.f32 %v326, %v333
      %v339 = vmul.f32 %v327, %v333
      %v340 = vmul.f32 %v328, %v333
      %v341 = vmul.f32 %v329, %v333
      %v342 = vmul.f32 %v330, %v333
      %v343 = vld [vmem:[%s2] sm:$0x1]
      %v345 = vperm.slane %v343, 0
      %v347 = vadd.f32 %v335, %v345
      %v348 = vadd.f32 %v336, %v345
      %v349 = vadd.f32 %v337, %v345
      %v350 = vadd.f32 %v338, %v345
      %v351 = vadd.f32 %v339, %v345
      %v352 = vadd.f32 %v340, %v345
      %v353 = vadd.f32 %v341, %v345
      %v354 = vadd.f32 %v342, %v345
      %v355 = vmax.f32 %v347, 0.0
      %v356 = vmax.f32 %v348, 0.0
      %v357 = vmax.f32 %v349, 0.0
      %v358 = vmax.f32 %v350, 0.0
      %v359 = vmax.f32 %v351, 0.0
      %v360 = vmax.f32 %v352, 0.0
      %v361 = vmax.f32 %v353, 0.0
      %v362 = vmax.f32 %v354, 0.0
      %v363 = vld [vmem:[%s4] sm:$0xf]
      %v364 = vld [vmem:[%s4 + $0x4] sm:$0xf]
      %v365 = vld [vmem:[%s4 + $0x8] sm:$0xf]
      %v366 = vld [vmem:[%s4 + $0xc] sm:$0xf]
      %v367 = vld [vmem:[%s4 + $0x10] sm:$0xf]
      %v368 = vld [vmem:[%s4 + $0x14] sm:$0xf]
      %v369 = vld [vmem:[%s4 + $0x18] sm:$0xf]
      %v370 = vld [vmem:[%s4 + $0x1c] sm:$0xf]
      %v371 = vld [vmem:[%s4 + $0x20] sm:$0xf]
      %v372 = vld [vmem:[%s4 + $0x24] sm:$0xf]
      %v373 = vld [vmem:[%s4 + $0x28] sm:$0xf]
      %v374 = vld [vmem:[%s4 + $0x2c] sm:$0xf]
      %v375 = vld [vmem:[%s4 + $0x30] sm:$0xf]
      %v376 = vld [vmem:[%s4 + $0x34] sm:$0xf]
      %v377 = vld [vmem:[%s4 + $0x38] sm:$0xf]
      %v378 = vld [vmem:[%s4 + $0x3c] sm:$0xf]
      %v379 = vld [vmem:[%s4 + $0x40] sm:$0xf]
      %v380 = vld [vmem:[%s4 + $0x44] sm:$0xf]
      %v381 = vld [vmem:[%s4 + $0x48] sm:$0xf]
      %v382 = vld [vmem:[%s4 + $0x4c] sm:$0xf]
      %v383 = vld [vmem:[%s4 + $0x50] sm:$0xf]
      %v384 = vld [vmem:[%s4 + $0x54] sm:$0xf]
      %v385 = vld [vmem:[%s4 + $0x58] sm:$0xf]
      %v386 = vld [vmem:[%s4 + $0x5c] sm:$0xf]
      %v387 = vld [vmem:[%s4 + $0x60] sm:$0xf]
      %v388 = vld [vmem:[%s4 + $0x64] sm:$0xf]
      %v389 = vld [vmem:[%s4 + $0x68] sm:$0xf]
      %v390 = vld [vmem:[%s4 + $0x6c] sm:$0xf]
      %v391 = vld [vmem:[%s4 + $0x70] sm:$0xf]
      %v392 = vld [vmem:[%s4 + $0x74] sm:$0xf]
      %v393 = vld [vmem:[%s4 + $0x78] sm:$0xf]
      %v394 = vld [vmem:[%s4 + $0x7c] sm:$0xf]
      %v395 = vld [vmem:[%s4 + $0x80] sm:$0xf]
      %v396 = vld [vmem:[%s4 + $0x84] sm:$0xf]
      %v397 = vld [vmem:[%s4 + $0x88] sm:$0xf]
      %v398 = vld [vmem:[%s4 + $0x8c] sm:$0xf]
      %v399 = vld [vmem:[%s4 + $0x90] sm:$0xf]
      %v400 = vld [vmem:[%s4 + $0x94] sm:$0xf]
      %v401 = vld [vmem:[%s4 + $0x98] sm:$0xf]
      %v402 = vld [vmem:[%s4 + $0x9c] sm:$0xf]
      %v403 = vld [vmem:[%s4 + $0xa0] sm:$0xf]
      %v404 = vld [vmem:[%s4 + $0xa4] sm:$0xf]
      %v405 = vld [vmem:[%s4 + $0xa8] sm:$0xf]
      %v406 = vld [vmem:[%s4 + $0xac] sm:$0xf]
      %v407 = vld [vmem:[%s4 + $0xb0] sm:$0xf]
      %v408 = vld [vmem:[%s4 + $0xb4] sm:$0xf]
      %v409 = vld [vmem:[%s4 + $0xb8] sm:$0xf]
      %v410 = vld [vmem:[%s4 + $0xbc] sm:$0xf]
      %v411 = vld [vmem:[%s4 + $0xc0] sm:$0xf]
      %v412 = vld [vmem:[%s4 + $0xc4] sm:$0xf]
      %v413 = vld [vmem:[%s4 + $0xc8] sm:$0xf]
      %v414 = vld [vmem:[%s4 + $0xcc] sm:$0xf]
      %v415 = vld [vmem:[%s4 + $0xd0] sm:$0xf]
      %v416 = vld [vmem:[%s4 + $0xd4] sm:$0xf]
      %v417 = vld [vmem:[%s4 + $0xd8] sm:$0xf]
      %v418 = vld [vmem:[%s4 + $0xdc] sm:$0xf]
      %v419 = vld [vmem:[%s4 + $0xe0] sm:$0xf]
      %v420 = vld [vmem:[%s4 + $0xe4] sm:$0xf]
      %v421 = vld [vmem:[%s4 + $0xe8] sm:$0xf]
      %v422 = vld [vmem:[%s4 + $0xec] sm:$0xf]
      %v423 = vld [vmem:[%s4 + $0xf0] sm:$0xf]
      %v424 = vld [vmem:[%s4 + $0xf4] sm:$0xf]
      %v425 = vld [vmem:[%s4 + $0xf8] sm:$0xf]
      %v426 = vld [vmem:[%s4 + $0xfc] sm:$0xf]
      %v427 = vld [vmem:[%s4 + $0x100] sm:$0xf]
      %v428 = vld [vmem:[%s4 + $0x104] sm:$0xf]
      %v429 = vld [vmem:[%s4 + $0x108] sm:$0xf]
      %v430 = vld [vmem:[%s4 + $0x10c] sm:$0xf]
      %v431 = vld [vmem:[%s4 + $0x110] sm:$0xf]
      %v432 = vld [vmem:[%s4 + $0x114] sm:$0xf]
      %v433 = vld [vmem:[%s4 + $0x118] sm:$0xf]
      %v434 = vld [vmem:[%s4 + $0x11c] sm:$0xf]
      %v435 = vld [vmem:[%s4 + $0x120] sm:$0xf]
      %v436 = vld [vmem:[%s4 + $0x124] sm:$0xf]
      %v437 = vld [vmem:[%s4 + $0x128] sm:$0xf]
      %v438 = vld [vmem:[%s4 + $0x12c] sm:$0xf]
      %v439 = vld [vmem:[%s4 + $0x130] sm:$0xf]
      %v440 = vld [vmem:[%s4 + $0x134] sm:$0xf]
      %v441 = vld [vmem:[%s4 + $0x138] sm:$0xf]
      %v442 = vld [vmem:[%s4 + $0x13c] sm:$0xf]
      %v443 = vld [vmem:[%s4 + $0x140] sm:$0xf]
      %v444 = vld [vmem:[%s4 + $0x144] sm:$0xf]
      %v445 = vld [vmem:[%s4 + $0x148] sm:$0xf]
      %v446 = vld [vmem:[%s4 + $0x14c] sm:$0xf]
      %v447 = vld [vmem:[%s4 + $0x150] sm:$0xf]
      %v448 = vld [vmem:[%s4 + $0x154] sm:$0xf]
      %v449 = vld [vmem:[%s4 + $0x158] sm:$0xf]
      %v450 = vld [vmem:[%s4 + $0x15c] sm:$0xf]
      %v451 = vld [vmem:[%s4 + $0x160] sm:$0xf]
      %v452 = vld [vmem:[%s4 + $0x164] sm:$0xf]
      %v453 = vld [vmem:[%s4 + $0x168] sm:$0xf]
      %v454 = vld [vmem:[%s4 + $0x16c] sm:$0xf]
      %v455 = vld [vmem:[%s4 + $0x170] sm:$0xf]
      %v456 = vld [vmem:[%s4 + $0x174] sm:$0xf]
      %v457 = vld [vmem:[%s4 + $0x178] sm:$0xf]
      %v458 = vld [vmem:[%s4 + $0x17c] sm:$0xf]
      %v459 = vld [vmem:[%s4 + $0x180] sm:$0xf]
      %v460 = vld [vmem:[%s4 + $0x184] sm:$0xf]
      %v461 = vld [vmem:[%s4 + $0x188] sm:$0xf]
      %v462 = vld [vmem:[%s4 + $0x18c] sm:$0xf]
      %v463 = vld [vmem:[%s4 + $0x190] sm:$0xf]
      %v464 = vld [vmem:[%s4 + $0x194] sm:$0xf]
      %v465 = vld [vmem:[%s4 + $0x198] sm:$0xf]
      %v466 = vld [vmem:[%s4 + $0x19c] sm:$0xf]
      %v467 = vld [vmem:[%s4 + $0x1a0] sm:$0xf]
      %v468 = vld [vmem:[%s4 + $0x1a4] sm:$0xf]
      %v469 = vld [vmem:[%s4 + $0x1a8] sm:$0xf]
      %v470 = vld [vmem:[%s4 + $0x1ac] sm:$0xf]
      %v471 = vld [vmem:[%s4 + $0x1b0] sm:$0xf]
      %v472 = vld [vmem:[%s4 + $0x1b4] sm:$0xf]
      %v473 = vld [vmem:[%s4 + $0x1b8] sm:$0xf]
      %v474 = vld [vmem:[%s4 + $0x1bc] sm:$0xf]
      %v475 = vld [vmem:[%s4 + $0x1c0] sm:$0xf]
      %v476 = vld [vmem:[%s4 + $0x1c4] sm:$0xf]
      %v477 = vld [vmem:[%s4 + $0x1c8] sm:$0xf]
      %v478 = vld [vmem:[%s4 + $0x1cc] sm:$0xf]
      %v479 = vld [vmem:[%s4 + $0x1d0] sm:$0xf]
      %v480 = vld [vmem:[%s4 + $0x1d4] sm:$0xf]
      %v481 = vld [vmem:[%s4 + $0x1d8] sm:$0xf]
      %v482 = vld [vmem:[%s4 + $0x1dc] sm:$0xf]
      %v483 = vld [vmem:[%s4 + $0x1e0] sm:$0xf]
      %v484 = vld [vmem:[%s4 + $0x1e4] sm:$0xf]
      %v485 = vld [vmem:[%s4 + $0x1e8] sm:$0xf]
      %v486 = vld [vmem:[%s4 + $0x1ec] sm:$0xf]
      %v487 = vld [vmem:[%s4 + $0x1f0] sm:$0xf]
      %v488 = vld [vmem:[%s4 + $0x1f4] sm:$0xf]
      %v489 = vld [vmem:[%s4 + $0x1f8] sm:$0xf]
      %v490 = vld [vmem:[%s4 + $0x1fc] sm:$0xf]
      %v491 = vld [vmem:[%s4 + $0x200] sm:$0xf]
      %v492 = vld [vmem:[%s4 + $0x204] sm:$0xf]
      %v493 = vld [vmem:[%s4 + $0x208] sm:$0xf]
      %v494 = vld [vmem:[%s4 + $0x20c] sm:$0xf]
      %v495 = vld [vmem:[%s4 + $0x210] sm:$0xf]
      %v496 = vld [vmem:[%s4 + $0x214] sm:$0xf]
      %v497 = vld [vmem:[%s4 + $0x218] sm:$0xf]
      %v498 = vld [vmem:[%s4 + $0x21c] sm:$0xf]
      %v499 = vld [vmem:[%s4 + $0x220] sm:$0xf]
      %v500 = vld [vmem:[%s4 + $0x224] sm:$0xf]
      %v501 = vld [vmem:[%s4 + $0x228] sm:$0xf]
      %v502 = vld [vmem:[%s4 + $0x22c] sm:$0xf]
      %v503 = vld [vmem:[%s4 + $0x230] sm:$0xf]
      %v504 = vld [vmem:[%s4 + $0x234] sm:$0xf]
      %v505 = vld [vmem:[%s4 + $0x238] sm:$0xf]
      %v506 = vld [vmem:[%s4 + $0x23c] sm:$0xf]
      %v507 = vld [vmem:[%s5] sm:$0x1]
      %v508 = vrot.slane %v355, 7
      %v509 = vrot.slane %v356, 7
      %v510 = vrot.slane %v357, 7
      %v511 = vrot.slane %v358, 7
      %v512 = vrot.slane %v359, 7
      %v513 = vrot.slane %v360, 7
      %v514 = vrot.slane %v361, 7
      %v515 = vrot.slane %v362, 7
      %v516 = vlaneseq
      %v517 = vshrl.u32 %v516, 7
      %vm518 = vcmp.lt.s32.totalorder %v517, 1
      %v519 = vsel %vm518, %v514, %v515
      %v520 = vsel %vm518, %v513, %v514
      %v521 = vsel %vm518, %v512, %v513
      %v522 = vsel %vm518, %v511, %v512
      %v523 = vsel %vm518, %v510, %v511
      %v524 = vsel %vm518, %v509, %v510
      %v525 = vsel %vm518, %v508, %v509
      %v526 = vsel %vm518, %v515, %v508
      %v527 = vld [vmem:[%s3] sm:$0xff]
      %v528 = vld [vmem:[%s3 + $0x8] sm:$0xff]
      %v529 = vld [vmem:[%s3 + $0x10] sm:$0xff]
      %v530 = vld [vmem:[%s3 + $0x18] sm:$0xff]
      %v531 = vld [vmem:[%s3 + $0x20] sm:$0xff]
      %v532 = vld [vmem:[%s3 + $0x28] sm:$0xff]
      %v533 = vld [vmem:[%s3 + $0x30] sm:$0xff]
      %v534 = vld [vmem:[%s3 + $0x38] sm:$0xff]
      %536 = vset.pattern.permute.xlu0 0
      %537 = vperm.xlu0 %536, %v527
      %v538 = vpop.permute.xlu0 %537
      %541 = vset.pattern.permute.xlu0 0
      %542 = vperm.xlu0 %541, %v528
      %v543 = vpop.permute.xlu0 %542
      %546 = vset.pattern.permute.xlu0 0
      %547 = vperm.xlu0 %546, %v529
      %v548 = vpop.permute.xlu0 %547
      %551 = vset.pattern.permute.xlu0 0
      %552 = vperm.xlu0 %551, %v530
      %v553 = vpop.permute.xlu0 %552
      %556 = vset.pattern.permute.xlu0 0
      %557 = vperm.xlu0 %556, %v531
      %v558 = vpop.permute.xlu0 %557
      %561 = vset.pattern.permute.xlu0 0
      %562 = vperm.xlu0 %561, %v532
      %v563 = vpop.permute.xlu0 %562
      %566 = vset.pattern.permute.xlu0 0
      %567 = vperm.xlu0 %566, %v533
      %v568 = vpop.permute.xlu0 %567
      %571 = vset.pattern.permute.xlu0 0
      %572 = vperm.xlu0 %571, %v534
      %v573 = vpop.permute.xlu0 %572
      %v575 = vmul.f32 %v519, %v538
      %v576 = vmul.f32 %v526, %v543
      %v577 = vmul.f32 %v525, %v548
      %v578 = vmul.f32 %v524, %v553
      %v579 = vmul.f32 %v523, %v558
      %v580 = vmul.f32 %v522, %v563
      %v581 = vmul.f32 %v521, %v568
      %v582 = vmul.f32 %v520, %v573
      %v583 = vpack.c.bf16 %v575, %v575
      %v584 = vpack.c.bf16 %v576, %v576
      %v585 = vpack.c.bf16 %v577, %v577
      %v586 = vpack.c.bf16 %v578, %v578
      %v587 = vpack.c.bf16 %v579, %v579
      %v588 = vpack.c.bf16 %v580, %v580
      %v589 = vpack.c.bf16 %v581, %v581
      %v590 = vpack.c.bf16 %v582, %v582
      %s591 = scalar_lea.vmem %s3, 64
      %v592 = vld [vmem:[%s591] sm:$0xff]
      %v593 = vld [vmem:[%s591 + $0x8] sm:$0xff]
      %v594 = vld [vmem:[%s591 + $0x10] sm:$0xff]
      %v595 = vld [vmem:[%s591 + $0x18] sm:$0xff]
      %v596 = vld [vmem:[%s591 + $0x20] sm:$0xff]
      %v597 = vld [vmem:[%s591 + $0x28] sm:$0xff]
      %v598 = vld [vmem:[%s591 + $0x30] sm:$0xff]
      %v599 = vld [vmem:[%s591 + $0x38] sm:$0xff]
      %601 = vset.pattern.permute.xlu0 0
      %602 = vperm.xlu0 %601, %v592
      %v603 = vpop.permute.xlu0 %602
      %606 = vset.pattern.permute.xlu0 0
      %607 = vperm.xlu0 %606, %v593
      %v608 = vpop.permute.xlu0 %607
      %611 = vset.pattern.permute.xlu0 0
      %612 = vperm.xlu0 %611, %v594
      %v613 = vpop.permute.xlu0 %612
      %616 = vset.pattern.permute.xlu0 0
      %617 = vperm.xlu0 %616, %v595
      %v618 = vpop.permute.xlu0 %617
      %621 = vset.pattern.permute.xlu0 0
      %622 = vperm.xlu0 %621, %v596
      %v623 = vpop.permute.xlu0 %622
      %626 = vset.pattern.permute.xlu0 0
      %627 = vperm.xlu0 %626, %v597
      %v628 = vpop.permute.xlu0 %627
      %631 = vset.pattern.permute.xlu0 0
      %632 = vperm.xlu0 %631, %v598
      %v633 = vpop.permute.xlu0 %632
      %636 = vset.pattern.permute.xlu0 0
      %637 = vperm.xlu0 %636, %v599
      %v638 = vpop.permute.xlu0 %637
      %v640 = vmul.f32 %v362, %v603
      %v641 = vmul.f32 %v355, %v608
      %v642 = vmul.f32 %v356, %v613
      %v643 = vmul.f32 %v357, %v618
      %v644 = vmul.f32 %v358, %v623
      %v645 = vmul.f32 %v359, %v628
      %v646 = vmul.f32 %v360, %v633
      %v647 = vmul.f32 %v361, %v638
      %v648 = vpack.c.bf16 %v640, %v640
      %v649 = vpack.c.bf16 %v641, %v641
      %v650 = vpack.c.bf16 %v642, %v642
      %v651 = vpack.c.bf16 %v643, %v643
      %v652 = vpack.c.bf16 %v644, %v644
      %v653 = vpack.c.bf16 %v645, %v645
      %v654 = vpack.c.bf16 %v646, %v646
      %v655 = vpack.c.bf16 %v647, %v647
      %v656 = vrot.slane %v355, 1
      %v657 = vrot.slane %v356, 1
      %v658 = vrot.slane %v357, 1
      %v659 = vrot.slane %v358, 1
      %v660 = vrot.slane %v359, 1
      %v661 = vrot.slane %v360, 1
      %v662 = vrot.slane %v361, 1
      %v663 = vrot.slane %v362, 1
      %vm664 = vcmp.lt.s32.totalorder %v517, 7
      %v665 = vsel %vm664, %v662, %v663
      %v666 = vsel %vm664, %v661, %v662
      %v667 = vsel %vm664, %v660, %v661
      %v668 = vsel %vm664, %v659, %v660
      %v669 = vsel %vm664, %v658, %v659
      %v670 = vsel %vm664, %v657, %v658
      %v671 = vsel %vm664, %v656, %v657
      %v672 = vsel %vm664, %v663, %v656
      %s673 = scalar_lea.vmem %s3, 128
      %v674 = vld [vmem:[%s673] sm:$0xff]
      %v675 = vld [vmem:[%s673 + $0x8] sm:$0xff]
      %v676 = vld [vmem:[%s673 + $0x10] sm:$0xff]
      %v677 = vld [vmem:[%s673 + $0x18] sm:$0xff]
      %v678 = vld [vmem:[%s673 + $0x20] sm:$0xff]
      %v679 = vld [vmem:[%s673 + $0x28] sm:$0xff]
      %v680 = vld [vmem:[%s673 + $0x30] sm:$0xff]
      %v681 = vld [vmem:[%s673 + $0x38] sm:$0xff]
      %683 = vset.pattern.permute.xlu0 0
      %684 = vperm.xlu0 %683, %v674
      %v685 = vpop.permute.xlu0 %684
      %688 = vset.pattern.permute.xlu0 0
      %689 = vperm.xlu0 %688, %v675
      %v690 = vpop.permute.xlu0 %689
      %693 = vset.pattern.permute.xlu0 0
      %694 = vperm.xlu0 %693, %v676
      %v695 = vpop.permute.xlu0 %694
      %698 = vset.pattern.permute.xlu0 0
      %699 = vperm.xlu0 %698, %v677
      %v700 = vpop.permute.xlu0 %699
      %703 = vset.pattern.permute.xlu0 0
      %704 = vperm.xlu0 %703, %v678
      %v705 = vpop.permute.xlu0 %704
      %708 = vset.pattern.permute.xlu0 0
      %709 = vperm.xlu0 %708, %v679
      %v710 = vpop.permute.xlu0 %709
      %713 = vset.pattern.permute.xlu0 0
      %714 = vperm.xlu0 %713, %v680
      %v715 = vpop.permute.xlu0 %714
      %718 = vset.pattern.permute.xlu0 0
      %719 = vperm.xlu0 %718, %v681
      %v720 = vpop.permute.xlu0 %719
      %v722 = vmul.f32 %v672, %v685
      %v723 = vmul.f32 %v671, %v690
      %v724 = vmul.f32 %v670, %v695
      %v725 = vmul.f32 %v669, %v700
      %v726 = vmul.f32 %v668, %v705
      %v727 = vmul.f32 %v667, %v710
      %v728 = vmul.f32 %v666, %v715
      %v729 = vmul.f32 %v665, %v720
      %v730 = vpack.c.bf16 %v722, %v722
      %v731 = vpack.c.bf16 %v723, %v723
      %v732 = vpack.c.bf16 %v724, %v724
      %v733 = vpack.c.bf16 %v725, %v725
      %v734 = vpack.c.bf16 %v726, %v726
      %v735 = vpack.c.bf16 %v727, %v727
      %v736 = vpack.c.bf16 %v728, %v728
      %v737 = vpack.c.bf16 %v729, %v729
      %s738 = scalar_lea.vmem %s3, 192
      %v739 = vld [vmem:[%s738] sm:$0xff]
      %v740 = vld [vmem:[%s738 + $0x8] sm:$0xff]
      %v741 = vld [vmem:[%s738 + $0x10] sm:$0xff]
      %v742 = vld [vmem:[%s738 + $0x18] sm:$0xff]
      %v743 = vld [vmem:[%s738 + $0x20] sm:$0xff]
      %v744 = vld [vmem:[%s738 + $0x28] sm:$0xff]
      %v745 = vld [vmem:[%s738 + $0x30] sm:$0xff]
      %v746 = vld [vmem:[%s738 + $0x38] sm:$0xff]
      %748 = vset.pattern.permute.xlu0 0
      %749 = vperm.xlu0 %748, %v739
      %v750 = vpop.permute.xlu0 %749
      %753 = vset.pattern.permute.xlu0 0
      %754 = vperm.xlu0 %753, %v740
      %v755 = vpop.permute.xlu0 %754
      %758 = vset.pattern.permute.xlu0 0
      %759 = vperm.xlu0 %758, %v741
      %v760 = vpop.permute.xlu0 %759
      %763 = vset.pattern.permute.xlu0 0
      %764 = vperm.xlu0 %763, %v742
      %v765 = vpop.permute.xlu0 %764
      %768 = vset.pattern.permute.xlu0 0
      %769 = vperm.xlu0 %768, %v743
      %v770 = vpop.permute.xlu0 %769
      %773 = vset.pattern.permute.xlu0 0
      %774 = vperm.xlu0 %773, %v744
      %v775 = vpop.permute.xlu0 %774
      %778 = vset.pattern.permute.xlu0 0
      %779 = vperm.xlu0 %778, %v745
      %v780 = vpop.permute.xlu0 %779
      %783 = vset.pattern.permute.xlu0 0
      %784 = vperm.xlu0 %783, %v746
      %v785 = vpop.permute.xlu0 %784
      %v787 = vmul.f32 %v526, %v750
      %v788 = vmul.f32 %v525, %v755
      %v789 = vmul.f32 %v524, %v760
      %v790 = vmul.f32 %v523, %v765
      %v791 = vmul.f32 %v522, %v770
      %v792 = vmul.f32 %v521, %v775
      %v793 = vmul.f32 %v520, %v780
      %v794 = vmul.f32 %v519, %v785
      %v795 = vpack.c.bf16 %v787, %v787
      %v796 = vpack.c.bf16 %v788, %v788
      %v797 = vpack.c.bf16 %v789, %v789
      %v798 = vpack.c.bf16 %v790, %v790
      %v799 = vpack.c.bf16 %v791, %v791
      %v800 = vpack.c.bf16 %v792, %v792
      %v801 = vpack.c.bf16 %v793, %v793
      %v802 = vpack.c.bf16 %v794, %v794
      %s803 = scalar_lea.vmem %s3, 256
      %v804 = vld [vmem:[%s803] sm:$0xff]
      %v805 = vld [vmem:[%s803 + $0x8] sm:$0xff]
      %v806 = vld [vmem:[%s803 + $0x10] sm:$0xff]
      %v807 = vld [vmem:[%s803 + $0x18] sm:$0xff]
      %v808 = vld [vmem:[%s803 + $0x20] sm:$0xff]
      %v809 = vld [vmem:[%s803 + $0x28] sm:$0xff]
      %v810 = vld [vmem:[%s803 + $0x30] sm:$0xff]
      %v811 = vld [vmem:[%s803 + $0x38] sm:$0xff]
      %813 = vset.pattern.permute.xlu0 0
      %814 = vperm.xlu0 %813, %v804
      %v815 = vpop.permute.xlu0 %814
      %818 = vset.pattern.permute.xlu0 0
      %819 = vperm.xlu0 %818, %v805
      %v820 = vpop.permute.xlu0 %819
      %823 = vset.pattern.permute.xlu0 0
      %824 = vperm.xlu0 %823, %v806
      %v825 = vpop.permute.xlu0 %824
      %828 = vset.pattern.permute.xlu0 0
      %829 = vperm.xlu0 %828, %v807
      %v830 = vpop.permute.xlu0 %829
      %833 = vset.pattern.permute.xlu0 0
      %834 = vperm.xlu0 %833, %v808
      %v835 = vpop.permute.xlu0 %834
      %838 = vset.pattern.permute.xlu0 0
      %839 = vperm.xlu0 %838, %v809
      %v840 = vpop.permute.xlu0 %839
      %843 = vset.pattern.permute.xlu0 0
      %844 = vperm.xlu0 %843, %v810
      %v845 = vpop.permute.xlu0 %844
      %848 = vset.pattern.permute.xlu0 0
      %849 = vperm.xlu0 %848, %v811
      %v850 = vpop.permute.xlu0 %849
      %v852 = vmul.f32 %v355, %v815
      %v853 = vmul.f32 %v356, %v820
      %v854 = vmul.f32 %v357, %v825
      %v855 = vmul.f32 %v358, %v830
      %v856 = vmul.f32 %v359, %v835
      %v857 = vmul.f32 %v360, %v840
      %v858 = vmul.f32 %v361, %v845
      %v859 = vmul.f32 %v362, %v850
      %v860 = vpack.c.bf16 %v852, %v852
      %v861 = vpack.c.bf16 %v853, %v853
      %v862 = vpack.c.bf16 %v854, %v854
      %v863 = vpack.c.bf16 %v855, %v855
      %v864 = vpack.c.bf16 %v856, %v856
      %v865 = vpack.c.bf16 %v857, %v857
      %v866 = vpack.c.bf16 %v858, %v858
      %v867 = vpack.c.bf16 %v859, %v859
      %s868 = scalar_lea.vmem %s3, 320
      %v869 = vld [vmem:[%s868] sm:$0xff]
      %v870 = vld [vmem:[%s868 + $0x8] sm:$0xff]
      %v871 = vld [vmem:[%s868 + $0x10] sm:$0xff]
      %v872 = vld [vmem:[%s868 + $0x18] sm:$0xff]
      %v873 = vld [vmem:[%s868 + $0x20] sm:$0xff]
      %v874 = vld [vmem:[%s868 + $0x28] sm:$0xff]
      %v875 = vld [vmem:[%s868 + $0x30] sm:$0xff]
      %v876 = vld [vmem:[%s868 + $0x38] sm:$0xff]
      %878 = vset.pattern.permute.xlu0 0
      %879 = vperm.xlu0 %878, %v869
      %v880 = vpop.permute.xlu0 %879
      %883 = vset.pattern.permute.xlu0 0
      %884 = vperm.xlu0 %883, %v870
      %v885 = vpop.permute.xlu0 %884
      %888 = vset.pattern.permute.xlu0 0
      %889 = vperm.xlu0 %888, %v871
      %v890 = vpop.permute.xlu0 %889
      %893 = vset.pattern.permute.xlu0 0
      %894 = vperm.xlu0 %893, %v872
      %v895 = vpop.permute.xlu0 %894
      %898 = vset.pattern.permute.xlu0 0
      %899 = vperm.xlu0 %898, %v873
      %v900 = vpop.permute.xlu0 %899
      %903 = vset.pattern.permute.xlu0 0
      %904 = vperm.xlu0 %903, %v874
      %v905 = vpop.permute.xlu0 %904
      %908 = vset.pattern.permute.xlu0 0
      %909 = vperm.xlu0 %908, %v875
      %v910 = vpop.permute.xlu0 %909
      %913 = vset.pattern.permute.xlu0 0
      %914 = vperm.xlu0 %913, %v876
      %v915 = vpop.permute.xlu0 %914
      %v917 = vmul.f32 %v671, %v880
      %v918 = vmul.f32 %v670, %v885
      %v919 = vmul.f32 %v669, %v890
      %v920 = vmul.f32 %v668, %v895
      %v921 = vmul.f32 %v667, %v900
      %v922 = vmul.f32 %v666, %v905
      %v923 = vmul.f32 %v665, %v910
      %v924 = vmul.f32 %v672, %v915
      %v925 = vpack.c.bf16 %v917, %v917
      %v926 = vpack.c.bf16 %v918, %v918
      %v927 = vpack.c.bf16 %v919, %v919
      %v928 = vpack.c.bf16 %v920, %v920
      %v929 = vpack.c.bf16 %v921, %v921
      %v930 = vpack.c.bf16 %v922, %v922
      %v931 = vpack.c.bf16 %v923, %v923
      %v932 = vpack.c.bf16 %v924, %v924
      %s933 = scalar_lea.vmem %s3, 384
      %v934 = vld [vmem:[%s933] sm:$0xff]
      %v935 = vld [vmem:[%s933 + $0x8] sm:$0xff]
      %v936 = vld [vmem:[%s933 + $0x10] sm:$0xff]
      %v937 = vld [vmem:[%s933 + $0x18] sm:$0xff]
      %v938 = vld [vmem:[%s933 + $0x20] sm:$0xff]
      %v939 = vld [vmem:[%s933 + $0x28] sm:$0xff]
      %v940 = vld [vmem:[%s933 + $0x30] sm:$0xff]
      %v941 = vld [vmem:[%s933 + $0x38] sm:$0xff]
      %943 = vset.pattern.permute.xlu0 0
      %944 = vperm.xlu0 %943, %v934
      %v945 = vpop.permute.xlu0 %944
      %948 = vset.pattern.permute.xlu0 0
      %949 = vperm.xlu0 %948, %v935
      %v950 = vpop.permute.xlu0 %949
      %953 = vset.pattern.permute.xlu0 0
      %954 = vperm.xlu0 %953, %v936
      %v955 = vpop.permute.xlu0 %954
      %958 = vset.pattern.permute.xlu0 0
      %959 = vperm.xlu0 %958, %v937
      %v960 = vpop.permute.xlu0 %959
      %963 = vset.pattern.permute.xlu0 0
      %964 = vperm.xlu0 %963, %v938
      %v965 = vpop.permute.xlu0 %964
      %968 = vset.pattern.permute.xlu0 0
      %969 = vperm.xlu0 %968, %v939
      %v970 = vpop.permute.xlu0 %969
      %973 = vset.pattern.permute.xlu0 0
      %974 = vperm.xlu0 %973, %v940
      %v975 = vpop.permute.xlu0 %974
      %978 = vset.pattern.permute.xlu0 0
      %979 = vperm.xlu0 %978, %v941
      %v980 = vpop.permute.xlu0 %979
      %v982 = vmul.f32 %v525, %v945
      %v983 = vmul.f32 %v524, %v950
      %v984 = vmul.f32 %v523, %v955
      %v985 = vmul.f32 %v522, %v960
      %v986 = vmul.f32 %v521, %v965
      %v987 = vmul.f32 %v520, %v970
      %v988 = vmul.f32 %v519, %v975
      %v989 = vmul.f32 %v526, %v980
      %v990 = vpack.c.bf16 %v982, %v982
      %v991 = vpack.c.bf16 %v983, %v983
      %v992 = vpack.c.bf16 %v984, %v984
      %v993 = vpack.c.bf16 %v985, %v985
      %v994 = vpack.c.bf16 %v986, %v986
      %v995 = vpack.c.bf16 %v987, %v987
      %v996 = vpack.c.bf16 %v988, %v988
      %v997 = vpack.c.bf16 %v989, %v989
      %s998 = scalar_lea.vmem %s3, 448
      %v999 = vld [vmem:[%s998] sm:$0xff]
      %v1000 = vld [vmem:[%s998 + $0x8] sm:$0xff]
      %v1001 = vld [vmem:[%s998 + $0x10] sm:$0xff]
      %v1002 = vld [vmem:[%s998 + $0x18] sm:$0xff]
      %v1003 = vld [vmem:[%s998 + $0x20] sm:$0xff]
      %v1004 = vld [vmem:[%s998 + $0x28] sm:$0xff]
      %v1005 = vld [vmem:[%s998 + $0x30] sm:$0xff]
      %v1006 = vld [vmem:[%s998 + $0x38] sm:$0xff]
      %1008 = vset.pattern.permute.xlu0 0
      %1009 = vperm.xlu0 %1008, %v999
      %v1010 = vpop.permute.xlu0 %1009
      %1013 = vset.pattern.permute.xlu0 0
      %1014 = vperm.xlu0 %1013, %v1000
      %v1015 = vpop.permute.xlu0 %1014
      %1018 = vset.pattern.permute.xlu0 0
      %1019 = vperm.xlu0 %1018, %v1001
      %v1020 = vpop.permute.xlu0 %1019
      %1023 = vset.pattern.permute.xlu0 0
      %1024 = vperm.xlu0 %1023, %v1002
      %v1025 = vpop.permute.xlu0 %1024
      %1028 = vset.pattern.permute.xlu0 0
      %1029 = vperm.xlu0 %1028, %v1003
      %v1030 = vpop.permute.xlu0 %1029
      %1033 = vset.pattern.permute.xlu0 0
      %1034 = vperm.xlu0 %1033, %v1004
      %v1035 = vpop.permute.xlu0 %1034
      %1038 = vset.pattern.permute.xlu0 0
      %1039 = vperm.xlu0 %1038, %v1005
      %v1040 = vpop.permute.xlu0 %1039
      %1043 = vset.pattern.permute.xlu0 0
      %1044 = vperm.xlu0 %1043, %v1006
      %v1045 = vpop.permute.xlu0 %1044
      %v1047 = vmul.f32 %v356, %v1010
      %v1048 = vmul.f32 %v357, %v1015
      %v1049 = vmul.f32 %v358, %v1020
      %v1050 = vmul.f32 %v359, %v1025
      %v1051 = vmul.f32 %v360, %v1030
      %v1052 = vmul.f32 %v361, %v1035
      %v1053 = vmul.f32 %v362, %v1040
      %v1054 = vmul.f32 %v355, %v1045
      %v1055 = vpack.c.bf16 %v1047, %v1047
      %v1056 = vpack.c.bf16 %v1048, %v1048
      %v1057 = vpack.c.bf16 %v1049, %v1049
      %v1058 = vpack.c.bf16 %v1050, %v1050
      %v1059 = vpack.c.bf16 %v1051, %v1051
      %v1060 = vpack.c.bf16 %v1052, %v1052
      %v1061 = vpack.c.bf16 %v1053, %v1053
      %v1062 = vpack.c.bf16 %v1054, %v1054
      %s1063 = scalar_lea.vmem %s3, 512
      %v1064 = vld [vmem:[%s1063] sm:$0xff]
      %v1065 = vld [vmem:[%s1063 + $0x8] sm:$0xff]
      %v1066 = vld [vmem:[%s1063 + $0x10] sm:$0xff]
      %v1067 = vld [vmem:[%s1063 + $0x18] sm:$0xff]
      %v1068 = vld [vmem:[%s1063 + $0x20] sm:$0xff]
      %v1069 = vld [vmem:[%s1063 + $0x28] sm:$0xff]
      %v1070 = vld [vmem:[%s1063 + $0x30] sm:$0xff]
      %v1071 = vld [vmem:[%s1063 + $0x38] sm:$0xff]
      %1073 = vset.pattern.permute.xlu0 0
      %1074 = vperm.xlu0 %1073, %v1064
      %v1075 = vpop.permute.xlu0 %1074
      %1078 = vset.pattern.permute.xlu0 0
      %1079 = vperm.xlu0 %1078, %v1065
      %v1080 = vpop.permute.xlu0 %1079
      %1083 = vset.pattern.permute.xlu0 0
      %1084 = vperm.xlu0 %1083, %v1066
      %v1085 = vpop.permute.xlu0 %1084
      %1088 = vset.pattern.permute.xlu0 0
      %1089 = vperm.xlu0 %1088, %v1067
      %v1090 = vpop.permute.xlu0 %1089
      %1093 = vset.pattern.permute.xlu0 0
      %1094 = vperm.xlu0 %1093, %v1068
      %v1095 = vpop.permute.xlu0 %1094
      %1098 = vset.pattern.permute.xlu0 0
      %1099 = vperm.xlu0 %1098, %v1069
      %v1100 = vpop.permute.xlu0 %1099
      %1103 = vset.pattern.permute.xlu0 0
      %1104 = vperm.xlu0 %1103, %v1070
      %v1105 = vpop.permute.xlu0 %1104
      %1108 = vset.pattern.permute.xlu0 0
      %1109 = vperm.xlu0 %1108, %v1071
      %v1110 = vpop.permute.xlu0 %1109
      %v1112 = vmul.f32 %v670, %v1075
      %v1113 = vmul.f32 %v669, %v1080
      %v1114 = vmul.f32 %v668, %v1085
      %v1115 = vmul.f32 %v667, %v1090
      %v1116 = vmul.f32 %v666, %v1095
      %v1117 = vmul.f32 %v665, %v1100
      %v1118 = vmul.f32 %v672, %v1105
      %v1119 = vmul.f32 %v671, %v1110
      %v1120 = vpack.c.bf16 %v1112, %v1112
      %v1121 = vpack.c.bf16 %v1113, %v1113
      %v1122 = vpack.c.bf16 %v1114, %v1114
      %v1123 = vpack.c.bf16 %v1115, %v1115
      %v1124 = vpack.c.bf16 %v1116, %v1116
      %v1125 = vpack.c.bf16 %v1117, %v1117
      %v1126 = vpack.c.bf16 %v1118, %v1118
      %v1127 = vpack.c.bf16 %v1119, %v1119
      %v1136 = vunpack.c.l.b16 %v583
      %v1137 = vunpack.c.l.b16 %v584
      %v1138 = vunpack.c.l.b16 %v585
      %v1139 = vunpack.c.l.b16 %v586
      %v1140 = vunpack.c.l.b16 %v587
      %v1141 = vunpack.c.l.b16 %v588
      %v1142 = vunpack.c.l.b16 %v589
      %v1143 = vunpack.c.l.b16 %v590
      %v1144 = vpack.c.b16 %v1137, %v1136
      %v1145 = vpack.c.b16 %v1139, %v1138
      %v1146 = vpack.c.b16 %v1141, %v1140
      %v1147 = vpack.c.b16 %v1143, %v1142
      %v1160 = vunpack.c.l.b16 %v648
      %v1161 = vunpack.c.l.b16 %v649
      %v1162 = vunpack.c.l.b16 %v650
      %v1163 = vunpack.c.l.b16 %v651
      %v1164 = vunpack.c.l.b16 %v652
      %v1165 = vunpack.c.l.b16 %v653
      %v1166 = vunpack.c.l.b16 %v654
      %v1167 = vunpack.c.l.b16 %v655
      %v1168 = vpack.c.b16 %v1161, %v1160
      %v1169 = vpack.c.b16 %v1163, %v1162
      %v1170 = vpack.c.b16 %v1165, %v1164
      %v1171 = vpack.c.b16 %v1167, %v1166
      %v1184 = vunpack.c.l.b16 %v730
      %v1185 = vunpack.c.l.b16 %v731
      %v1186 = vunpack.c.l.b16 %v732
      %v1187 = vunpack.c.l.b16 %v733
      %v1188 = vunpack.c.l.b16 %v734
      %v1189 = vunpack.c.l.b16 %v735
      %v1190 = vunpack.c.l.b16 %v736
      %v1191 = vunpack.c.l.b16 %v737
      %v1192 = vpack.c.b16 %v1185, %v1184
      %v1193 = vpack.c.b16 %v1187, %v1186
      %v1194 = vpack.c.b16 %v1189, %v1188
      %v1195 = vpack.c.b16 %v1191, %v1190
      %v1208 = vunpack.c.l.b16 %v795
      %v1209 = vunpack.c.l.b16 %v796
      %v1210 = vunpack.c.l.b16 %v797
      %v1211 = vunpack.c.l.b16 %v798
      %v1212 = vunpack.c.l.b16 %v799
      %v1213 = vunpack.c.l.b16 %v800
      %v1214 = vunpack.c.l.b16 %v801
      %v1215 = vunpack.c.l.b16 %v802
      %v1216 = vpack.c.b16 %v1209, %v1208
      %v1217 = vpack.c.b16 %v1211, %v1210
      %v1218 = vpack.c.b16 %v1213, %v1212
      %v1219 = vpack.c.b16 %v1215, %v1214
      %v1232 = vunpack.c.l.b16 %v860
      %v1233 = vunpack.c.l.b16 %v861
      %v1234 = vunpack.c.l.b16 %v862
      %v1235 = vunpack.c.l.b16 %v863
      %v1236 = vunpack.c.l.b16 %v864
      %v1237 = vunpack.c.l.b16 %v865
      %v1238 = vunpack.c.l.b16 %v866
      %v1239 = vunpack.c.l.b16 %v867
      %v1240 = vpack.c.b16 %v1233, %v1232
      %v1241 = vpack.c.b16 %v1235, %v1234
      %v1242 = vpack.c.b16 %v1237, %v1236
      %v1243 = vpack.c.b16 %v1239, %v1238
      %v1256 = vunpack.c.l.b16 %v925
      %v1257 = vunpack.c.l.b16 %v926
      %v1258 = vunpack.c.l.b16 %v927
      %v1259 = vunpack.c.l.b16 %v928
      %v1260 = vunpack.c.l.b16 %v929
      %v1261 = vunpack.c.l.b16 %v930
      %v1262 = vunpack.c.l.b16 %v931
      %v1263 = vunpack.c.l.b16 %v932
      %v1264 = vpack.c.b16 %v1257, %v1256
      %v1265 = vpack.c.b16 %v1259, %v1258
      %v1266 = vpack.c.b16 %v1261, %v1260
      %v1267 = vpack.c.b16 %v1263, %v1262
      %v1280 = vunpack.c.l.b16 %v990
      %v1281 = vunpack.c.l.b16 %v991
      %v1282 = vunpack.c.l.b16 %v992
      %v1283 = vunpack.c.l.b16 %v993
      %v1284 = vunpack.c.l.b16 %v994
      %v1285 = vunpack.c.l.b16 %v995
      %v1286 = vunpack.c.l.b16 %v996
      %v1287 = vunpack.c.l.b16 %v997
      %v1288 = vpack.c.b16 %v1281, %v1280
      %v1289 = vpack.c.b16 %v1283, %v1282
      %v1290 = vpack.c.b16 %v1285, %v1284
      %v1291 = vpack.c.b16 %v1287, %v1286
      %v1304 = vunpack.c.l.b16 %v1055
      %v1305 = vunpack.c.l.b16 %v1056
      %v1306 = vunpack.c.l.b16 %v1057
      %v1307 = vunpack.c.l.b16 %v1058
      %v1308 = vunpack.c.l.b16 %v1059
      %v1309 = vunpack.c.l.b16 %v1060
      %v1310 = vunpack.c.l.b16 %v1061
      %v1311 = vunpack.c.l.b16 %v1062
      %v1312 = vpack.c.b16 %v1305, %v1304
      %v1313 = vpack.c.b16 %v1307, %v1306
      %v1314 = vpack.c.b16 %v1309, %v1308
      %v1315 = vpack.c.b16 %v1311, %v1310
      %v1328 = vunpack.c.l.b16 %v1120
      %v1329 = vunpack.c.l.b16 %v1121
      %v1330 = vunpack.c.l.b16 %v1122
      %v1331 = vunpack.c.l.b16 %v1123
      %v1332 = vunpack.c.l.b16 %v1124
      %v1333 = vunpack.c.l.b16 %v1125
      %v1334 = vunpack.c.l.b16 %v1126
      %v1335 = vunpack.c.l.b16 %v1127
      %v1336 = vpack.c.b16 %v1329, %v1328
      %v1337 = vpack.c.b16 %v1331, %v1330
      %v1338 = vpack.c.b16 %v1333, %v1332
      %v1339 = vpack.c.b16 %v1335, %v1334
      %v1345 = vperm.slane %v507, 0
      %v1491 = vunpack.c.l.b16 %v363
      %v1492 = vunpack.c.l.b16 %v364
      %v1493 = vunpack.c.l.b16 %v365
      %v1494 = vunpack.c.l.b16 %v366
      %v1495 = vunpack.c.l.b16 %v367
      %v1496 = vunpack.c.l.b16 %v368
      %v1497 = vunpack.c.l.b16 %v369
      %v1498 = vunpack.c.l.b16 %v370
      %v1499 = vunpack.c.l.b16 %v371
      %v1500 = vunpack.c.l.b16 %v372
      %v1501 = vunpack.c.l.b16 %v373
      %v1502 = vunpack.c.l.b16 %v374
      %v1503 = vunpack.c.l.b16 %v375
      %v1504 = vunpack.c.l.b16 %v376
      %v1505 = vunpack.c.l.b16 %v377
      %v1506 = vunpack.c.l.b16 %v378
      %v1507 = vunpack.c.l.b16 %v379
      %v1508 = vunpack.c.l.b16 %v380
      %v1509 = vunpack.c.l.b16 %v381
      %v1510 = vunpack.c.l.b16 %v382
      %v1511 = vunpack.c.l.b16 %v383
      %v1512 = vunpack.c.l.b16 %v384
      %v1513 = vunpack.c.l.b16 %v385
      %v1514 = vunpack.c.l.b16 %v386
      %v1515 = vunpack.c.l.b16 %v387
      %v1516 = vunpack.c.l.b16 %v388
      %v1517 = vunpack.c.l.b16 %v389
      %v1518 = vunpack.c.l.b16 %v390
      %v1519 = vunpack.c.l.b16 %v391
      %v1520 = vunpack.c.l.b16 %v392
      %v1521 = vunpack.c.l.b16 %v393
      %v1522 = vunpack.c.l.b16 %v394
      %v1523 = vunpack.c.l.b16 %v395
      %v1524 = vunpack.c.l.b16 %v396
      %v1525 = vunpack.c.l.b16 %v397
      %v1526 = vunpack.c.l.b16 %v398
      %v1527 = vunpack.c.l.b16 %v399
      %v1528 = vunpack.c.l.b16 %v400
      %v1529 = vunpack.c.l.b16 %v401
      %v1530 = vunpack.c.l.b16 %v402
      %v1531 = vunpack.c.l.b16 %v403
      %v1532 = vunpack.c.l.b16 %v404
      %v1533 = vunpack.c.l.b16 %v405
      %v1534 = vunpack.c.l.b16 %v406
      %v1535 = vunpack.c.l.b16 %v407
      %v1536 = vunpack.c.l.b16 %v408
      %v1537 = vunpack.c.l.b16 %v409
      %v1538 = vunpack.c.l.b16 %v410
      %v1539 = vunpack.c.l.b16 %v411
      %v1540 = vunpack.c.l.b16 %v412
      %v1541 = vunpack.c.l.b16 %v413
      %v1542 = vunpack.c.l.b16 %v414
      %v1543 = vunpack.c.l.b16 %v415
      %v1544 = vunpack.c.l.b16 %v416
      %v1545 = vunpack.c.l.b16 %v417
      %v1546 = vunpack.c.l.b16 %v418
      %v1547 = vunpack.c.l.b16 %v419
      %v1548 = vunpack.c.l.b16 %v420
      %v1549 = vunpack.c.l.b16 %v421
      %v1550 = vunpack.c.l.b16 %v422
      %v1551 = vunpack.c.l.b16 %v423
      %v1552 = vunpack.c.l.b16 %v424
      %v1553 = vunpack.c.l.b16 %v425
      %v1554 = vunpack.c.l.b16 %v426
      %v1555 = vunpack.c.l.b16 %v427
      %v1556 = vunpack.c.l.b16 %v428
      %v1557 = vunpack.c.l.b16 %v429
      %v1558 = vunpack.c.l.b16 %v430
      %v1559 = vunpack.c.l.b16 %v431
      %v1560 = vunpack.c.l.b16 %v432
      %v1561 = vunpack.c.l.b16 %v433
      %v1562 = vunpack.c.l.b16 %v434
      %v1563 = vunpack.c.l.b16 %v435
      %v1564 = vunpack.c.l.b16 %v436
      %v1565 = vunpack.c.l.b16 %v437
      %v1566 = vunpack.c.l.b16 %v438
      %v1567 = vunpack.c.l.b16 %v439
      %v1568 = vunpack.c.l.b16 %v440
      %v1569 = vunpack.c.l.b16 %v441
      %v1570 = vunpack.c.l.b16 %v442
      %v1571 = vunpack.c.l.b16 %v443
      %v1572 = vunpack.c.l.b16 %v444
      %v1573 = vunpack.c.l.b16 %v445
      %v1574 = vunpack.c.l.b16 %v446
      %v1575 = vunpack.c.l.b16 %v447
      %v1576 = vunpack.c.l.b16 %v448
      %v1577 = vunpack.c.l.b16 %v449
      %v1578 = vunpack.c.l.b16 %v450
      %v1579 = vunpack.c.l.b16 %v451
      %v1580 = vunpack.c.l.b16 %v452
      %v1581 = vunpack.c.l.b16 %v453
      %v1582 = vunpack.c.l.b16 %v454
      %v1583 = vunpack.c.l.b16 %v455
      %v1584 = vunpack.c.l.b16 %v456
      %v1585 = vunpack.c.l.b16 %v457
      %v1586 = vunpack.c.l.b16 %v458
      %v1587 = vunpack.c.l.b16 %v459
      %v1588 = vunpack.c.l.b16 %v460
      %v1589 = vunpack.c.l.b16 %v461
      %v1590 = vunpack.c.l.b16 %v462
      %v1591 = vunpack.c.l.b16 %v463
      %v1592 = vunpack.c.l.b16 %v464
      %v1593 = vunpack.c.l.b16 %v465
      %v1594 = vunpack.c.l.b16 %v466
      %v1595 = vunpack.c.l.b16 %v467
      %v1596 = vunpack.c.l.b16 %v468
      %v1597 = vunpack.c.l.b16 %v469
      %v1598 = vunpack.c.l.b16 %v470
      %v1599 = vunpack.c.l.b16 %v471
      %v1600 = vunpack.c.l.b16 %v472
      %v1601 = vunpack.c.l.b16 %v473
      %v1602 = vunpack.c.l.b16 %v474
      %v1603 = vunpack.c.l.b16 %v475
      %v1604 = vunpack.c.l.b16 %v476
      %v1605 = vunpack.c.l.b16 %v477
      %v1606 = vunpack.c.l.b16 %v478
      %v1607 = vunpack.c.l.b16 %v479
      %v1608 = vunpack.c.l.b16 %v480
      %v1609 = vunpack.c.l.b16 %v481
      %v1610 = vunpack.c.l.b16 %v482
      %v1611 = vunpack.c.l.b16 %v483
      %v1612 = vunpack.c.l.b16 %v484
      %v1613 = vunpack.c.l.b16 %v485
      %v1614 = vunpack.c.l.b16 %v486
      %v1615 = vunpack.c.l.b16 %v487
      %v1616 = vunpack.c.l.b16 %v488
      %v1617 = vunpack.c.l.b16 %v489
      %v1618 = vunpack.c.l.b16 %v490
      %v1619 = vunpack.c.l.b16 %v491
      %v1620 = vunpack.c.l.b16 %v492
      %v1621 = vunpack.c.l.b16 %v493
      %v1622 = vunpack.c.l.b16 %v494
      %v1623 = vunpack.c.l.b16 %v495
      %v1624 = vunpack.c.l.b16 %v496
      %v1625 = vunpack.c.l.b16 %v497
      %v1626 = vunpack.c.l.b16 %v498
      %v1627 = vunpack.c.l.b16 %v499
      %v1628 = vunpack.c.l.b16 %v500
      %v1629 = vunpack.c.l.b16 %v501
      %v1630 = vunpack.c.l.b16 %v502
      %v1631 = vunpack.c.l.b16 %v503
      %v1632 = vunpack.c.l.b16 %v504
      %v1633 = vunpack.c.l.b16 %v505
      %v1634 = vunpack.c.l.b16 %v506
      %v1635 = vpack.c.b16 %v1492, %v1491
      %v1636 = vpack.c.b16 %v1494, %v1493
      %v1637 = vpack.c.b16 %v1496, %v1495
      %v1638 = vpack.c.b16 %v1498, %v1497
      %v1639 = vpack.c.b16 %v1500, %v1499
      %v1640 = vpack.c.b16 %v1502, %v1501
      %v1641 = vpack.c.b16 %v1504, %v1503
      %v1642 = vpack.c.b16 %v1506, %v1505
      %v1643 = vpack.c.b16 %v1508, %v1507
      %v1644 = vpack.c.b16 %v1510, %v1509
      %v1645 = vpack.c.b16 %v1512, %v1511
      %v1646 = vpack.c.b16 %v1514, %v1513
      %v1647 = vpack.c.b16 %v1516, %v1515
      %v1648 = vpack.c.b16 %v1518, %v1517
      %v1649 = vpack.c.b16 %v1520, %v1519
      %v1650 = vpack.c.b16 %v1522, %v1521
      %v1651 = vpack.c.b16 %v1524, %v1523
      %v1652 = vpack.c.b16 %v1526, %v1525
      %v1653 = vpack.c.b16 %v1528, %v1527
      %v1654 = vpack.c.b16 %v1530, %v1529
      %v1655 = vpack.c.b16 %v1532, %v1531
      %v1656 = vpack.c.b16 %v1534, %v1533
      %v1657 = vpack.c.b16 %v1536, %v1535
      %v1658 = vpack.c.b16 %v1538, %v1537
      %v1659 = vpack.c.b16 %v1540, %v1539
      %v1660 = vpack.c.b16 %v1542, %v1541
      %v1661 = vpack.c.b16 %v1544, %v1543
      %v1662 = vpack.c.b16 %v1546, %v1545
      %v1663 = vpack.c.b16 %v1548, %v1547
      %v1664 = vpack.c.b16 %v1550, %v1549
      %v1665 = vpack.c.b16 %v1552, %v1551
      %v1666 = vpack.c.b16 %v1554, %v1553
      %v1667 = vpack.c.b16 %v1556, %v1555
      %v1668 = vpack.c.b16 %v1558, %v1557
      %v1669 = vpack.c.b16 %v1560, %v1559
      %v1670 = vpack.c.b16 %v1562, %v1561
      %v1671 = vpack.c.b16 %v1564, %v1563
      %v1672 = vpack.c.b16 %v1566, %v1565
      %v1673 = vpack.c.b16 %v1568, %v1567
      %v1674 = vpack.c.b16 %v1570, %v1569
      %v1675 = vpack.c.b16 %v1572, %v1571
      %v1676 = vpack.c.b16 %v1574, %v1573
      %v1677 = vpack.c.b16 %v1576, %v1575
      %v1678 = vpack.c.b16 %v1578, %v1577
      %v1679 = vpack.c.b16 %v1580, %v1579
      %v1680 = vpack.c.b16 %v1582, %v1581
      %v1681 = vpack.c.b16 %v1584, %v1583
      %v1682 = vpack.c.b16 %v1586, %v1585
      %v1683 = vpack.c.b16 %v1588, %v1587
      %v1684 = vpack.c.b16 %v1590, %v1589
      %v1685 = vpack.c.b16 %v1592, %v1591
      %v1686 = vpack.c.b16 %v1594, %v1593
      %v1687 = vpack.c.b16 %v1596, %v1595
      %v1688 = vpack.c.b16 %v1598, %v1597
      %v1689 = vpack.c.b16 %v1600, %v1599
      %v1690 = vpack.c.b16 %v1602, %v1601
      %v1691 = vpack.c.b16 %v1604, %v1603
      %v1692 = vpack.c.b16 %v1606, %v1605
      %v1693 = vpack.c.b16 %v1608, %v1607
      %v1694 = vpack.c.b16 %v1610, %v1609
      %v1695 = vpack.c.b16 %v1612, %v1611
      %v1696 = vpack.c.b16 %v1614, %v1613
      %v1697 = vpack.c.b16 %v1616, %v1615
      %v1698 = vpack.c.b16 %v1618, %v1617
      %v1699 = vpack.c.b16 %v1620, %v1619
      %v1700 = vpack.c.b16 %v1622, %v1621
      %v1701 = vpack.c.b16 %v1624, %v1623
      %v1702 = vpack.c.b16 %v1626, %v1625
      %v1703 = vpack.c.b16 %v1628, %v1627
      %v1704 = vpack.c.b16 %v1630, %v1629
      %v1705 = vpack.c.b16 %v1632, %v1631
      %v1706 = vpack.c.b16 %v1634, %v1633
      %1779 = vmatpush.bf16.msra.mxu0 %v1642
      %1780 = vmatpush.bf16.msra.mxu0 %v1641
      %1781 = vmatpush.bf16.msra.mxu0 %v1640
      %1782 = vmatpush.bf16.msra.mxu0 %v1639
      %1783 = vmatpush.bf16.msra.mxu0 %v1638
      %1784 = vmatpush.bf16.msra.mxu0 %v1637
      %1785 = vmatpush.bf16.msra.mxu0 %v1636
      %1786 = vmatpush.bf16.msra.mxu0 %v1635
      %1787 = vmatmul.bf16.gmra.mxu0 %v1144
      %v1788 = vpop.f32.mrf.mxu0
      %v1789 = vadd.f32 %v1345, %v1788
      %v1790 = vpop.f32.mrf.mxu0
      %v1791 = vadd.f32 %v1345, %v1790
      %1792 = vmatmul.bf16.gmra.mxu0 %v1145
      %v1793 = vpop.f32.mrf.mxu0
      %v1794 = vadd.f32 %v1345, %v1793
      %v1795 = vpop.f32.mrf.mxu0
      %v1796 = vadd.f32 %v1345, %v1795
      %1797 = vmatmul.bf16.gmra.mxu0 %v1146
      %v1798 = vpop.f32.mrf.mxu0
      %v1799 = vadd.f32 %v1345, %v1798
      %v1800 = vpop.f32.mrf.mxu0
      %v1801 = vadd.f32 %v1345, %v1800
      %1802 = vmatmul.bf16.gmra.mxu0 %v1147
      %v1803 = vpop.f32.mrf.mxu0
      %v1804 = vadd.f32 %v1345, %v1803
      %v1805 = vpop.f32.mrf.mxu0
      %v1806 = vadd.f32 %v1345, %v1805
      %1807 = vdwg.mxu0
      %1808 = vmatpush.bf16.msra.mxu0 %v1650
      %1809 = vmatpush.bf16.msra.mxu0 %v1649
      %1810 = vmatpush.bf16.msra.mxu0 %v1648
      %1811 = vmatpush.bf16.msra.mxu0 %v1647
      %1812 = vmatpush.bf16.msra.mxu0 %v1646
      %1813 = vmatpush.bf16.msra.mxu0 %v1645
      %1814 = vmatpush.bf16.msra.mxu0 %v1644
      %1815 = vmatpush.bf16.msra.mxu0 %v1643
      %1816 = vmatmul.bf16.gmra.mxu0 %v1168
      %v1817 = vpop.f32.mrf.mxu0
      %v1818 = vadd.f32 %v1789, %v1817
      %v1819 = vpop.f32.mrf.mxu0
      %v1820 = vadd.f32 %v1791, %v1819
      %1821 = vmatmul.bf16.gmra.mxu0 %v1169
      %v1822 = vpop.f32.mrf.mxu0
      %v1823 = vadd.f32 %v1794, %v1822
      %v1824 = vpop.f32.mrf.mxu0
      %v1825 = vadd.f32 %v1796, %v1824
      %1826 = vmatmul.bf16.gmra.mxu0 %v1170
      %v1827 = vpop.f32.mrf.mxu0
      %v1828 = vadd.f32 %v1799, %v1827
      %v1829 = vpop.f32.mrf.mxu0
      %v1830 = vadd.f32 %v1801, %v1829
      %1831 = vmatmul.bf16.gmra.mxu0 %v1171
      %v1832 = vpop.f32.mrf.mxu0
      %v1833 = vadd.f32 %v1804, %v1832
      %v1834 = vpop.f32.mrf.mxu0
      %v1835 = vadd.f32 %v1806, %v1834
      %1836 = vdwg.mxu0
      %1837 = vmatpush.bf16.msra.mxu0 %v1658
      %1838 = vmatpush.bf16.msra.mxu0 %v1657
      %1839 = vmatpush.bf16.msra.mxu0 %v1656
      %1840 = vmatpush.bf16.msra.mxu0 %v1655
      %1841 = vmatpush.bf16.msra.mxu0 %v1654
      %1842 = vmatpush.bf16.msra.mxu0 %v1653
      %1843 = vmatpush.bf16.msra.mxu0 %v1652
      %1844 = vmatpush.bf16.msra.mxu0 %v1651
      %1845 = vmatmul.bf16.gmra.mxu0 %v1192
      %v1846 = vpop.f32.mrf.mxu0
      %v1847 = vadd.f32 %v1818, %v1846
      %v1848 = vpop.f32.mrf.mxu0
      %v1849 = vadd.f32 %v1820, %v1848
      %1850 = vmatmul.bf16.gmra.mxu0 %v1193
      %v1851 = vpop.f32.mrf.mxu0
      %v1852 = vadd.f32 %v1823, %v1851
      %v1853 = vpop.f32.mrf.mxu0
      %v1854 = vadd.f32 %v1825, %v1853
      %1855 = vmatmul.bf16.gmra.mxu0 %v1194
      %v1856 = vpop.f32.mrf.mxu0
      %v1857 = vadd.f32 %v1828, %v1856
      %v1858 = vpop.f32.mrf.mxu0
      %v1859 = vadd.f32 %v1830, %v1858
      %1860 = vmatmul.bf16.gmra.mxu0 %v1195
      %v1861 = vpop.f32.mrf.mxu0
      %v1862 = vadd.f32 %v1833, %v1861
      %v1863 = vpop.f32.mrf.mxu0
      %v1864 = vadd.f32 %v1835, %v1863
      %1865 = vdwg.mxu0
      %1866 = vmatpush.bf16.msra.mxu0 %v1666
      %1867 = vmatpush.bf16.msra.mxu0 %v1665
      %1868 = vmatpush.bf16.msra.mxu0 %v1664
      %1869 = vmatpush.bf16.msra.mxu0 %v1663
      %1870 = vmatpush.bf16.msra.mxu0 %v1662
      %1871 = vmatpush.bf16.msra.mxu0 %v1661
      %1872 = vmatpush.bf16.msra.mxu0 %v1660
      %1873 = vmatpush.bf16.msra.mxu0 %v1659
      %1874 = vmatmul.bf16.gmra.mxu0 %v1216
      %v1875 = vpop.f32.mrf.mxu0
      %v1876 = vadd.f32 %v1847, %v1875
      %v1877 = vpop.f32.mrf.mxu0
      %v1878 = vadd.f32 %v1849, %v1877
      %1879 = vmatmul.bf16.gmra.mxu0 %v1217
      %v1880 = vpop.f32.mrf.mxu0
      %v1881 = vadd.f32 %v1852, %v1880
      %v1882 = vpop.f32.mrf.mxu0
      %v1883 = vadd.f32 %v1854, %v1882
      %1884 = vmatmul.bf16.gmra.mxu0 %v1218
      %v1885 = vpop.f32.mrf.mxu0
      %v1886 = vadd.f32 %v1857, %v1885
      %v1887 = vpop.f32.mrf.mxu0
      %v1888 = vadd.f32 %v1859, %v1887
      %1889 = vmatmul.bf16.gmra.mxu0 %v1219
      %v1890 = vpop.f32.mrf.mxu0
      %v1891 = vadd.f32 %v1862, %v1890
      %v1892 = vpop.f32.mrf.mxu0
      %v1893 = vadd.f32 %v1864, %v1892
      %1894 = vdwg.mxu0
      %1895 = vmatpush.bf16.msra.mxu0 %v1674
      %1896 = vmatpush.bf16.msra.mxu0 %v1673
      %1897 = vmatpush.bf16.msra.mxu0 %v1672
      %1898 = vmatpush.bf16.msra.mxu0 %v1671
      %1899 = vmatpush.bf16.msra.mxu0 %v1670
      %1900 = vmatpush.bf16.msra.mxu0 %v1669
      %1901 = vmatpush.bf16.msra.mxu0 %v1668
      %1902 = vmatpush.bf16.msra.mxu0 %v1667
      %1903 = vmatmul.bf16.gmra.mxu0 %v1240
      %v1904 = vpop.f32.mrf.mxu0
      %v1905 = vadd.f32 %v1876, %v1904
      %v1906 = vpop.f32.mrf.mxu0
      %v1907 = vadd.f32 %v1878, %v1906
      %1908 = vmatmul.bf16.gmra.mxu0 %v1241
      %v1909 = vpop.f32.mrf.mxu0
      %v1910 = vadd.f32 %v1881, %v1909
      %v1911 = vpop.f32.mrf.mxu0
      %v1912 = vadd.f32 %v1883, %v1911
      %1913 = vmatmul.bf16.gmra.mxu0 %v1242
      %v1914 = vpop.f32.mrf.mxu0
      %v1915 = vadd.f32 %v1886, %v1914
      %v1916 = vpop.f32.mrf.mxu0
      %v1917 = vadd.f32 %v1888, %v1916
      %1918 = vmatmul.bf16.gmra.mxu0 %v1243
      %v1919 = vpop.f32.mrf.mxu0
      %v1920 = vadd.f32 %v1891, %v1919
      %v1921 = vpop.f32.mrf.mxu0
      %v1922 = vadd.f32 %v1893, %v1921
      %1923 = vdwg.mxu0
      %1924 = vmatpush.bf16.msra.mxu0 %v1682
      %1925 = vmatpush.bf16.msra.mxu0 %v1681
      %1926 = vmatpush.bf16.msra.mxu0 %v1680
      %1927 = vmatpush.bf16.msra.mxu0 %v1679
      %1928 = vmatpush.bf16.msra.mxu0 %v1678
      %1929 = vmatpush.bf16.msra.mxu0 %v1677
      %1930 = vmatpush.bf16.msra.mxu0 %v1676
      %1931 = vmatpush.bf16.msra.mxu0 %v1675
      %1932 = vmatmul.bf16.gmra.mxu0 %v1264
      %v1933 = vpop.f32.mrf.mxu0
      %v1934 = vadd.f32 %v1905, %v1933
      %v1935 = vpop.f32.mrf.mxu0
      %v1936 = vadd.f32 %v1907, %v1935
      %1937 = vmatmul.bf16.gmra.mxu0 %v1265
      %v1938 = vpop.f32.mrf.mxu0
      %v1939 = vadd.f32 %v1910, %v1938
      %v1940 = vpop.f32.mrf.mxu0
      %v1941 = vadd.f32 %v1912, %v1940
      %1942 = vmatmul.bf16.gmra.mxu0 %v1266
      %v1943 = vpop.f32.mrf.mxu0
      %v1944 = vadd.f32 %v1915, %v1943
      %v1945 = vpop.f32.mrf.mxu0
      %v1946 = vadd.f32 %v1917, %v1945
      %1947 = vmatmul.bf16.gmra.mxu0 %v1267
      %v1948 = vpop.f32.mrf.mxu0
      %v1949 = vadd.f32 %v1920, %v1948
      %v1950 = vpop.f32.mrf.mxu0
      %v1951 = vadd.f32 %v1922, %v1950
      %1952 = vdwg.mxu0
      %1953 = vmatpush.bf16.msra.mxu0 %v1690
      %1954 = vmatpush.bf16.msra.mxu0 %v1689
      %1955 = vmatpush.bf16.msra.mxu0 %v1688
      %1956 = vmatpush.bf16.msra.mxu0 %v1687
      %1957 = vmatpush.bf16.msra.mxu0 %v1686
      %1958 = vmatpush.bf16.msra.mxu0 %v1685
      %1959 = vmatpush.bf16.msra.mxu0 %v1684
      %1960 = vmatpush.bf16.msra.mxu0 %v1683
      %1961 = vmatmul.bf16.gmra.mxu0 %v1288
      %v1962 = vpop.f32.mrf.mxu0
      %v1963 = vadd.f32 %v1934, %v1962
      %v1964 = vpop.f32.mrf.mxu0
      %v1965 = vadd.f32 %v1936, %v1964
      %1966 = vmatmul.bf16.gmra.mxu0 %v1289
      %v1967 = vpop.f32.mrf.mxu0
      %v1968 = vadd.f32 %v1939, %v1967
      %v1969 = vpop.f32.mrf.mxu0
      %v1970 = vadd.f32 %v1941, %v1969
      %1971 = vmatmul.bf16.gmra.mxu0 %v1290
      %v1972 = vpop.f32.mrf.mxu0
      %v1973 = vadd.f32 %v1944, %v1972
      %v1974 = vpop.f32.mrf.mxu0
      %v1975 = vadd.f32 %v1946, %v1974
      %1976 = vmatmul.bf16.gmra.mxu0 %v1291
      %v1977 = vpop.f32.mrf.mxu0
      %v1978 = vadd.f32 %v1949, %v1977
      %v1979 = vpop.f32.mrf.mxu0
      %v1980 = vadd.f32 %v1951, %v1979
      %1981 = vdwg.mxu0
      %1982 = vmatpush.bf16.msra.mxu0 %v1698
      %1983 = vmatpush.bf16.msra.mxu0 %v1697
      %1984 = vmatpush.bf16.msra.mxu0 %v1696
      %1985 = vmatpush.bf16.msra.mxu0 %v1695
      %1986 = vmatpush.bf16.msra.mxu0 %v1694
      %1987 = vmatpush.bf16.msra.mxu0 %v1693
      %1988 = vmatpush.bf16.msra.mxu0 %v1692
      %1989 = vmatpush.bf16.msra.mxu0 %v1691
      %1990 = vmatmul.bf16.gmra.mxu0 %v1312
      %v1991 = vpop.f32.mrf.mxu0
      %v1992 = vadd.f32 %v1963, %v1991
      %v1993 = vpop.f32.mrf.mxu0
      %v1994 = vadd.f32 %v1965, %v1993
      %1995 = vmatmul.bf16.gmra.mxu0 %v1313
      %v1996 = vpop.f32.mrf.mxu0
      %v1997 = vadd.f32 %v1968, %v1996
      %v1998 = vpop.f32.mrf.mxu0
      %v1999 = vadd.f32 %v1970, %v1998
      %2000 = vmatmul.bf16.gmra.mxu0 %v1314
      %v2001 = vpop.f32.mrf.mxu0
      %v2002 = vadd.f32 %v1973, %v2001
      %v2003 = vpop.f32.mrf.mxu0
      %v2004 = vadd.f32 %v1975, %v2003
      %2005 = vmatmul.bf16.gmra.mxu0 %v1315
      %v2006 = vpop.f32.mrf.mxu0
      %v2007 = vadd.f32 %v1978, %v2006
      %v2008 = vpop.f32.mrf.mxu0
      %v2009 = vadd.f32 %v1980, %v2008
      %2010 = vdwg.mxu0
      %2011 = vmatpush.bf16.msra.mxu0 %v1706
      %2012 = vmatpush.bf16.msra.mxu0 %v1705
      %2013 = vmatpush.bf16.msra.mxu0 %v1704
      %2014 = vmatpush.bf16.msra.mxu0 %v1703
      %2015 = vmatpush.bf16.msra.mxu0 %v1702
      %2016 = vmatpush.bf16.msra.mxu0 %v1701
      %2017 = vmatpush.bf16.msra.mxu0 %v1700
      %2018 = vmatpush.bf16.msra.mxu0 %v1699
      %2019 = vmatmul.bf16.gmra.mxu0 %v1336
      %v2020 = vpop.f32.mrf.mxu0
      %v2021 = vadd.f32 %v1992, %v2020
      %v2022 = vpop.f32.mrf.mxu0
      %v2023 = vadd.f32 %v1994, %v2022
      %2024 = vmatmul.bf16.gmra.mxu0 %v1337
      %v2025 = vpop.f32.mrf.mxu0
      %v2026 = vadd.f32 %v1997, %v2025
      %v2027 = vpop.f32.mrf.mxu0
      %v2028 = vadd.f32 %v1999, %v2027
      %2029 = vmatmul.bf16.gmra.mxu0 %v1338
      %v2030 = vpop.f32.mrf.mxu0
      %v2031 = vadd.f32 %v2002, %v2030
      %v2032 = vpop.f32.mrf.mxu0
      %v2033 = vadd.f32 %v2004, %v2032
      %2034 = vmatmul.bf16.gmra.mxu0 %v1339
      %v2035 = vpop.f32.mrf.mxu0
      %v2036 = vadd.f32 %v2007, %v2035
      %v2037 = vpop.f32.mrf.mxu0
      %v2038 = vadd.f32 %v2009, %v2037
      %2039 = vdwg.mxu0
      %2040 = vst [vmem:[%s316] sm:$0xff] %v2021
      %2041 = vst [vmem:[%s316 + $0x8] sm:$0xff] %v2023
      %2042 = vst [vmem:[%s316 + $0x10] sm:$0xff] %v2026
      %2043 = vst [vmem:[%s316 + $0x18] sm:$0xff] %v2028
      %2044 = vst [vmem:[%s316 + $0x20] sm:$0xff] %v2031
      %2045 = vst [vmem:[%s316 + $0x28] sm:$0xff] %v2033
      %2046 = vst [vmem:[%s316 + $0x30] sm:$0xff] %v2036
      %2047 = vst [vmem:[%s316 + $0x38] sm:$0xff] %v2038
      %v2048 = vadd.f32 %v2021, %v2023
      %v2049 = vadd.f32 %v2048, %v2026
      %v2050 = vadd.f32 %v2049, %v2028
      %v2051 = vadd.f32 %v2050, %v2031
      %v2052 = vadd.f32 %v2051, %v2033
      %v2053 = vadd.f32 %v2052, %v2036
      %v2054 = vadd.f32 %v2053, %v2038
      %v2055 = vrot.slane %v2054, 4
      %v2056 = vadd.f32 %v2054, %v2055
      %v2057 = vrot.slane %v2056, 2
      %v2058 = vadd.f32 %v2056, %v2057
      %v2059 = vrot.slane %v2058, 1
      %v2060 = vadd.f32 %v2058, %v2059
      %2061 = vst [vmem:[%s319] sm:$0x1] %v2060
      %v2062 = vmul.f32 %v2021, %v2021
      %v2063 = vmul.f32 %v2023, %v2023
      %v2064 = vmul.f32 %v2026, %v2026
      %v2065 = vmul.f32 %v2028, %v2028
      %v2066 = vmul.f32 %v2031, %v2031
      %v2067 = vmul.f32 %v2033, %v2033
      %v2068 = vmul.f32 %v2036, %v2036
      %v2069 = vmul.f32 %v2038, %v2038
      %v2070 = vadd.f32 %v2062, %v2063
      %v2071 = vadd.f32 %v2070, %v2064
      %v2072 = vadd.f32 %v2071, %v2065
      %v2073 = vadd.f32 %v2072, %v2066
      %v2074 = vadd.f32 %v2073, %v2067
      %v2075 = vadd.f32 %v2074, %v2068
      %v2076 = vadd.f32 %v2075, %v2069
      %v2077 = vrot.slane %v2076, 4
      %v2078 = vadd.f32 %v2076, %v2077
      %v2079 = vrot.slane %v2078, 2
      %v2080 = vadd.f32 %v2078, %v2079
      %v2081 = vrot.slane %v2080, 1
      %v2082 = vadd.f32 %v2080, %v2081
      %2083 = vst [vmem:[%s322] sm:$0x1] %v2082
      %p2084 = scmp.lt.s32.totalorder %s20, 1
      %s2085 = scalar_select %p2084, %s20, 1
      %s2086 = smul.addr %s2085, 8
      %s2087 = smul.addr %s2086, 8
      %s2088 = scalar_lea.vmem %s6, %s2087
      %p2089 = scmp.lt.s32.totalorder %s20, 1
      %s2090 = scalar_select %p2089, %s20, 1
      %s2091 = scalar_lea.vmem %s7, %s2090
      %p2092 = scmp.lt.s32.totalorder %s20, 1
      %s2093 = scalar_select %p2092, %s20, 1
      %s2094 = scalar_lea.vmem %s8, %s2093
      // Predicated region
      $region45: #{down_forward.4} parent=43 // pred_check
        %p2095 = pneg %p169
      $region46: #{down_forward.4} parent=43 // pred_check_branch
        %2097 = sbr.rel (%p2095) target = $region48
      $region47: #{down_forward.4} parent=43 // pred_region
        _
      $region48: #{down_forward.4} parent=43 // pred_fallthru
        _
      // Predicated region
      $region49: #{down_forward.4} parent=43 // pred_check
        %p2098 = pneg %p195
      $region50: #{down_forward.4} parent=43 // pred_check_branch
        %2100 = sbr.rel (%p2098) target = $region52
      $region51: #{down_forward.4} parent=43 // pred_region
        _
      $region52: #{down_forward.4} parent=43 // pred_fallthru
        _
      // Predicated region
      $region53: #{down_forward.4} parent=43 // pred_check
        %p2101 = pneg %p221
      $region54: #{down_forward.4} parent=43 // pred_check_branch
        %2103 = sbr.rel (%p2101) target = $region56
      $region55: #{down_forward.4} parent=43 // pred_region
        _
      $region56: #{down_forward.4} parent=43 // pred_fallthru
        _
    $region44: #{down_forward.4} parent=5 // pred_fallthru
      _
    %p2104 = scmp.le.s32.totalorder 2, %s15
    // Predicated region
    $region57: #{down_forward.4} parent=5 // pred_check
      %p2105 = pneg %p2104
    $region58: #{down_forward.4} parent=5 // pred_check_branch
      %2107 = sbr.rel (%p2105) target = $region60
    $region59: #{down_forward.4} parent=5 // pred_region
      %s2108 = ssub.s32 %s15, 2
      // Predicated region
      $region61: #{down_forward.4} parent=59 // pred_check
        %p2109 = pneg %p175
      $region62: #{down_forward.4} parent=59 // pred_check_branch
        %2111 = sbr.rel (%p2109) target = $region64
      $region63: #{down_forward.4} parent=59 // pred_region
        %p2112 = scmp.lt.s32.totalorder %s21, 1
        %s2113 = scalar_select %p2112, %s21, 1
        %s2114 = smul.addr %s2113, 8
        %s2115 = smul.addr %s2114, 8
        %s2116 = scalar_lea.vmem %s6, %s2115
      $region64: #{down_forward.4} parent=59 // pred_fallthru
        _
      // Predicated region
      $region65: #{down_forward.4} parent=59 // pred_check
        %p2117 = pneg %p201
      $region66: #{down_forward.4} parent=59 // pred_check_branch
        %2119 = sbr.rel (%p2117) target = $region68
      $region67: #{down_forward.4} parent=59 // pred_region
        %p2120 = scmp.lt.s32.totalorder %s21, 1
        %s2121 = scalar_select %p2120, %s21, 1
        %s2122 = scalar_lea.vmem %s7, %s2121
      $region68: #{down_forward.4} parent=59 // pred_fallthru
        _
      // Predicated region
      $region69: #{down_forward.4} parent=59 // pred_check
        %p2123 = pneg %p227
      $region70: #{down_forward.4} parent=59 // pred_check_branch
        %2125 = sbr.rel (%p2123) target = $region72
      $region71: #{down_forward.4} parent=59 // pred_region
        %p2126 = scmp.lt.s32.totalorder %s21, 1
        %s2127 = scalar_select %p2126, %s21, 1
        %s2128 = scalar_lea.vmem %s8, %s2127
      $region72: #{down_forward.4} parent=59 // pred_fallthru
        _
    $region60: #{down_forward.4} parent=5 // pred_fallthru
      _
  $region6: #{down_forward.4} parent=0 // loop_footer
    %s19 = sadd.s32 1, %s15
  $region7: #{down_forward.4} parent=0 // loop_footer_branch
    %14 = sbr.rel target = $region3
  $region8: #{down_forward.4} parent=0 // loop_exit
    _

</llo_original>
